<compile_context>
chip_gen: v5e
topology: v5e:2x2
jax: 0.10.0
libtpu: 0.0.40
codegen_flags: <defaults>
</compile_context>

<pallas_src>
import functools

import numpy as np
import jax
import jax.numpy as jnp
from jax import lax
from jax.experimental import pallas as pl
from jax.experimental.pallas import tpu as pltpu


def _round_up(x, m):
    return (x + m - 1) // m * m


def _snap8(x):
    return max(8, (x // 8) * 8)


# --------------------------------- kernel ----------------------------------
def bilstm_kernel(lmax_ref,            # [n_tiles] int32 (SMEM, scalar prefetch): per-tile max length
                  len_ref,             # [TB, 1]   int32 per-row lengths
                  x_ref,               # [T, TB, E] bf16 time-major inputs
                  wih_ref,             # [E, 8Hp]  bf16 fwd||bwd input proj, gate order (i,f,o,g)
                  b_ref,               # [1, 8Hp]  f32 fused biases (b_ih + b_hh)
                  whh_ref,             # [2Hp, 8Hp] bf16 block-diagonal recurrent weights
                  out_ref,             # [T, TB, 2Hp] f32: fwd half || bwd half
                  proj_sc,             # [T*TB, 8Hp] f32 scratch
                  *, fuse_hh):
    T, TB, E = x_ref.shape
    Hp = whh_ref.shape[0] // 2
    G = 4 * Hp

    # ---- input projections for every timestep and BOTH directions in one
    #      MXU pass (bf16 x bf16 -> f32); biases folded in here ----
    x2d = x_ref[...].reshape(T * TB, E)
    proj_sc[...] = jnp.dot(x2d, wih_ref[...],
                           preferred_element_type=jnp.float32) + b_ref[...]

    lengths = len_ref[...]                             # [TB, 1] int32
    lmax = lmax_ref[pl.program_id(0)]                  # scalar int32

    if fuse_hh:
        w_blk = whh_ref[...]                           # [2Hp, 8Hp]
    else:
        # v5e: MXU is 128-deep -> keep two K=Hp matmuls on the diagonal blocks
        w_f = whh_ref[0:Hp, 0:G]
        w_b = whh_ref[Hp:2 * Hp, G:2 * G]

    def cell(g, c_prev):
        # gate order (i, f, o, g): sigmoid over 3Hp contiguous lanes + 1 tanh
        sg = jax.nn.sigmoid(g[:, 0:3 * Hp])
        cg = jnp.tanh(g[:, 3 * Hp:4 * Hp])
        c = sg[:, Hp:2 * Hp] * c_prev + sg[:, 0:Hp] * cg
        h = sg[:, 2 * Hp:3 * Hp] * jnp.tanh(c)
        return h, c

    def step(s, carry):
        h_f, c_f, h_b, c_b = carry
        t_f = s
        t_b = lmax - 1 - s

        # backward direction emulates packed sequences: reset the carry
        # (per row) while t_b >= L-1; junk past L is never read downstream.
        reset = t_b >= lengths - 1                     # [TB, 1] bool
        h_b_in = jnp.where(reset, 0.0, h_b)
        c_b_in = jnp.where(reset, 0.0, c_b)

        off_f = pl.multiple_of(t_f * TB, TB)
        off_b = pl.multiple_of(t_b * TB, TB)
        p_f = proj_sc[pl.ds(off_f, TB), 0:G]           # [TB, 4Hp]
        p_b = proj_sc[pl.ds(off_b, TB), G:2 * G]       # [TB, 4Hp]

        if fuse_hh:
            hcat = jnp.concatenate([h_f, h_b_in], axis=1).astype(jnp.bfloat16)
            rec = jnp.dot(hcat, w_blk, preferred_element_type=jnp.float32)
            g_f = p_f + rec[:, 0:G]
            g_b = p_b + rec[:, G:2 * G]
        else:
            g_f = p_f + jnp.dot(h_f.astype(jnp.bfloat16), w_f,
                                preferred_element_type=jnp.float32)
            g_b = p_b + jnp.dot(h_b_in.astype(jnp.bfloat16), w_b,
                                preferred_element_type=jnp.float32)

        h_f, c_f = cell(g_f, c_f)
        h_b, c_b = cell(g_b, c_b_in)

        # lane-dense stores; no pad masking — the downstream packed gather
        # only ever reads rows with t < L.
        out_ref[pl.ds(t_f, 1), :, 0:Hp] = h_f[None]
        out_ref[pl.ds(t_b, 1), :, Hp:2 * Hp] = h_b[None]
        return h_f, c_f, h_b, c_b

    zero = jnp.zeros((TB, Hp), jnp.float32)
    # Recurrence bounded at this tile's max length: padded timesteps skipped.
    lax.fori_loop(0, lmax, step, (zero, zero, zero, zero))


# ------------------------------ host helpers --------------------------------
def _device_config():
    kind = ""
    try:
        kind = jax.devices()[0].device_kind.lower()
    except Exception:
        pass
    is_v5 = "v5" in kind
    fuse_hh = not is_v5                       # block-diag W_hh fills 256-deep MXU (v6e/v7x)
    big_vmem = is_v5 or ("v6" in kind)        # 128 MiB physical VMEM
    vmem_budget = (96 << 20) if big_vmem else (48 << 20)   # conservative for v7x (64 MiB)
    return fuse_hh, vmem_budget


def _vmem_bytes(T, TB, E, Hp, single_buf_weights):
    w = (E * 8 * Hp + 2 * Hp * 8 * Hp) * 2 + 8 * Hp * 4      # bf16 weights + f32 bias
    w *= 1 if single_buf_weights else 2
    x = 2 * T * TB * E * 2                                   # bf16 input, double-buffered
    o = 2 * T * TB * 2 * Hp * 4                              # f32 output, double-buffered
    proj = T * TB * 8 * Hp * 4                               # scratch
    live = TB * 8 * Hp * 4 * 3 + TB * Hp * 4 * 10            # gates / carries / temps (rough)
    return w + x + o + proj + live


def _pick_batch_tile(B, T, E, Hp, vmem_budget, single_buf, max_tile):
    tb = _snap8(min(max_tile, _round_up(B, 8)))
    # keep >= 2 grid steps when the batch allows it (v7x: 2 TensorCores)
    while tb > 8 and _round_up(B, tb) // tb < 2:
        tb = _snap8(tb // 2)
    # fit the VMEM budget (very long T would additionally want a time-chunked
    # input projection; not needed at these sizes)
    while tb > 8 and _vmem_bytes(T, tb, E, Hp, single_buf) > vmem_budget:
        tb = _snap8(tb // 2)
    return tb


# -------------------------------- wrappers ----------------------------------
def prepare_bilstm_params(wih_f, whh_f, b_f, wih_b, whh_b, b_b, rnn_dim,
                          *, param_dtype=jnp.bfloat16):
    """PyTorch-layout weights (gate order i,f,g,o; shapes [E,4H]/[H,4H]/[1,4H])
    -> kernel layout: gate order (i,f,o,g), hidden dim zero-padded to
    Hp = round_up(H, 128), fwd/bwd input projections fused into [E, 8Hp],
    recurrent weights fused block-diagonally into [2Hp, 8Hp], bf16 weights."""
    H = rnn_dim
    Hp = _round_up(H, 128)

    def cols(w):
        # [..., 4H] (i,f,g,o) -> [..., 4Hp] (i,f,o,g), each gate zero-padded
        i, f, g, o = [w[..., k * H:(k + 1) * H] for k in range(4)]
        pad = [(0, 0)] * (w.ndim - 1) + [(0, Hp - H)]
        return jnp.concatenate([jnp.pad(p, pad) for p in (i, f, o, g)], axis=-1)

    def rec(w):
        return jnp.pad(cols(w), ((0, Hp - H), (0, 0)))            # [Hp, 4Hp]

    w_ih = jnp.concatenate([cols(wih_f), cols(wih_b)], axis=-1).astype(param_dtype)  # [E, 8Hp]
    bias = jnp.concatenate([cols(b_f), cols(b_b)], axis=-1).astype(jnp.float32)      # [1, 8Hp]

    rf, rb = rec(whh_f), rec(whh_b)
    z = jnp.zeros((Hp, 4 * Hp), jnp.float32)
    whh_blk = jnp.concatenate(
        [jnp.concatenate([rf, z], axis=1),
         jnp.concatenate([z, rb], axis=1)], axis=0).astype(param_dtype)               # [2Hp, 8Hp]
    return w_ih, bias, whh_blk


def bilstm_pallas(embeds, lengths, params, *, max_batch_tile=256):
    """Runs the BiLSTM kernel. Returns (time-major [T, B_pad, 2Hp] f32, B_pad).
    Rows with t >= length(b) are undefined (never read by the packed gather)."""
    w_ih, bias, whh_blk = params
    B, T, E = embeds.shape
    Hp = whh_blk.shape[0] // 2

    fuse_hh, vmem_budget = _device_config()
    single_buf = hasattr(pl, "Buffered")
    TB = _pick_batch_tile(B, T, E, Hp, vmem_budget, single_buf, max_batch_tile)
    B_pad = _round_up(B, TB)
    n_tiles = B_pad // TB

    lens = np.zeros(B_pad, np.int32)
    lens[:B] = np.asarray(lengths, dtype=np.int32)
    lmax_tile = jnp.asarray(lens.reshape(n_tiles, TB).max(axis=1).astype(np.int32))
    len_col = jnp.asarray(lens)[:, None]                                   # [B_pad, 1]

    # time-major, batch padded to the tile, bf16 for the MXU / halved DMA bytes
    x = jnp.transpose(
        jnp.pad(embeds.astype(jnp.bfloat16), ((0, B_pad - B), (0, 0), (0, 0))),
        (1, 0, 2))                                                          # [T, B_pad, E]

    est = _vmem_bytes(T, TB, E, Hp, single_buf)
    vmem_limit = int(min(vmem_budget, max(int(est * 1.3) + (4 << 20), 32 << 20)))

    kernel = functools.partial(bilstm_kernel, fuse_hh=fuse_hh)

    def run(use_single_buffer_weights):
        wkw = dict(pipeline_mode=pl.Buffered(1)) if use_single_buffer_weights else {}
        grid_spec = pltpu.PrefetchScalarGridSpec(
            num_scalar_prefetch=1,                    # per-tile max length -> SMEM
            grid=(n_tiles,),
            in_specs=[
                pl.BlockSpec((TB, 1), lambda i, lm: (i, 0)),            # lengths
                pl.BlockSpec((T, TB, E), lambda i, lm: (0, i, 0)),      # x (time-major)
                pl.BlockSpec((E, 8 * Hp), lambda i, lm: (0, 0), **wkw),       # fused W_ih
                pl.BlockSpec((1, 8 * Hp), lambda i, lm: (0, 0), **wkw),       # fused bias
                pl.BlockSpec((2 * Hp, 8 * Hp), lambda i, lm: (0, 0), **wkw),  # block-diag W_hh
            ],
            out_specs=pl.BlockSpec((T, TB, 2 * Hp), lambda i, lm: (0, i, 0)),
            scratch_shapes=[pltpu.VMEM((T * TB, 8 * Hp), jnp.float32)],
        )
        return pl.pallas_call(
            kernel,
            out_shape=jax.ShapeDtypeStruct((T, B_pad, 2 * Hp), jnp.float32),
            grid_spec=grid_spec,
            compiler_params=pltpu.CompilerParams(
                dimension_semantics=("parallel",),     # shard batch tiles (v7x: 2 TCs)
                vmem_limit_bytes=vmem_limit),
        )(lmax_tile, len_col, x, w_ih, bias, whh_blk)

    try:
        out = run(single_buf)
    except Exception:
        if not single_buf:
            raise
        out = run(False)                               # fallback: default double-buffering
    return out, B_pad


def lstm_classifier_forward(emb_matrix, embed_ids, sentence_len, kernel_params, rnn_dim):
    """Mirrors LSTMClassifier.forward (bidirectional=True, eval-mode dropout)."""
    H = rnn_dim
    _, _, whh_blk = kernel_params
    Hp = whh_blk.shape[0] // 2

    embeds = jnp.take(emb_matrix, embed_ids, axis=0)            # nn.Embedding
    # nn.Dropout(input_dropout) in eval mode == identity
    lens = np.asarray(sentence_len).astype(np.int32)            # concrete host-side lengths
    out_tm, B_pad = bilstm_pallas(embeds, lens, kernel_params)  # [T, B_pad, 2Hp]

    # torch.cat([rnn_outputs[i, :L] for i, L in enumerate(sentence_len)]) as ONE
    # flat-row gather straight from the time-major kernel output (index t*B_pad + i).
    B, T = embed_ids.shape
    flat_idx = np.concatenate(
        [np.arange(int(L)) * B_pad + i for i, L in enumerate(lens)]).astype(np.int32)
    packed = jnp.take(out_tm.reshape(T * B_pad, 2 * Hp), jnp.asarray(flat_idx), axis=0)

    if Hp == H:
        return packed[:, :2 * H]
    # strip hidden-dim padding AFTER the gather (small packed result) -> [*, 2H]
    return jnp.concatenate([packed[:, :H], packed[:, Hp:Hp + H]], axis=-1)


# ---------------- pure-numpy reference (PyTorch LSTM semantics) ----------------
def _sigmoid(x):
    return 1.0 / (1.0 + np.exp(-x))


def ref_bilstm(x, lengths, wih_f, whh_f, b_f, wih_b, whh_b, b_b):
    B, T, E = x.shape
    H = whh_f.shape[0]
    outs = []
    for i in range(B):
        L = int(lengths[i])

        def run(xs, W, U, bias):
            h = np.zeros(H, np.float32)
            c = np.zeros(H, np.float32)
            hs = []
            for xt in xs:
                g = xt @ W + h @ U + bias
                ii = _sigmoid(g[0:H]); ff = _sigmoid(g[H:2 * H])
                gg = np.tanh(g[2 * H:3 * H]); oo = _sigmoid(g[3 * H:4 * H])
                c = ff * c + ii * gg
                h = oo * np.tanh(c)
                hs.append(h)
            return np.stack(hs, 0)

        fwd = run([x[i, t] for t in range(L)], wih_f, whh_f, b_f[0])
        bwd = run([x[i, t] for t in range(L - 1, -1, -1)], wih_b, whh_b, b_b[0])[::-1]
        outs.append(np.concatenate([fwd, bwd], axis=-1))
    return np.concatenate(outs, axis=0)


if __name__ == "__main__":
    V, E, H = 50, 32, 32      # vocab, embedding dim, rnn_dim
    B, T = 4, 8               # batch, max sequence length

    key = jax.random.PRNGKey(0)
    ks = jax.random.split(key, 8)

    emb_matrix = jax.random.normal(ks[0], (V, E), jnp.float32)

    def winit(k, shape):
        return 0.1 * jax.random.normal(k, shape, jnp.float32)

    # PyTorch-style parameters: gate order (i, f, g, o), b = b_ih + b_hh
    wih_f = winit(ks[1], (E, 4 * H)); whh_f = winit(ks[2], (H, 4 * H)); b_f = winit(ks[3], (1, 4 * H))
    wih_b = winit(ks[4], (E, 4 * H)); whh_b = winit(ks[5], (H, 4 * H)); b_b = winit(ks[6], (1, 4 * H))

    kernel_params = prepare_bilstm_params(wih_f, whh_f, b_f, wih_b, whh_b, b_b, H)

    embed_ids = jax.random.randint(ks[7], (B, T), 0, V, jnp.int32)
    sentence_len = np.array([8, 7, 5, 3], dtype=np.int32)   # descending (enforce_sorted)

    out = lstm_classifier_forward(emb_matrix, embed_ids, sentence_len, kernel_params, H)
    out = jax.block_until_ready(out)

    # verify against a pure-numpy f32 reference of the packed BiLSTM
    embeds_np = np.asarray(jnp.take(emb_matrix, embed_ids, axis=0))
    ref = ref_bilstm(embeds_np, sentence_len,
                     *(np.asarray(p) for p in (wih_f, whh_f, b_f, wih_b, whh_b, b_b)))
    assert out.shape == (int(sentence_len.sum()), 2 * H)
    # bf16 weights/activations in the matmuls (f32 accumulate/gates) -> loosened tolerance
    np.testing.assert_allclose(np.asarray(out), ref, rtol=2e-2, atol=2e-2)

    print("KERNEL_OK")
</pallas_src>

<mosaic_0001>
module attributes {stable_mosaic.version = 11 : i64} {
  func.func @bilstm_kernel(%arg0: i32, %arg1: memref<1xi32, #tpu.memory_space<smem>>, %arg2: memref<8x1xi32, #tpu.memory_space<vmem>>, %arg3: memref<8x8x32xbf16, #tpu.memory_space<vmem>>, %arg4: memref<32x1024xbf16, #tpu.memory_space<vmem>>, %arg5: memref<1x1024xf32, #tpu.memory_space<vmem>>, %arg6: memref<256x1024xbf16, #tpu.memory_space<vmem>>, %arg7: memref<8x8x256xf32, #tpu.memory_space<vmem>>, %arg8: memref<64x1024xf32, #tpu.memory_space<vmem>>) attributes {dimension_semantics = [#tpu.dimension_semantics<parallel>], iteration_bounds = array<i64: 1>, scalar_prefetch = 1 : i64, scratch_operands = 1 : i64, tpu.core_type = #tpu.core_type<tc>, window_params = [{transform_indices = @transform_0, window_bounds = array<i64: 8, 1>}, {transform_indices = @transform_1, window_bounds = array<i64: 8, 8, 32>}, {pipeline_mode = #tpu.pipeline_mode<synchronous>, transform_indices = @transform_2, window_bounds = array<i64: 32, 1024>}, {pipeline_mode = #tpu.pipeline_mode<synchronous>, transform_indices = @transform_3, window_bounds = array<i64: 1, 1024>}, {pipeline_mode = #tpu.pipeline_mode<synchronous>, transform_indices = @transform_4, window_bounds = array<i64: 256, 1024>}, {transform_indices = @transform_5, window_bounds = array<i64: 8, 8, 256>}]} {
    %c0 = arith.constant 0 : index
    %c0_0 = arith.constant 0 : index
    %c0_1 = arith.constant 0 : index
    %0 = vector.load %arg3[%c0, %c0_0, %c0_1] : memref<8x8x32xbf16, #tpu.memory_space<vmem>>, vector<8x8x32xbf16>
    %1 = vector.shape_cast %0 : vector<8x8x32xbf16> to vector<64x32xbf16>
    %c0_2 = arith.constant 0 : index
    %c0_3 = arith.constant 0 : index
    %2 = vector.load %arg4[%c0_2, %c0_3] : memref<32x1024xbf16, #tpu.memory_space<vmem>>, vector<32x1024xbf16>
    %cst = arith.constant dense<0.000000e+00> : vector<64x1024xf32>
    %3 = tpu.matmul %1, %2, %cst {dimension_numbers = #tpu.dot_dimension_numbers<[1], [0], [0], [1], [0, 0, 1, 1], [], []>} : vector<64x32xbf16>, vector<32x1024xbf16>, vector<64x1024xf32> -> vector<64x1024xf32>
    %c0_4 = arith.constant 0 : index
    %c0_5 = arith.constant 0 : index
    %4 = vector.load %arg5[%c0_4, %c0_5] : memref<1x1024xf32, #tpu.memory_space<vmem>>, vector<1x1024xf32>
    %5 = vector.broadcast %4 : vector<1x1024xf32> to vector<64x1024xf32>
    %6 = arith.addf %3, %5 : vector<64x1024xf32>
    %c0_6 = arith.constant 0 : index
    %c0_7 = arith.constant 0 : index
    %7 = vector.load %arg8[%c0_6, %c0_7] : memref<64x1024xf32, #tpu.memory_space<vmem>>, vector<64x1024xf32>
    tpu.vector_store %arg8[%c0_6, %c0_7], %6 {strides = array<i32>} : memref<64x1024xf32, #tpu.memory_space<vmem>>, vector<64x1024xf32>,
    %c0_8 = arith.constant 0 : index
    %c0_9 = arith.constant 0 : index
    %8 = vector.load %arg2[%c0_8, %c0_9] : memref<8x1xi32, #tpu.memory_space<vmem>>, vector<8x1xi32>
    %9 = arith.index_cast %arg0 : i32 to index
    %10 = memref.load %arg1[%9] : memref<1xi32, #tpu.memory_space<smem>>
    %c0_10 = arith.constant 0 : index
    %c0_11 = arith.constant 0 : index
    %11 = vector.load %arg6[%c0_10, %c0_11] : memref<256x1024xbf16, #tpu.memory_space<vmem>>, vector<256x1024xbf16>
    %cst_12 = arith.constant 0.000000e+00 : f32
    %12 = vector.broadcast %cst_12 : f32 to vector<8x128xf32>
    %c0_i32 = arith.constant 0 : i32
    %13 = arith.subi %10, %c0_i32 : i32
    %14 = arith.addi %c0_i32, %13 : i32
    %c1_i32 = arith.constant 1 : i32
    %15:4 = scf.for %arg9 = %c0_i32 to %14 step %c1_i32 iter_args(%arg10 = %12, %arg11 = %12, %arg12 = %12, %arg13 = %12) -> (vector<8x128xf32>, vector<8x128xf32>, vector<8x128xf32>, vector<8x128xf32>)  : i32 {
      %c1_i32_13 = arith.constant 1 : i32
      %16 = arith.subi %10, %c1_i32_13 : i32
      %17 = arith.subi %16, %arg9 : i32
      %c1_i32_14 = arith.constant 1 : i32
      %18 = vector.broadcast %c1_i32_14 : i32 to vector<8x1xi32>
      %19 = arith.subi %8, %18 : vector<8x1xi32>
      %20 = vector.broadcast %17 : i32 to vector<8x1xi32>
      %21 = arith.cmpi sge, %20, %19 : vector<8x1xi32>
      %cst_15 = arith.constant 0.000000e+00 : f32
      %22 = vector.shape_cast %21 : vector<8x1xi1> to vector<8x1xi1>
      %23 = vector.broadcast %22 : vector<8x1xi1> to vector<8x128xi1>
      %24 = vector.broadcast %cst_15 : f32 to vector<8x128xf32>
      %25 = arith.select %23, %24, %arg12 : vector<8x128xi1>, vector<8x128xf32>
      %cst_16 = arith.constant 0.000000e+00 : f32
      %26 = vector.shape_cast %21 : vector<8x1xi1> to vector<8x1xi1>
      %27 = vector.broadcast %26 : vector<8x1xi1> to vector<8x128xi1>
      %28 = vector.broadcast %cst_16 : f32 to vector<8x128xf32>
      %29 = arith.select %27, %28, %arg13 : vector<8x128xi1>, vector<8x128xf32>
      %c8_i32 = arith.constant 8 : i32
      %30 = arith.muli %arg9, %c8_i32 : i32
      %31 = tpu.assume_multiple %30, 8 : i32
      %c8_i32_17 = arith.constant 8 : i32
      %32 = arith.muli %17, %c8_i32_17 : i32
      %33 = tpu.assume_multiple %32, 8 : i32
      %34 = arith.index_cast %31 : i32 to index
      %c0_18 = arith.constant 0 : index
      %35 = vector.load %arg8[%34, %c0_18] : memref<64x1024xf32, #tpu.memory_space<vmem>>, vector<8x512xf32>
      %36 = arith.index_cast %33 : i32 to index
      %c512 = arith.constant 512 : index
      %37 = vector.load %arg8[%36, %c512] : memref<64x1024xf32, #tpu.memory_space<vmem>>, vector<8x512xf32>
      %38 = tpu.concatenate %arg10, %25 in 1 : vector<8x128xf32>, vector<8x128xf32> -> vector<8x256xf32>
      %39 = arith.truncf %38 : vector<8x256xf32> to vector<8x256xbf16>
      %cst_19 = arith.constant dense<0.000000e+00> : vector<8x1024xf32>
      %40 = tpu.matmul %39, %11, %cst_19 {dimension_numbers = #tpu.dot_dimension_numbers<[1], [0], [0], [1], [0, 0, 1, 1], [], []>} : vector<8x256xbf16>, vector<256x1024xbf16>, vector<8x1024xf32> -> vector<8x1024xf32>
      %41 = vector.extract_strided_slice %40 {offsets = [0, 0], sizes = [8, 512], strides = [1, 1]} : vector<8x1024xf32> to vector<8x512xf32>
      %42 = arith.addf %35, %41 : vector<8x512xf32>
      %43 = vector.extract_strided_slice %40 {offsets = [0, 512], sizes = [8, 512], strides = [1, 1]} : vector<8x1024xf32> to vector<8x512xf32>
      %44 = arith.addf %37, %43 : vector<8x512xf32>
      %45 = vector.extract_strided_slice %42 {offsets = [0, 0], sizes = [8, 384], strides = [1, 1]} : vector<8x512xf32> to vector<8x384xf32>
      %46 = arith.negf %45 : vector<8x384xf32>
      %47 = math.exp %46 : vector<8x384xf32>
      %cst_20 = arith.constant 1.000000e+00 : f32
      %48 = vector.broadcast %cst_20 : f32 to vector<8x384xf32>
      %49 = arith.addf %48, %47 : vector<8x384xf32>
      %50 = arith.divf %48, %49 : vector<8x384xf32>
      %51 = vector.extract_strided_slice %42 {offsets = [0, 384], sizes = [8, 128], strides = [1, 1]} : vector<8x512xf32> to vector<8x128xf32>
      %52 = math.tanh %51 : vector<8x128xf32>
      %53 = vector.extract_strided_slice %50 {offsets = [0, 128], sizes = [8, 128], strides = [1, 1]} : vector<8x384xf32> to vector<8x128xf32>
      %54 = arith.mulf %53, %arg11 : vector<8x128xf32>
      %55 = vector.extract_strided_slice %50 {offsets = [0, 0], sizes = [8, 128], strides = [1, 1]} : vector<8x384xf32> to vector<8x128xf32>
      %56 = arith.mulf %55, %52 : vector<8x128xf32>
      %57 = arith.addf %54, %56 : vector<8x128xf32>
      %58 = vector.extract_strided_slice %50 {offsets = [0, 256], sizes = [8, 128], strides = [1, 1]} : vector<8x384xf32> to vector<8x128xf32>
      %59 = math.tanh %57 : vector<8x128xf32>
      %60 = arith.mulf %58, %59 : vector<8x128xf32>
      %61 = vector.extract_strided_slice %44 {offsets = [0, 0], sizes = [8, 384], strides = [1, 1]} : vector<8x512xf32> to vector<8x384xf32>
      %62 = arith.negf %61 : vector<8x384xf32>
      %63 = math.exp %62 : vector<8x384xf32>
      %cst_21 = arith.constant 1.000000e+00 : f32
      %64 = vector.broadcast %cst_21 : f32 to vector<8x384xf32>
      %65 = arith.addf %64, %63 : vector<8x384xf32>
      %66 = arith.divf %64, %65 : vector<8x384xf32>
      %67 = vector.extract_strided_slice %44 {offsets = [0, 384], sizes = [8, 128], strides = [1, 1]} : vector<8x512xf32> to vector<8x128xf32>
      %68 = math.tanh %67 : vector<8x128xf32>
      %69 = vector.extract_strided_slice %66 {offsets = [0, 128], sizes = [8, 128], strides = [1, 1]} : vector<8x384xf32> to vector<8x128xf32>
      %70 = arith.mulf %69, %29 : vector<8x128xf32>
      %71 = vector.extract_strided_slice %66 {offsets = [0, 0], sizes = [8, 128], strides = [1, 1]} : vector<8x384xf32> to vector<8x128xf32>
      %72 = arith.mulf %71, %68 : vector<8x128xf32>
      %73 = arith.addf %70, %72 : vector<8x128xf32>
      %74 = vector.extract_strided_slice %66 {offsets = [0, 256], sizes = [8, 128], strides = [1, 1]} : vector<8x384xf32> to vector<8x128xf32>
      %75 = math.tanh %73 : vector<8x128xf32>
      %76 = arith.mulf %74, %75 : vector<8x128xf32>
      %77 = vector.shape_cast %60 : vector<8x128xf32> to vector<1x8x128xf32>
      %78 = arith.index_cast %arg9 : i32 to index
      %c0_22 = arith.constant 0 : index
      %c0_23 = arith.constant 0 : index
      %79 = vector.load %arg7[%78, %c0_22, %c0_23] : memref<8x8x256xf32, #tpu.memory_space<vmem>>, vector<1x8x128xf32>
      tpu.vector_store %arg7[%78, %c0_22, %c0_23], %77 {strides = array<i32>} : memref<8x8x256xf32, #tpu.memory_space<vmem>>, vector<1x8x128xf32>,
      %80 = vector.shape_cast %76 : vector<8x128xf32> to vector<1x8x128xf32>
      %81 = arith.index_cast %17 : i32 to index
      %c0_24 = arith.constant 0 : index
      %c128 = arith.constant 128 : index
      %82 = vector.load %arg7[%81, %c0_24, %c128] : memref<8x8x256xf32, #tpu.memory_space<vmem>>, vector<1x8x128xf32>
      tpu.vector_store %arg7[%81, %c0_24, %c128], %80 {strides = array<i32>} : memref<8x8x256xf32, #tpu.memory_space<vmem>>, vector<1x8x128xf32>,
      scf.yield %60, %57, %76, %73 : vector<8x128xf32>, vector<8x128xf32>, vector<8x128xf32>, vector<8x128xf32>
    }
    return
  }
  func.func @transform_0(%arg0: i32, %arg1: memref<1xi32, #tpu.memory_space<smem>>) -> (i32, i32) {
    %c0_i32 = arith.constant 0 : i32
    %c0_i32_0 = arith.constant 0 : i32
    return %arg0, %c0_i32 : i32, i32
  }
  func.func @transform_1(%arg0: i32, %arg1: memref<1xi32, #tpu.memory_space<smem>>) -> (i32, i32, i32) {
    %c0_i32 = arith.constant 0 : i32
    %c0_i32_0 = arith.constant 0 : i32
    %c0_i32_1 = arith.constant 0 : i32
    return %c0_i32, %arg0, %c0_i32_0 : i32, i32, i32
  }
  func.func @transform_2(%arg0: i32, %arg1: memref<1xi32, #tpu.memory_space<smem>>) -> (i32, i32) {
    %c0_i32 = arith.constant 0 : i32
    %c0_i32_0 = arith.constant 0 : i32
    %c0_i32_1 = arith.constant 0 : i32
    return %c0_i32, %c0_i32_0 : i32, i32
  }
  func.func @transform_3(%arg0: i32, %arg1: memref<1xi32, #tpu.memory_space<smem>>) -> (i32, i32) {
    %c0_i32 = arith.constant 0 : i32
    %c0_i32_0 = arith.constant 0 : i32
    %c0_i32_1 = arith.constant 0 : i32
    return %c0_i32, %c0_i32_0 : i32, i32
  }
  func.func @transform_4(%arg0: i32, %arg1: memref<1xi32, #tpu.memory_space<smem>>) -> (i32, i32) {
    %c0_i32 = arith.constant 0 : i32
    %c0_i32_0 = arith.constant 0 : i32
    %c0_i32_1 = arith.constant 0 : i32
    return %c0_i32, %c0_i32_0 : i32, i32
  }
  func.func @transform_5(%arg0: i32, %arg1: memref<1xi32, #tpu.memory_space<smem>>) -> (i32, i32, i32) {
    %c0_i32 = arith.constant 0 : i32
    %c0_i32_0 = arith.constant 0 : i32
    %c0_i32_1 = arith.constant 0 : i32
    return %c0_i32, %arg0, %c0_i32_0 : i32, i32, i32
  }
}

module attributes {stable_mosaic.version = 11 : i64} {
  func.func @bilstm_kernel(%arg0: i32, %arg1: memref<1xi32, #tpu.memory_space<smem>>, %arg2: memref<8x1xi32, #tpu.memory_space<vmem>>, %arg3: memref<8x8x32xbf16, #tpu.memory_space<vmem>>, %arg4: memref<32x1024xbf16, #tpu.memory_space<vmem>>, %arg5: memref<1x1024xf32, #tpu.memory_space<vmem>>, %arg6: memref<256x1024xbf16, #tpu.memory_space<vmem>>, %arg7: memref<8x8x256xf32, #tpu.memory_space<vmem>>, %arg8: memref<64x1024xf32, #tpu.memory_space<vmem>>) attributes {dimension_semantics = [#tpu.dimension_semantics<parallel>], iteration_bounds = array<i64: 1>, scalar_prefetch = 1 : i64, scratch_operands = 1 : i64, tpu.core_type = #tpu.core_type<tc>, window_params = [{transform_indices = @transform_0, window_bounds = array<i64: 8, 1>}, {transform_indices = @transform_1, window_bounds = array<i64: 8, 8, 32>}, {pipeline_mode = #tpu.pipeline_mode<synchronous>, transform_indices = @transform_2, window_bounds = array<i64: 32, 1024>}, {pipeline_mode = #tpu.pipeline_mode<synchronous>, transform_indices = @transform_3, window_bounds = array<i64: 1, 1024>}, {pipeline_mode = #tpu.pipeline_mode<synchronous>, transform_indices = @transform_4, window_bounds = array<i64: 256, 1024>}, {transform_indices = @transform_5, window_bounds = array<i64: 8, 8, 256>}]} {
    %c0 = arith.constant 0 : index
    %c0_0 = arith.constant 0 : index
    %c0_1 = arith.constant 0 : index
    %0 = vector.load %arg3[%c0, %c0_0, %c0_1] : memref<8x8x32xbf16, #tpu.memory_space<vmem>>, vector<8x8x32xbf16>
    %1 = vector.shape_cast %0 : vector<8x8x32xbf16> to vector<64x32xbf16>
    %c0_2 = arith.constant 0 : index
    %c0_3 = arith.constant 0 : index
    %2 = vector.load %arg4[%c0_2, %c0_3] : memref<32x1024xbf16, #tpu.memory_space<vmem>>, vector<32x1024xbf16>
    %cst = arith.constant dense<0.000000e+00> : vector<64x1024xf32>
    %3 = tpu.matmul %1, %2, %cst {dimension_numbers = #tpu.dot_dimension_numbers<[1], [0], [0], [1], [0, 0, 1, 1], [], []>} : vector<64x32xbf16>, vector<32x1024xbf16>, vector<64x1024xf32> -> vector<64x1024xf32>
    %c0_4 = arith.constant 0 : index
    %c0_5 = arith.constant 0 : index
    %4 = vector.load %arg5[%c0_4, %c0_5] : memref<1x1024xf32, #tpu.memory_space<vmem>>, vector<1x1024xf32>
    %5 = vector.broadcast %4 : vector<1x1024xf32> to vector<64x1024xf32>
    %6 = arith.addf %3, %5 : vector<64x1024xf32>
    %c0_6 = arith.constant 0 : index
    %c0_7 = arith.constant 0 : index
    %7 = vector.load %arg8[%c0_6, %c0_7] : memref<64x1024xf32, #tpu.memory_space<vmem>>, vector<64x1024xf32>
    tpu.vector_store %arg8[%c0_6, %c0_7], %6 {strides = array<i32>} : memref<64x1024xf32, #tpu.memory_space<vmem>>, vector<64x1024xf32>,
    %c0_8 = arith.constant 0 : index
    %c0_9 = arith.constant 0 : index
    %8 = vector.load %arg2[%c0_8, %c0_9] : memref<8x1xi32, #tpu.memory_space<vmem>>, vector<8x1xi32>
    %9 = arith.index_cast %arg0 : i32 to index
    %10 = memref.load %arg1[%9] : memref<1xi32, #tpu.memory_space<smem>>
    %c0_10 = arith.constant 0 : index
    %c0_11 = arith.constant 0 : index
    %11 = vector.load %arg6[%c0_10, %c0_11] : memref<256x1024xbf16, #tpu.memory_space<vmem>>, vector<256x1024xbf16>
    %cst_12 = arith.constant 0.000000e+00 : f32
    %12 = vector.broadcast %cst_12 : f32 to vector<8x128xf32>
    %c0_i32 = arith.constant 0 : i32
    %13 = arith.subi %10, %c0_i32 : i32
    %14 = arith.addi %c0_i32, %13 : i32
    %c1_i32 = arith.constant 1 : i32
    %15:4 = scf.for %arg9 = %c0_i32 to %14 step %c1_i32 iter_args(%arg10 = %12, %arg11 = %12, %arg12 = %12, %arg13 = %12) -> (vector<8x128xf32>, vector<8x128xf32>, vector<8x128xf32>, vector<8x128xf32>)  : i32 {
      %c1_i32_13 = arith.constant 1 : i32
      %16 = arith.subi %10, %c1_i32_13 : i32
      %17 = arith.subi %16, %arg9 : i32
      %c1_i32_14 = arith.constant 1 : i32
      %18 = vector.broadcast %c1_i32_14 : i32 to vector<8x1xi32>
      %19 = arith.subi %8, %18 : vector<8x1xi32>
      %20 = vector.broadcast %17 : i32 to vector<8x1xi32>
      %21 = arith.cmpi sge, %20, %19 : vector<8x1xi32>
      %cst_15 = arith.constant 0.000000e+00 : f32
      %22 = vector.shape_cast %21 : vector<8x1xi1> to vector<8x1xi1>
      %23 = vector.broadcast %22 : vector<8x1xi1> to vector<8x128xi1>
      %24 = vector.broadcast %cst_15 : f32 to vector<8x128xf32>
      %25 = arith.select %23, %24, %arg12 : vector<8x128xi1>, vector<8x128xf32>
      %cst_16 = arith.constant 0.000000e+00 : f32
      %26 = vector.shape_cast %21 : vector<8x1xi1> to vector<8x1xi1>
      %27 = vector.broadcast %26 : vector<8x1xi1> to vector<8x128xi1>
      %28 = vector.broadcast %cst_16 : f32 to vector<8x128xf32>
      %29 = arith.select %27, %28, %arg13 : vector<8x128xi1>, vector<8x128xf32>
      %c8_i32 = arith.constant 8 : i32
      %30 = arith.muli %arg9, %c8_i32 : i32
      %31 = tpu.assume_multiple %30, 8 : i32
      %c8_i32_17 = arith.constant 8 : i32
      %32 = arith.muli %17, %c8_i32_17 : i32
      %33 = tpu.assume_multiple %32, 8 : i32
      %34 = arith.index_cast %31 : i32 to index
      %c0_18 = arith.constant 0 : index
      %35 = vector.load %arg8[%34, %c0_18] : memref<64x1024xf32, #tpu.memory_space<vmem>>, vector<8x512xf32>
      %36 = arith.index_cast %33 : i32 to index
      %c512 = arith.constant 512 : index
      %37 = vector.load %arg8[%36, %c512] : memref<64x1024xf32, #tpu.memory_space<vmem>>, vector<8x512xf32>
      %38 = tpu.concatenate %arg10, %25 in 1 : vector<8x128xf32>, vector<8x128xf32> -> vector<8x256xf32>
      %39 = arith.truncf %38 : vector<8x256xf32> to vector<8x256xbf16>
      %cst_19 = arith.constant dense<0.000000e+00> : vector<8x1024xf32>
      %40 = tpu.matmul %39, %11, %cst_19 {dimension_numbers = #tpu.dot_dimension_numbers<[1], [0], [0], [1], [0, 0, 1, 1], [], []>} : vector<8x256xbf16>, vector<256x1024xbf16>, vector<8x1024xf32> -> vector<8x1024xf32>
      %41 = vector.extract_strided_slice %40 {offsets = [0, 0], sizes = [8, 512], strides = [1, 1]} : vector<8x1024xf32> to vector<8x512xf32>
      %42 = arith.addf %35, %41 : vector<8x512xf32>
      %43 = vector.extract_strided_slice %40 {offsets = [0, 512], sizes = [8, 512], strides = [1, 1]} : vector<8x1024xf32> to vector<8x512xf32>
      %44 = arith.addf %37, %43 : vector<8x512xf32>
      %45 = vector.extract_strided_slice %42 {offsets = [0, 0], sizes = [8, 384], strides = [1, 1]} : vector<8x512xf32> to vector<8x384xf32>
      %46 = arith.negf %45 : vector<8x384xf32>
      %47 = math.exp %46 : vector<8x384xf32>
      %cst_20 = arith.constant 1.000000e+00 : f32
      %48 = vector.broadcast %cst_20 : f32 to vector<8x384xf32>
      %49 = arith.addf %48, %47 : vector<8x384xf32>
      %50 = arith.divf %48, %49 : vector<8x384xf32>
      %51 = vector.extract_strided_slice %42 {offsets = [0, 384], sizes = [8, 128], strides = [1, 1]} : vector<8x512xf32> to vector<8x128xf32>
      %52 = math.tanh %51 : vector<8x128xf32>
      %53 = vector.extract_strided_slice %50 {offsets = [0, 128], sizes = [8, 128], strides = [1, 1]} : vector<8x384xf32> to vector<8x128xf32>
      %54 = arith.mulf %53, %arg11 : vector<8x128xf32>
      %55 = vector.extract_strided_slice %50 {offsets = [0, 0], sizes = [8, 128], strides = [1, 1]} : vector<8x384xf32> to vector<8x128xf32>
      %56 = arith.mulf %55, %52 : vector<8x128xf32>
      %57 = arith.addf %54, %56 : vector<8x128xf32>
      %58 = vector.extract_strided_slice %50 {offsets = [0, 256], sizes = [8, 128], strides = [1, 1]} : vector<8x384xf32> to vector<8x128xf32>
      %59 = math.tanh %57 : vector<8x128xf32>
      %60 = arith.mulf %58, %59 : vector<8x128xf32>
      %61 = vector.extract_strided_slice %44 {offsets = [0, 0], sizes = [8, 384], strides = [1, 1]} : vector<8x512xf32> to vector<8x384xf32>
      %62 = arith.negf %61 : vector<8x384xf32>
      %63 = math.exp %62 : vector<8x384xf32>
      %cst_21 = arith.constant 1.000000e+00 : f32
      %64 = vector.broadcast %cst_21 : f32 to vector<8x384xf32>
      %65 = arith.addf %64, %63 : vector<8x384xf32>
      %66 = arith.divf %64, %65 : vector<8x384xf32>
      %67 = vector.extract_strided_slice %44 {offsets = [0, 384], sizes = [8, 128], strides = [1, 1]} : vector<8x512xf32> to vector<8x128xf32>
      %68 = math.tanh %67 : vector<8x128xf32>
      %69 = vector.extract_strided_slice %66 {offsets = [0, 128], sizes = [8, 128], strides = [1, 1]} : vector<8x384xf32> to vector<8x128xf32>
      %70 = arith.mulf %69, %29 : vector<8x128xf32>
      %71 = vector.extract_strided_slice %66 {offsets = [0, 0], sizes = [8, 128], strides = [1, 1]} : vector<8x384xf32> to vector<8x128xf32>
      %72 = arith.mulf %71, %68 : vector<8x128xf32>
      %73 = arith.addf %70, %72 : vector<8x128xf32>
      %74 = vector.extract_strided_slice %66 {offsets = [0, 256], sizes = [8, 128], strides = [1, 1]} : vector<8x384xf32> to vector<8x128xf32>
      %75 = math.tanh %73 : vector<8x128xf32>
      %76 = arith.mulf %74, %75 : vector<8x128xf32>
      %77 = vector.shape_cast %60 : vector<8x128xf32> to vector<1x8x128xf32>
      %78 = arith.index_cast %arg9 : i32 to index
      %c0_22 = arith.constant 0 : index
      %c0_23 = arith.constant 0 : index
      %79 = vector.load %arg7[%78, %c0_22, %c0_23] : memref<8x8x256xf32, #tpu.memory_space<vmem>>, vector<1x8x128xf32>
      tpu.vector_store %arg7[%78, %c0_22, %c0_23], %77 {strides = array<i32>} : memref<8x8x256xf32, #tpu.memory_space<vmem>>, vector<1x8x128xf32>,
      %80 = vector.shape_cast %76 : vector<8x128xf32> to vector<1x8x128xf32>
      %81 = arith.index_cast %17 : i32 to index
      %c0_24 = arith.constant 0 : index
      %c128 = arith.constant 128 : index
      %82 = vector.load %arg7[%81, %c0_24, %c128] : memref<8x8x256xf32, #tpu.memory_space<vmem>>, vector<1x8x128xf32>
      tpu.vector_store %arg7[%81, %c0_24, %c128], %80 {strides = array<i32>} : memref<8x8x256xf32, #tpu.memory_space<vmem>>, vector<1x8x128xf32>,
      scf.yield %60, %57, %76, %73 : vector<8x128xf32>, vector<8x128xf32>, vector<8x128xf32>, vector<8x128xf32>
    }
    return
  }
  func.func @transform_0(%arg0: i32, %arg1: memref<1xi32, #tpu.memory_space<smem>>) -> (i32, i32) {
    %c0_i32 = arith.constant 0 : i32
    %c0_i32_0 = arith.constant 0 : i32
    return %arg0, %c0_i32 : i32, i32
  }
  func.func @transform_1(%arg0: i32, %arg1: memref<1xi32, #tpu.memory_space<smem>>) -> (i32, i32, i32) {
    %c0_i32 = arith.constant 0 : i32
    %c0_i32_0 = arith.constant 0 : i32
    %c0_i32_1 = arith.constant 0 : i32
    return %c0_i32, %arg0, %c0_i32_0 : i32, i32, i32
  }
  func.func @transform_2(%arg0: i32, %arg1: memref<1xi32, #tpu.memory_space<smem>>) -> (i32, i32) {
    %c0_i32 = arith.constant 0 : i32
    %c0_i32_0 = arith.constant 0 : i32
    %c0_i32_1 = arith.constant 0 : i32
    return %c0_i32, %c0_i32_0 : i32, i32
  }
  func.func @transform_3(%arg0: i32, %arg1: memref<1xi32, #tpu.memory_space<smem>>) -> (i32, i32) {
    %c0_i32 = arith.constant 0 : i32
    %c0_i32_0 = arith.constant 0 : i32
    %c0_i32_1 = arith.constant 0 : i32
    return %c0_i32, %c0_i32_0 : i32, i32
  }
  func.func @transform_4(%arg0: i32, %arg1: memref<1xi32, #tpu.memory_space<smem>>) -> (i32, i32) {
    %c0_i32 = arith.constant 0 : i32
    %c0_i32_0 = arith.constant 0 : i32
    %c0_i32_1 = arith.constant 0 : i32
    return %c0_i32, %c0_i32_0 : i32, i32
  }
  func.func @transform_5(%arg0: i32, %arg1: memref<1xi32, #tpu.memory_space<smem>>) -> (i32, i32, i32) {
    %c0_i32 = arith.constant 0 : i32
    %c0_i32_0 = arith.constant 0 : i32
    %c0_i32_1 = arith.constant 0 : i32
    return %c0_i32, %arg0, %c0_i32_0 : i32, i32, i32
  }
}

</mosaic_0001>

<llo_original>
// kernel: tpu_custom_call.1
$region0: #{tpu_custom_call.1}
  #allocation0 [shape = 'u32[]', space=smem, size = 0x4, offset = 0x4, fixed_abs, tag = 'smem constant byte address 0x4 - core index']
  #allocation1 [shape = 'u32[72,128]{1,0:T(1,128)}', space=vmem, size = 0x9000, scoped, tag = 'internal scratch']
  #allocation2 [shape = 'f32[64,1024]{1,0:T(8,128)}', space=vmem, size = 0x40000, scoped, tag = 'scratch operand']
  #allocation3 [shape = 's32[1]{0}', space=sflag, size = 0x4, scoped, tag = 'scoped memory for tpu_custom_call.1']
  #allocation4 [shape = 's32[1]{0:T(128)S(6)}', space=smem, size = 0x200, scoped, tag = 'prefetched SMEM operand 0']
  %s0 = inlined_call_operand.<no memory space> [shape: s32[1], index: 0, kind: input, shape index: {}]
  %s1 = inlined_call_operand.vmem [shape: s32[8,1], index: 1, kind: input, shape index: {}]
  %s2 = inlined_call_operand.hbm [shape: bf16[8,8,32], index: 2, kind: input, shape index: {}]
  %s3 = inlined_call_operand.hbm [shape: bf16[32,1024], index: 3, kind: input, shape index: {}]
  %s4 = inlined_call_operand.vmem [shape: f32[1,1024], index: 4, kind: input, shape index: {}]
  %s5 = inlined_call_operand.hbm [shape: bf16[256,1024], index: 5, kind: input, shape index: {}]
  %s6 = inlined_call_operand.hbm [shape: f32[8,8,256], index: 6, kind: output, shape index: {}]
  %s7 = sld [smem:[#allocation0]]
  $region49: #{tpu_custom_call.1} parent=0
    _
  %s9 = ssub.s32 1, %s7
  %s10 = scalar_select 0, %s9, %s7
  %11 = sst [smem:[#allocation4]] %s0
  $region1: #{tpu_custom_call.1} parent=0
    #allocation5 [shape = 'u8[16384]{0}', space=vmem, size = 0x4000, scoped, tag = 'input window, operand 2, single buffered']
    #allocation6 [shape = 's32[1]{0}', space=sflag, size = 0x4, scoped, tag = 'scoped memory for tpu_custom_call.1']
    #allocation7 [shape = 's32[1]{0}', space=sflag, size = 0x4, scoped, tag = 'scoped memory for tpu_custom_call.1']
    #allocation8 [shape = 'u8[65536]{0}', space=vmem, size = 0x10000, scoped, tag = 'input window, operand 3, single buffered']
    #allocation9 [shape = 's32[1]{0}', space=sflag, size = 0x4, scoped, tag = 'scoped memory for tpu_custom_call.1']
    #allocation10 [shape = 'u8[524288]{0}', space=vmem, size = 0x80000, scoped, tag = 'input window, operand 5, single buffered']
    #allocation11 [shape = 'u8[65536]{0}', space=vmem, size = 0x10000, scoped, tag = 'output window, operand 0, single buffered']
    %12 = vsyncpa [#allocation6], 0
    %13 = vsyncpa [#allocation9], 0
    %14 = vsyncpa [#allocation7], 0
    // Predicated region
    $region2: #{tpu_custom_call.1} parent=1 // pred_check
      _
    $region3: #{tpu_custom_call.1} parent=1 // pred_check_branch
      %16 = sbr.rel (0) target = $region5
    $region4: #{tpu_custom_call.1} parent=1 // pred_region
      _
    $region5: #{tpu_custom_call.1} parent=1 // pred_fallthru
      _
    // Predicated region
    $region6: #{tpu_custom_call.1} parent=1 // pred_check
      _
    $region7: #{tpu_custom_call.1} parent=1 // pred_check_branch
      %18 = sbr.rel (0) target = $region9
    $region8: #{tpu_custom_call.1} parent=1 // pred_region
      %20 = vsyncadd [#allocation6], 0
      %s21 = sshll.u32 %s2, 4
      %s22 = int_to_ptr.hbm [resolvable:$true] %s21
      %s23 = sshll.u32 [#allocation5], 4
      %s24 = int_to_ptr.vmem [resolvable:$true] %s23
      %29 = dma.hbm_to_vmem [thread:$0]  %s22, 512, %s24, [#allocation6], 64, 64, 4
    $region9: #{tpu_custom_call.1} parent=1 // pred_fallthru
      _
    // Predicated region
    $region10: #{tpu_custom_call.1} parent=1 // pred_check
      _
    $region11: #{tpu_custom_call.1} parent=1 // pred_check_branch
      %31 = sbr.rel (0) target = $region13
    $region12: #{tpu_custom_call.1} parent=1 // pred_region
      %33 = vsyncadd [#allocation9], 0
      %s34 = sshll.u32 %s3, 4
      %s35 = int_to_ptr.hbm [resolvable:$true] %s34
      %s36 = sshll.u32 [#allocation8], 4
      %s37 = int_to_ptr.vmem [resolvable:$true] %s36
      %42 = dma.hbm_to_vmem [thread:$0]  %s35, 2048, %s37, [#allocation9], 512, 512, 32
    $region13: #{tpu_custom_call.1} parent=1 // pred_fallthru
      _
    // Predicated region
    $region14: #{tpu_custom_call.1} parent=1 // pred_check
      _
    $region15: #{tpu_custom_call.1} parent=1 // pred_check_branch
      %44 = sbr.rel (0) target = $region17
    $region16: #{tpu_custom_call.1} parent=1 // pred_region
      _
    $region17: #{tpu_custom_call.1} parent=1 // pred_fallthru
      _
    // Predicated region
    $region18: #{tpu_custom_call.1} parent=1 // pred_check
      _
    $region19: #{tpu_custom_call.1} parent=1 // pred_check_branch
      %46 = sbr.rel (0) target = $region21
    $region20: #{tpu_custom_call.1} parent=1 // pred_region
      %48 = vsyncadd [#allocation9], 0
      %s49 = sshll.u32 %s5, 4
      %s50 = int_to_ptr.hbm [resolvable:$true] %s49
      %s51 = sshll.u32 [#allocation10], 4
      %s52 = int_to_ptr.vmem [resolvable:$true] %s51
      %57 = dma.hbm_to_vmem [thread:$0]  %s50, 16384, %s52, [#allocation9], 512, 512, 32
    $region21: #{tpu_custom_call.1} parent=1 // pred_fallthru
      _
    // Predicated region
    $region22: #{tpu_custom_call.1} parent=1 // pred_check
      _
    $region23: #{tpu_custom_call.1} parent=1 // pred_check_branch
      %59 = sbr.rel (0) target = $region25
    $region24: #{tpu_custom_call.1} parent=1 // pred_region
      %61 = dma.done [#allocation6], 512
    $region25: #{tpu_custom_call.1} parent=1 // pred_fallthru
      _
    // Predicated region
    $region26: #{tpu_custom_call.1} parent=1 // pred_check
      _
    $region27: #{tpu_custom_call.1} parent=1 // pred_check_branch
      %63 = sbr.rel (0) target = $region29
    $region28: #{tpu_custom_call.1} parent=1 // pred_region
      %65 = dma.done [#allocation9], 2048
    $region29: #{tpu_custom_call.1} parent=1 // pred_fallthru
      _
    // Predicated region
    $region30: #{tpu_custom_call.1} parent=1 // pred_check
      _
    $region31: #{tpu_custom_call.1} parent=1 // pred_check_branch
      %67 = sbr.rel (0) target = $region33
    $region32: #{tpu_custom_call.1} parent=1 // pred_region
      %69 = dma.done [#allocation9], 16384
    $region33: #{tpu_custom_call.1} parent=1 // pred_fallthru
      _
    %v71 = vld [vmem:[#allocation5] sm:$0xf]
    %v72 = vld [vmem:[#allocation5 + $0x4] sm:$0xf]
    %v73 = vld [vmem:[#allocation5 + $0x8] sm:$0xf]
    %v74 = vld [vmem:[#allocation5 + $0xc] sm:$0xf]
    %v75 = vld [vmem:[#allocation5 + $0x10] sm:$0xf]
    %v76 = vld [vmem:[#allocation5 + $0x14] sm:$0xf]
    %v77 = vld [vmem:[#allocation5 + $0x18] sm:$0xf]
    %v78 = vld [vmem:[#allocation5 + $0x1c] sm:$0xf]
    %v79 = vld [vmem:[#allocation8] sm:$0xff]
    %v80 = vld [vmem:[#allocation8 + $0x8] sm:$0xff]
    %v81 = vld [vmem:[#allocation8 + $0x10] sm:$0xff]
    %v82 = vld [vmem:[#allocation8 + $0x18] sm:$0xff]
    %v83 = vld [vmem:[#allocation8 + $0x20] sm:$0xff]
    %v84 = vld [vmem:[#allocation8 + $0x28] sm:$0xff]
    %v85 = vld [vmem:[#allocation8 + $0x30] sm:$0xff]
    %v86 = vld [vmem:[#allocation8 + $0x38] sm:$0xff]
    %v87 = vld [vmem:[#allocation8 + $0x40] sm:$0xff]
    %v88 = vld [vmem:[#allocation8 + $0x48] sm:$0xff]
    %v89 = vld [vmem:[#allocation8 + $0x50] sm:$0xff]
    %v90 = vld [vmem:[#allocation8 + $0x58] sm:$0xff]
    %v91 = vld [vmem:[#allocation8 + $0x60] sm:$0xff]
    %v92 = vld [vmem:[#allocation8 + $0x68] sm:$0xff]
    %v93 = vld [vmem:[#allocation8 + $0x70] sm:$0xff]
    %v94 = vld [vmem:[#allocation8 + $0x78] sm:$0xff]
    %v95 = vld [vmem:[%s4] sm:$0xff]
    %v97 = vperm.slane %v95, 0
    %v98 = vperm.slane %v95, 1
    %v99 = vperm.slane %v95, 2
    %v100 = vperm.slane %v95, 3
    %v101 = vperm.slane %v95, 4
    %v102 = vperm.slane %v95, 5
    %v103 = vperm.slane %v95, 6
    %v104 = vperm.slane %v95, 7
    %v121 = vunpack.c.l.b16 %v71
    %v122 = vunpack.c.l.b16 %v72
    %v123 = vunpack.c.l.b16 %v73
    %v124 = vunpack.c.l.b16 %v74
    %v125 = vunpack.c.l.b16 %v75
    %v126 = vunpack.c.l.b16 %v76
    %v127 = vunpack.c.l.b16 %v77
    %v128 = vunpack.c.l.b16 %v78
    %v129 = vpack.c.b16 %v122, %v121
    %v130 = vpack.c.b16 %v124, %v123
    %v131 = vpack.c.b16 %v126, %v125
    %v132 = vpack.c.b16 %v128, %v127
    %v149 = vunpack.c.l.b16 %v79
    %v150 = vunpack.c.h.b16 %v79
    %v151 = vunpack.c.l.b16 %v80
    %v152 = vunpack.c.h.b16 %v80
    %v153 = vunpack.c.l.b16 %v81
    %v154 = vunpack.c.h.b16 %v81
    %v155 = vunpack.c.l.b16 %v82
    %v156 = vunpack.c.h.b16 %v82
    %v157 = vunpack.c.l.b16 %v83
    %v158 = vunpack.c.h.b16 %v83
    %v159 = vunpack.c.l.b16 %v84
    %v160 = vunpack.c.h.b16 %v84
    %v161 = vunpack.c.l.b16 %v85
    %v162 = vunpack.c.h.b16 %v85
    %v163 = vunpack.c.l.b16 %v86
    %v164 = vunpack.c.h.b16 %v86
    %v165 = vunpack.c.l.b16 %v87
    %v166 = vunpack.c.h.b16 %v87
    %v167 = vunpack.c.l.b16 %v88
    %v168 = vunpack.c.h.b16 %v88
    %v169 = vunpack.c.l.b16 %v89
    %v170 = vunpack.c.h.b16 %v89
    %v171 = vunpack.c.l.b16 %v90
    %v172 = vunpack.c.h.b16 %v90
    %v173 = vunpack.c.l.b16 %v91
    %v174 = vunpack.c.h.b16 %v91
    %v175 = vunpack.c.l.b16 %v92
    %v176 = vunpack.c.h.b16 %v92
    %v177 = vunpack.c.l.b16 %v93
    %v178 = vunpack.c.h.b16 %v93
    %v179 = vunpack.c.l.b16 %v94
    %v180 = vunpack.c.h.b16 %v94
    %v181 = vpack.c.b16 %v157, %v149
    %v182 = vpack.c.b16 %v158, %v150
    %v183 = vpack.c.b16 %v159, %v151
    %v184 = vpack.c.b16 %v160, %v152
    %v185 = vpack.c.b16 %v161, %v153
    %v186 = vpack.c.b16 %v162, %v154
    %v187 = vpack.c.b16 %v163, %v155
    %v188 = vpack.c.b16 %v164, %v156
    %v189 = vpack.c.b16 %v173, %v165
    %v190 = vpack.c.b16 %v174, %v166
    %v191 = vpack.c.b16 %v175, %v167
    %v192 = vpack.c.b16 %v176, %v168
    %v193 = vpack.c.b16 %v177, %v169
    %v194 = vpack.c.b16 %v178, %v170
    %v195 = vpack.c.b16 %v179, %v171
    %v196 = vpack.c.b16 %v180, %v172
    %vm213 = vcmask 261120
    %v215 = vsel %vm213, %v129, 0
    %v218 = vsel %vm213, %v130, 0
    %v221 = vsel %vm213, %v131, 0
    %v224 = vsel %vm213, %v132, 0
    %226 = vmatpush.bf16.msra.mxu0 0
    %227 = vmatpush.bf16.msra.mxu0 0
    %228 = vmatpush.bf16.msra.mxu0 0
    %229 = vmatpush.bf16.msra.mxu0 0
    %230 = vmatpush.bf16.msra.mxu0 0
    %231 = vmatpush.bf16.msra.mxu0 0
    %232 = vmatpush.bf16.msra.mxu0 %v189
    %233 = vmatpush.bf16.msra.mxu0 %v181
    %234 = vmatmul.bf16.gmra.mxu0 %v215
    %v235 = vpop.f32.mrf.mxu0
    %v236 = vadd.f32 %v97, %v235
    %v237 = vpop.f32.mrf.mxu0
    %v238 = vadd.f32 %v97, %v237
    %239 = vmatmul.bf16.gmra.mxu0 %v218
    %v240 = vpop.f32.mrf.mxu0
    %v241 = vadd.f32 %v97, %v240
    %v242 = vpop.f32.mrf.mxu0
    %v243 = vadd.f32 %v97, %v242
    %244 = vmatmul.bf16.gmra.mxu0 %v221
    %v245 = vpop.f32.mrf.mxu0
    %v246 = vadd.f32 %v97, %v245
    %v247 = vpop.f32.mrf.mxu0
    %v248 = vadd.f32 %v97, %v247
    %249 = vmatmul.bf16.gmra.mxu0 %v224
    %v250 = vpop.f32.mrf.mxu0
    %v251 = vadd.f32 %v97, %v250
    %v252 = vpop.f32.mrf.mxu0
    %v253 = vadd.f32 %v97, %v252
    %254 = vdwg.mxu0
    %255 = vmatpush.bf16.msra.mxu0 0
    %256 = vmatpush.bf16.msra.mxu0 0
    %257 = vmatpush.bf16.msra.mxu0 0
    %258 = vmatpush.bf16.msra.mxu0 0
    %259 = vmatpush.bf16.msra.mxu0 0
    %260 = vmatpush.bf16.msra.mxu0 0
    %261 = vmatpush.bf16.msra.mxu0 %v190
    %262 = vmatpush.bf16.msra.mxu0 %v182
    %263 = vmatmul.bf16.gmra.mxu0 %v215
    %v264 = vpop.f32.mrf.mxu0
    %v265 = vadd.f32 %v98, %v264
    %v266 = vpop.f32.mrf.mxu0
    %v267 = vadd.f32 %v98, %v266
    %268 = vmatmul.bf16.gmra.mxu0 %v218
    %v269 = vpop.f32.mrf.mxu0
    %v270 = vadd.f32 %v98, %v269
    %v271 = vpop.f32.mrf.mxu0
    %v272 = vadd.f32 %v98, %v271
    %273 = vmatmul.bf16.gmra.mxu0 %v221
    %v274 = vpop.f32.mrf.mxu0
    %v275 = vadd.f32 %v98, %v274
    %v276 = vpop.f32.mrf.mxu0
    %v277 = vadd.f32 %v98, %v276
    %278 = vmatmul.bf16.gmra.mxu0 %v224
    %v279 = vpop.f32.mrf.mxu0
    %v280 = vadd.f32 %v98, %v279
    %v281 = vpop.f32.mrf.mxu0
    %v282 = vadd.f32 %v98, %v281
    %283 = vdwg.mxu0
    %284 = vmatpush.bf16.msra.mxu0 0
    %285 = vmatpush.bf16.msra.mxu0 0
    %286 = vmatpush.bf16.msra.mxu0 0
    %287 = vmatpush.bf16.msra.mxu0 0
    %288 = vmatpush.bf16.msra.mxu0 0
    %289 = vmatpush.bf16.msra.mxu0 0
    %290 = vmatpush.bf16.msra.mxu0 %v191
    %291 = vmatpush.bf16.msra.mxu0 %v183
    %292 = vmatmul.bf16.gmra.mxu0 %v215
    %v293 = vpop.f32.mrf.mxu0
    %v294 = vadd.f32 %v99, %v293
    %v295 = vpop.f32.mrf.mxu0
    %v296 = vadd.f32 %v99, %v295
    %297 = vmatmul.bf16.gmra.mxu0 %v218
    %v298 = vpop.f32.mrf.mxu0
    %v299 = vadd.f32 %v99, %v298
    %v300 = vpop.f32.mrf.mxu0
    %v301 = vadd.f32 %v99, %v300
    %302 = vmatmul.bf16.gmra.mxu0 %v221
    %v303 = vpop.f32.mrf.mxu0
    %v304 = vadd.f32 %v99, %v303
    %v305 = vpop.f32.mrf.mxu0
    %v306 = vadd.f32 %v99, %v305
    %307 = vmatmul.bf16.gmra.mxu0 %v224
    %v308 = vpop.f32.mrf.mxu0
    %v309 = vadd.f32 %v99, %v308
    %v310 = vpop.f32.mrf.mxu0
    %v311 = vadd.f32 %v99, %v310
    %312 = vdwg.mxu0
    %313 = vmatpush.bf16.msra.mxu0 0
    %314 = vmatpush.bf16.msra.mxu0 0
    %315 = vmatpush.bf16.msra.mxu0 0
    %316 = vmatpush.bf16.msra.mxu0 0
    %317 = vmatpush.bf16.msra.mxu0 0
    %318 = vmatpush.bf16.msra.mxu0 0
    %319 = vmatpush.bf16.msra.mxu0 %v192
    %320 = vmatpush.bf16.msra.mxu0 %v184
    %321 = vmatmul.bf16.gmra.mxu0 %v215
    %v322 = vpop.f32.mrf.mxu0
    %v323 = vadd.f32 %v100, %v322
    %v324 = vpop.f32.mrf.mxu0
    %v325 = vadd.f32 %v100, %v324
    %326 = vmatmul.bf16.gmra.mxu0 %v218
    %v327 = vpop.f32.mrf.mxu0
    %v328 = vadd.f32 %v100, %v327
    %v329 = vpop.f32.mrf.mxu0
    %v330 = vadd.f32 %v100, %v329
    %331 = vmatmul.bf16.gmra.mxu0 %v221
    %v332 = vpop.f32.mrf.mxu0
    %v333 = vadd.f32 %v100, %v332
    %v334 = vpop.f32.mrf.mxu0
    %v335 = vadd.f32 %v100, %v334
    %336 = vmatmul.bf16.gmra.mxu0 %v224
    %v337 = vpop.f32.mrf.mxu0
    %v338 = vadd.f32 %v100, %v337
    %v339 = vpop.f32.mrf.mxu0
    %v340 = vadd.f32 %v100, %v339
    %341 = vdwg.mxu0
    %342 = vmatpush.bf16.msra.mxu0 0
    %343 = vmatpush.bf16.msra.mxu0 0
    %344 = vmatpush.bf16.msra.mxu0 0
    %345 = vmatpush.bf16.msra.mxu0 0
    %346 = vmatpush.bf16.msra.mxu0 0
    %347 = vmatpush.bf16.msra.mxu0 0
    %348 = vmatpush.bf16.msra.mxu0 %v193
    %349 = vmatpush.bf16.msra.mxu0 %v185
    %350 = vmatmul.bf16.gmra.mxu0 %v215
    %v351 = vpop.f32.mrf.mxu0
    %v352 = vadd.f32 %v101, %v351
    %v353 = vpop.f32.mrf.mxu0
    %v354 = vadd.f32 %v101, %v353
    %355 = vmatmul.bf16.gmra.mxu0 %v218
    %v356 = vpop.f32.mrf.mxu0
    %v357 = vadd.f32 %v101, %v356
    %v358 = vpop.f32.mrf.mxu0
    %v359 = vadd.f32 %v101, %v358
    %360 = vmatmul.bf16.gmra.mxu0 %v221
    %v361 = vpop.f32.mrf.mxu0
    %v362 = vadd.f32 %v101, %v361
    %v363 = vpop.f32.mrf.mxu0
    %v364 = vadd.f32 %v101, %v363
    %365 = vmatmul.bf16.gmra.mxu0 %v224
    %v366 = vpop.f32.mrf.mxu0
    %v367 = vadd.f32 %v101, %v366
    %v368 = vpop.f32.mrf.mxu0
    %v369 = vadd.f32 %v101, %v368
    %370 = vdwg.mxu0
    %371 = vmatpush.bf16.msra.mxu0 0
    %372 = vmatpush.bf16.msra.mxu0 0
    %373 = vmatpush.bf16.msra.mxu0 0
    %374 = vmatpush.bf16.msra.mxu0 0
    %375 = vmatpush.bf16.msra.mxu0 0
    %376 = vmatpush.bf16.msra.mxu0 0
    %377 = vmatpush.bf16.msra.mxu0 %v194
    %378 = vmatpush.bf16.msra.mxu0 %v186
    %379 = vmatmul.bf16.gmra.mxu0 %v215
    %v380 = vpop.f32.mrf.mxu0
    %v381 = vadd.f32 %v102, %v380
    %v382 = vpop.f32.mrf.mxu0
    %v383 = vadd.f32 %v102, %v382
    %384 = vmatmul.bf16.gmra.mxu0 %v218
    %v385 = vpop.f32.mrf.mxu0
    %v386 = vadd.f32 %v102, %v385
    %v387 = vpop.f32.mrf.mxu0
    %v388 = vadd.f32 %v102, %v387
    %389 = vmatmul.bf16.gmra.mxu0 %v221
    %v390 = vpop.f32.mrf.mxu0
    %v391 = vadd.f32 %v102, %v390
    %v392 = vpop.f32.mrf.mxu0
    %v393 = vadd.f32 %v102, %v392
    %394 = vmatmul.bf16.gmra.mxu0 %v224
    %v395 = vpop.f32.mrf.mxu0
    %v396 = vadd.f32 %v102, %v395
    %v397 = vpop.f32.mrf.mxu0
    %v398 = vadd.f32 %v102, %v397
    %399 = vdwg.mxu0
    %400 = vmatpush.bf16.msra.mxu0 0
    %401 = vmatpush.bf16.msra.mxu0 0
    %402 = vmatpush.bf16.msra.mxu0 0
    %403 = vmatpush.bf16.msra.mxu0 0
    %404 = vmatpush.bf16.msra.mxu0 0
    %405 = vmatpush.bf16.msra.mxu0 0
    %406 = vmatpush.bf16.msra.mxu0 %v195
    %407 = vmatpush.bf16.msra.mxu0 %v187
    %408 = vmatmul.bf16.gmra.mxu0 %v215
    %v409 = vpop.f32.mrf.mxu0
    %v410 = vadd.f32 %v103, %v409
    %v411 = vpop.f32.mrf.mxu0
    %v412 = vadd.f32 %v103, %v411
    %413 = vmatmul.bf16.gmra.mxu0 %v218
    %v414 = vpop.f32.mrf.mxu0
    %v415 = vadd.f32 %v103, %v414
    %v416 = vpop.f32.mrf.mxu0
    %v417 = vadd.f32 %v103, %v416
    %418 = vmatmul.bf16.gmra.mxu0 %v221
    %v419 = vpop.f32.mrf.mxu0
    %v420 = vadd.f32 %v103, %v419
    %v421 = vpop.f32.mrf.mxu0
    %v422 = vadd.f32 %v103, %v421
    %423 = vmatmul.bf16.gmra.mxu0 %v224
    %v424 = vpop.f32.mrf.mxu0
    %v425 = vadd.f32 %v103, %v424
    %v426 = vpop.f32.mrf.mxu0
    %v427 = vadd.f32 %v103, %v426
    %428 = vdwg.mxu0
    %429 = vmatpush.bf16.msra.mxu0 0
    %430 = vmatpush.bf16.msra.mxu0 0
    %431 = vmatpush.bf16.msra.mxu0 0
    %432 = vmatpush.bf16.msra.mxu0 0
    %433 = vmatpush.bf16.msra.mxu0 0
    %434 = vmatpush.bf16.msra.mxu0 0
    %435 = vmatpush.bf16.msra.mxu0 %v196
    %436 = vmatpush.bf16.msra.mxu0 %v188
    %437 = vmatmul.bf16.gmra.mxu0 %v215
    %v438 = vpop.f32.mrf.mxu0
    %v439 = vadd.f32 %v104, %v438
    %v440 = vpop.f32.mrf.mxu0
    %v441 = vadd.f32 %v104, %v440
    %442 = vmatmul.bf16.gmra.mxu0 %v218
    %v443 = vpop.f32.mrf.mxu0
    %v444 = vadd.f32 %v104, %v443
    %v445 = vpop.f32.mrf.mxu0
    %v446 = vadd.f32 %v104, %v445
    %447 = vmatmul.bf16.gmra.mxu0 %v221
    %v448 = vpop.f32.mrf.mxu0
    %v449 = vadd.f32 %v104, %v448
    %v450 = vpop.f32.mrf.mxu0
    %v451 = vadd.f32 %v104, %v450
    %452 = vmatmul.bf16.gmra.mxu0 %v224
    %v453 = vpop.f32.mrf.mxu0
    %v454 = vadd.f32 %v104, %v453
    %v455 = vpop.f32.mrf.mxu0
    %v456 = vadd.f32 %v104, %v455
    %457 = vdwg.mxu0
    %458 = vst [vmem:[#allocation2] sm:$0xff] %v236
    %459 = vst [vmem:[#allocation2 + $0x8] sm:$0xff] %v265
    %460 = vst [vmem:[#allocation2 + $0x10] sm:$0xff] %v294
    %461 = vst [vmem:[#allocation2 + $0x18] sm:$0xff] %v323
    %462 = vst [vmem:[#allocation2 + $0x20] sm:$0xff] %v352
    %463 = vst [vmem:[#allocation2 + $0x28] sm:$0xff] %v381
    %464 = vst [vmem:[#allocation2 + $0x30] sm:$0xff] %v410
    %465 = vst [vmem:[#allocation2 + $0x38] sm:$0xff] %v439
    %466 = vst [vmem:[#allocation2 + $0x40] sm:$0xff] %v238
    %467 = vst [vmem:[#allocation2 + $0x48] sm:$0xff] %v267
    %468 = vst [vmem:[#allocation2 + $0x50] sm:$0xff] %v296
    %469 = vst [vmem:[#allocation2 + $0x58] sm:$0xff] %v325
    %470 = vst [vmem:[#allocation2 + $0x60] sm:$0xff] %v354
    %471 = vst [vmem:[#allocation2 + $0x68] sm:$0xff] %v383
    %472 = vst [vmem:[#allocation2 + $0x70] sm:$0xff] %v412
    %473 = vst [vmem:[#allocation2 + $0x78] sm:$0xff] %v441
    %474 = vst [vmem:[#allocation2 + $0x80] sm:$0xff] %v241
    %475 = vst [vmem:[#allocation2 + $0x88] sm:$0xff] %v270
    %476 = vst [vmem:[#allocation2 + $0x90] sm:$0xff] %v299
    %477 = vst [vmem:[#allocation2 + $0x98] sm:$0xff] %v328
    %478 = vst [vmem:[#allocation2 + $0xa0] sm:$0xff] %v357
    %479 = vst [vmem:[#allocation2 + $0xa8] sm:$0xff] %v386
    %480 = vst [vmem:[#allocation2 + $0xb0] sm:$0xff] %v415
    %481 = vst [vmem:[#allocation2 + $0xb8] sm:$0xff] %v444
    %482 = vst [vmem:[#allocation2 + $0xc0] sm:$0xff] %v243
    %483 = vst [vmem:[#allocation2 + $0xc8] sm:$0xff] %v272
    %484 = vst [vmem:[#allocation2 + $0xd0] sm:$0xff] %v301
    %485 = vst [vmem:[#allocation2 + $0xd8] sm:$0xff] %v330
    %486 = vst [vmem:[#allocation2 + $0xe0] sm:$0xff] %v359
    %487 = vst [vmem:[#allocation2 + $0xe8] sm:$0xff] %v388
    %488 = vst [vmem:[#allocation2 + $0xf0] sm:$0xff] %v417
    %489 = vst [vmem:[#allocation2 + $0xf8] sm:$0xff] %v446
    %490 = vst [vmem:[#allocation2 + $0x100] sm:$0xff] %v246
    %491 = vst [vmem:[#allocation2 + $0x108] sm:$0xff] %v275
    %492 = vst [vmem:[#allocation2 + $0x110] sm:$0xff] %v304
    %493 = vst [vmem:[#allocation2 + $0x118] sm:$0xff] %v333
    %494 = vst [vmem:[#allocation2 + $0x120] sm:$0xff] %v362
    %495 = vst [vmem:[#allocation2 + $0x128] sm:$0xff] %v391
    %496 = vst [vmem:[#allocation2 + $0x130] sm:$0xff] %v420
    %497 = vst [vmem:[#allocation2 + $0x138] sm:$0xff] %v449
    %498 = vst [vmem:[#allocation2 + $0x140] sm:$0xff] %v248
    %499 = vst [vmem:[#allocation2 + $0x148] sm:$0xff] %v277
    %500 = vst [vmem:[#allocation2 + $0x150] sm:$0xff] %v306
    %501 = vst [vmem:[#allocation2 + $0x158] sm:$0xff] %v335
    %502 = vst [vmem:[#allocation2 + $0x160] sm:$0xff] %v364
    %503 = vst [vmem:[#allocation2 + $0x168] sm:$0xff] %v393
    %504 = vst [vmem:[#allocation2 + $0x170] sm:$0xff] %v422
    %505 = vst [vmem:[#allocation2 + $0x178] sm:$0xff] %v451
    %506 = vst [vmem:[#allocation2 + $0x180] sm:$0xff] %v251
    %507 = vst [vmem:[#allocation2 + $0x188] sm:$0xff] %v280
    %508 = vst [vmem:[#allocation2 + $0x190] sm:$0xff] %v309
    %509 = vst [vmem:[#allocation2 + $0x198] sm:$0xff] %v338
    %510 = vst [vmem:[#allocation2 + $0x1a0] sm:$0xff] %v367
    %511 = vst [vmem:[#allocation2 + $0x1a8] sm:$0xff] %v396
    %512 = vst [vmem:[#allocation2 + $0x1b0] sm:$0xff] %v425
    %513 = vst [vmem:[#allocation2 + $0x1b8] sm:$0xff] %v454
    %514 = vst [vmem:[#allocation2 + $0x1c0] sm:$0xff] %v253
    %515 = vst [vmem:[#allocation2 + $0x1c8] sm:$0xff] %v282
    %516 = vst [vmem:[#allocation2 + $0x1d0] sm:$0xff] %v311
    %517 = vst [vmem:[#allocation2 + $0x1d8] sm:$0xff] %v340
    %518 = vst [vmem:[#allocation2 + $0x1e0] sm:$0xff] %v369
    %519 = vst [vmem:[#allocation2 + $0x1e8] sm:$0xff] %v398
    %520 = vst [vmem:[#allocation2 + $0x1f0] sm:$0xff] %v427
    %521 = vst [vmem:[#allocation2 + $0x1f8] sm:$0xff] %v456
    %v522 = vld [vmem:[%s1] sm:$0xff]
    %s523 = sld [smem:[#allocation4]]
    %v524 = vld [vmem:[#allocation10] sm:$0xff]
    %v525 = vld [vmem:[#allocation10 + $0x8] sm:$0xff]
    %v526 = vld [vmem:[#allocation10 + $0x10] sm:$0xff]
    %v527 = vld [vmem:[#allocation10 + $0x18] sm:$0xff]
    %v528 = vld [vmem:[#allocation10 + $0x20] sm:$0xff]
    %v529 = vld [vmem:[#allocation10 + $0x28] sm:$0xff]
    %v530 = vld [vmem:[#allocation10 + $0x30] sm:$0xff]
    %v531 = vld [vmem:[#allocation10 + $0x38] sm:$0xff]
    %v532 = vld [vmem:[#allocation10 + $0x40] sm:$0xff]
    %v533 = vld [vmem:[#allocation10 + $0x48] sm:$0xff]
    %v534 = vld [vmem:[#allocation10 + $0x50] sm:$0xff]
    %v535 = vld [vmem:[#allocation10 + $0x58] sm:$0xff]
    %v536 = vld [vmem:[#allocation10 + $0x60] sm:$0xff]
    %v537 = vld [vmem:[#allocation10 + $0x68] sm:$0xff]
    %v538 = vld [vmem:[#allocation10 + $0x70] sm:$0xff]
    %v539 = vld [vmem:[#allocation10 + $0x78] sm:$0xff]
    %v540 = vld [vmem:[#allocation10 + $0x80] sm:$0xff]
    %v541 = vld [vmem:[#allocation10 + $0x88] sm:$0xff]
    %v542 = vld [vmem:[#allocation10 + $0x90] sm:$0xff]
    %v543 = vld [vmem:[#allocation10 + $0x98] sm:$0xff]
    %v544 = vld [vmem:[#allocation10 + $0xa0] sm:$0xff]
    %v545 = vld [vmem:[#allocation10 + $0xa8] sm:$0xff]
    %v546 = vld [vmem:[#allocation10 + $0xb0] sm:$0xff]
    %v547 = vld [vmem:[#allocation10 + $0xb8] sm:$0xff]
    %v548 = vld [vmem:[#allocation10 + $0xc0] sm:$0xff]
    %v549 = vld [vmem:[#allocation10 + $0xc8] sm:$0xff]
    %v550 = vld [vmem:[#allocation10 + $0xd0] sm:$0xff]
    %v551 = vld [vmem:[#allocation10 + $0xd8] sm:$0xff]
    %v552 = vld [vmem:[#allocation10 + $0xe0] sm:$0xff]
    %v553 = vld [vmem:[#allocation10 + $0xe8] sm:$0xff]
    %v554 = vld [vmem:[#allocation10 + $0xf0] sm:$0xff]
    %v555 = vld [vmem:[#allocation10 + $0xf8] sm:$0xff]
    %v556 = vld [vmem:[#allocation10 + $0x100] sm:$0xff]
    %v557 = vld [vmem:[#allocation10 + $0x108] sm:$0xff]
    %v558 = vld [vmem:[#allocation10 + $0x110] sm:$0xff]
    %v559 = vld [vmem:[#allocation10 + $0x118] sm:$0xff]
    %v560 = vld [vmem:[#allocation10 + $0x120] sm:$0xff]
    %v561 = vld [vmem:[#allocation10 + $0x128] sm:$0xff]
    %v562 = vld [vmem:[#allocation10 + $0x130] sm:$0xff]
    %v563 = vld [vmem:[#allocation10 + $0x138] sm:$0xff]
    %v564 = vld [vmem:[#allocation10 + $0x140] sm:$0xff]
    %v565 = vld [vmem:[#allocation10 + $0x148] sm:$0xff]
    %v566 = vld [vmem:[#allocation10 + $0x150] sm:$0xff]
    %v567 = vld [vmem:[#allocation10 + $0x158] sm:$0xff]
    %v568 = vld [vmem:[#allocation10 + $0x160] sm:$0xff]
    %v569 = vld [vmem:[#allocation10 + $0x168] sm:$0xff]
    %v570 = vld [vmem:[#allocation10 + $0x170] sm:$0xff]
    %v571 = vld [vmem:[#allocation10 + $0x178] sm:$0xff]
    %v572 = vld [vmem:[#allocation10 + $0x180] sm:$0xff]
    %v573 = vld [vmem:[#allocation10 + $0x188] sm:$0xff]
    %v574 = vld [vmem:[#allocation10 + $0x190] sm:$0xff]
    %v575 = vld [vmem:[#allocation10 + $0x198] sm:$0xff]
    %v576 = vld [vmem:[#allocation10 + $0x1a0] sm:$0xff]
    %v577 = vld [vmem:[#allocation10 + $0x1a8] sm:$0xff]
    %v578 = vld [vmem:[#allocation10 + $0x1b0] sm:$0xff]
    %v579 = vld [vmem:[#allocation10 + $0x1b8] sm:$0xff]
    %v580 = vld [vmem:[#allocation10 + $0x1c0] sm:$0xff]
    %v581 = vld [vmem:[#allocation10 + $0x1c8] sm:$0xff]
    %v582 = vld [vmem:[#allocation10 + $0x1d0] sm:$0xff]
    %v583 = vld [vmem:[#allocation10 + $0x1d8] sm:$0xff]
    %v584 = vld [vmem:[#allocation10 + $0x1e0] sm:$0xff]
    %v585 = vld [vmem:[#allocation10 + $0x1e8] sm:$0xff]
    %v586 = vld [vmem:[#allocation10 + $0x1f0] sm:$0xff]
    %v587 = vld [vmem:[#allocation10 + $0x1f8] sm:$0xff]
    %v588 = vld [vmem:[#allocation10 + $0x200] sm:$0xff]
    %v589 = vld [vmem:[#allocation10 + $0x208] sm:$0xff]
    %v590 = vld [vmem:[#allocation10 + $0x210] sm:$0xff]
    %v591 = vld [vmem:[#allocation10 + $0x218] sm:$0xff]
    %v592 = vld [vmem:[#allocation10 + $0x220] sm:$0xff]
    %v593 = vld [vmem:[#allocation10 + $0x228] sm:$0xff]
    %v594 = vld [vmem:[#allocation10 + $0x230] sm:$0xff]
    %v595 = vld [vmem:[#allocation10 + $0x238] sm:$0xff]
    %v596 = vld [vmem:[#allocation10 + $0x240] sm:$0xff]
    %v597 = vld [vmem:[#allocation10 + $0x248] sm:$0xff]
    %v598 = vld [vmem:[#allocation10 + $0x250] sm:$0xff]
    %v599 = vld [vmem:[#allocation10 + $0x258] sm:$0xff]
    %v600 = vld [vmem:[#allocation10 + $0x260] sm:$0xff]
    %v601 = vld [vmem:[#allocation10 + $0x268] sm:$0xff]
    %v602 = vld [vmem:[#allocation10 + $0x270] sm:$0xff]
    %v603 = vld [vmem:[#allocation10 + $0x278] sm:$0xff]
    %v604 = vld [vmem:[#allocation10 + $0x280] sm:$0xff]
    %v605 = vld [vmem:[#allocation10 + $0x288] sm:$0xff]
    %v606 = vld [vmem:[#allocation10 + $0x290] sm:$0xff]
    %v607 = vld [vmem:[#allocation10 + $0x298] sm:$0xff]
    %v608 = vld [vmem:[#allocation10 + $0x2a0] sm:$0xff]
    %v609 = vld [vmem:[#allocation10 + $0x2a8] sm:$0xff]
    %v610 = vld [vmem:[#allocation10 + $0x2b0] sm:$0xff]
    %v611 = vld [vmem:[#allocation10 + $0x2b8] sm:$0xff]
    %v612 = vld [vmem:[#allocation10 + $0x2c0] sm:$0xff]
    %v613 = vld [vmem:[#allocation10 + $0x2c8] sm:$0xff]
    %v614 = vld [vmem:[#allocation10 + $0x2d0] sm:$0xff]
    %v615 = vld [vmem:[#allocation10 + $0x2d8] sm:$0xff]
    %v616 = vld [vmem:[#allocation10 + $0x2e0] sm:$0xff]
    %v617 = vld [vmem:[#allocation10 + $0x2e8] sm:$0xff]
    %v618 = vld [vmem:[#allocation10 + $0x2f0] sm:$0xff]
    %v619 = vld [vmem:[#allocation10 + $0x2f8] sm:$0xff]
    %v620 = vld [vmem:[#allocation10 + $0x300] sm:$0xff]
    %v621 = vld [vmem:[#allocation10 + $0x308] sm:$0xff]
    %v622 = vld [vmem:[#allocation10 + $0x310] sm:$0xff]
    %v623 = vld [vmem:[#allocation10 + $0x318] sm:$0xff]
    %v624 = vld [vmem:[#allocation10 + $0x320] sm:$0xff]
    %v625 = vld [vmem:[#allocation10 + $0x328] sm:$0xff]
    %v626 = vld [vmem:[#allocation10 + $0x330] sm:$0xff]
    %v627 = vld [vmem:[#allocation10 + $0x338] sm:$0xff]
    %v628 = vld [vmem:[#allocation10 + $0x340] sm:$0xff]
    %v629 = vld [vmem:[#allocation10 + $0x348] sm:$0xff]
    %v630 = vld [vmem:[#allocation10 + $0x350] sm:$0xff]
    %v631 = vld [vmem:[#allocation10 + $0x358] sm:$0xff]
    %v632 = vld [vmem:[#allocation10 + $0x360] sm:$0xff]
    %v633 = vld [vmem:[#allocation10 + $0x368] sm:$0xff]
    %v634 = vld [vmem:[#allocation10 + $0x370] sm:$0xff]
    %v635 = vld [vmem:[#allocation10 + $0x378] sm:$0xff]
    %v636 = vld [vmem:[#allocation10 + $0x380] sm:$0xff]
    %v637 = vld [vmem:[#allocation10 + $0x388] sm:$0xff]
    %v638 = vld [vmem:[#allocation10 + $0x390] sm:$0xff]
    %v639 = vld [vmem:[#allocation10 + $0x398] sm:$0xff]
    %v640 = vld [vmem:[#allocation10 + $0x3a0] sm:$0xff]
    %v641 = vld [vmem:[#allocation10 + $0x3a8] sm:$0xff]
    %v642 = vld [vmem:[#allocation10 + $0x3b0] sm:$0xff]
    %v643 = vld [vmem:[#allocation10 + $0x3b8] sm:$0xff]
    %v644 = vld [vmem:[#allocation10 + $0x3c0] sm:$0xff]
    %v645 = vld [vmem:[#allocation10 + $0x3c8] sm:$0xff]
    %v646 = vld [vmem:[#allocation10 + $0x3d0] sm:$0xff]
    %v647 = vld [vmem:[#allocation10 + $0x3d8] sm:$0xff]
    %v648 = vld [vmem:[#allocation10 + $0x3e0] sm:$0xff]
    %v649 = vld [vmem:[#allocation10 + $0x3e8] sm:$0xff]
    %v650 = vld [vmem:[#allocation10 + $0x3f0] sm:$0xff]
    %v651 = vld [vmem:[#allocation10 + $0x3f8] sm:$0xff]
    // While loop
    $region34: #{tpu_custom_call.1} parent=1 // loop_pre_header
      _
    $region35: #{tpu_custom_call.1} parent=1 // loop_header
      %s653 = sphi 0, %s655
      %p654 = scmp.ge.s32.totalorder %s653, %s523
      %v658 = vphi 0.0, %v1614
      %v659 = vphi 0.0, %v1612
      %v660 = vphi 0.0, %v1677
      %v661 = vphi 0.0, %v1675
    $region36: #{tpu_custom_call.1} parent=1 // loop_header_branch
      %657 = sbr.rel (%p654) target = $region40
    $region37: #{tpu_custom_call.1} parent=1 // loop_body
      %s662 = ssub.s32 %s523, 1
      %s663 = ssub.s32 %s662, %s653
      %v664 = vsub.s32 %v522, 1
      %v665 = vstv %s663
      %vm666 = vcmp.ge.s32.totalorder %v665, %v664
      %v667 = vsel %vm666, 1, 0
      %668 = vset.pattern.permute.xlu0 0
      %669 = vperm.xlu0 %668, %v667
      %v670 = vpop.permute.xlu0 %669
      %vm671 = vcmp.eq.s32.totalorder %v670, 1
      %v672 = vsel %vm671, 0.0, %v660
      %v673 = vsel %vm671, 0.0, %v661
      %s674 = smul.u32 %s653, 8
      %s675 = smul.u32 %s663, 8
      %s676 = sshra.s32 %s674, 3
      %s677 = sand.u32 %s674, 7
      %s678 = smul.u32 %s676, 8
      %s679 = smul.addr %s678, 8
      %s680 = scalar_lea.vmem [#allocation2], %s679
      %v681 = vld [vmem:[%s680] sm:$0xff]
      %v682 = vld [vmem:[%s680 + $0x8] sm:$0xff]
      %v683 = vld [vmem:[%s680 + $0x10] sm:$0xff]
      %v684 = vld [vmem:[%s680 + $0x18] sm:$0xff]
      %s685 = sshra.s32 %s675, 3
      %s686 = sand.u32 %s675, 7
      %s687 = smul.u32 %s685, 8
      %s688 = smul.addr %s687, 8
      %s689 = scalar_lea.vmem [#allocation2], %s688
      %v690 = vld [vmem:[%s689 + $0x20] sm:$0xff]
      %v691 = vld [vmem:[%s689 + $0x28] sm:$0xff]
      %v692 = vld [vmem:[%s689 + $0x30] sm:$0xff]
      %v693 = vld [vmem:[%s689 + $0x38] sm:$0xff]
      %v694 = vpack.c.bf16 %v658, %v658
      %v695 = vpack.c.bf16 %v672, %v672
      %v824 = vunpack.c.l.b16 %v524
      %v825 = vunpack.c.h.b16 %v524
      %v826 = vunpack.c.l.b16 %v525
      %v827 = vunpack.c.h.b16 %v525
      %v828 = vunpack.c.l.b16 %v526
      %v829 = vunpack.c.h.b16 %v526
      %v830 = vunpack.c.l.b16 %v527
      %v831 = vunpack.c.h.b16 %v527
      %v832 = vunpack.c.l.b16 %v528
      %v833 = vunpack.c.h.b16 %v528
      %v834 = vunpack.c.l.b16 %v529
      %v835 = vunpack.c.h.b16 %v529
      %v836 = vunpack.c.l.b16 %v530
      %v837 = vunpack.c.h.b16 %v530
      %v838 = vunpack.c.l.b16 %v531
      %v839 = vunpack.c.h.b16 %v531
      %v840 = vunpack.c.l.b16 %v532
      %v841 = vunpack.c.h.b16 %v532
      %v842 = vunpack.c.l.b16 %v533
      %v843 = vunpack.c.h.b16 %v533
      %v844 = vunpack.c.l.b16 %v534
      %v845 = vunpack.c.h.b16 %v534
      %v846 = vunpack.c.l.b16 %v535
      %v847 = vunpack.c.h.b16 %v535
      %v848 = vunpack.c.l.b16 %v536
      %v849 = vunpack.c.h.b16 %v536
      %v850 = vunpack.c.l.b16 %v537
      %v851 = vunpack.c.h.b16 %v537
      %v852 = vunpack.c.l.b16 %v538
      %v853 = vunpack.c.h.b16 %v538
      %v854 = vunpack.c.l.b16 %v539
      %v855 = vunpack.c.h.b16 %v539
      %v856 = vunpack.c.l.b16 %v540
      %v857 = vunpack.c.h.b16 %v540
      %v858 = vunpack.c.l.b16 %v541
      %v859 = vunpack.c.h.b16 %v541
      %v860 = vunpack.c.l.b16 %v542
      %v861 = vunpack.c.h.b16 %v542
      %v862 = vunpack.c.l.b16 %v543
      %v863 = vunpack.c.h.b16 %v543
      %v864 = vunpack.c.l.b16 %v544
      %v865 = vunpack.c.h.b16 %v544
      %v866 = vunpack.c.l.b16 %v545
      %v867 = vunpack.c.h.b16 %v545
      %v868 = vunpack.c.l.b16 %v546
      %v869 = vunpack.c.h.b16 %v546
      %v870 = vunpack.c.l.b16 %v547
      %v871 = vunpack.c.h.b16 %v547
      %v872 = vunpack.c.l.b16 %v548
      %v873 = vunpack.c.h.b16 %v548
      %v874 = vunpack.c.l.b16 %v549
      %v875 = vunpack.c.h.b16 %v549
      %v876 = vunpack.c.l.b16 %v550
      %v877 = vunpack.c.h.b16 %v550
      %v878 = vunpack.c.l.b16 %v551
      %v879 = vunpack.c.h.b16 %v551
      %v880 = vunpack.c.l.b16 %v552
      %v881 = vunpack.c.h.b16 %v552
      %v882 = vunpack.c.l.b16 %v553
      %v883 = vunpack.c.h.b16 %v553
      %v884 = vunpack.c.l.b16 %v554
      %v885 = vunpack.c.h.b16 %v554
      %v886 = vunpack.c.l.b16 %v555
      %v887 = vunpack.c.h.b16 %v555
      %v888 = vunpack.c.l.b16 %v556
      %v889 = vunpack.c.h.b16 %v556
      %v890 = vunpack.c.l.b16 %v557
      %v891 = vunpack.c.h.b16 %v557
      %v892 = vunpack.c.l.b16 %v558
      %v893 = vunpack.c.h.b16 %v558
      %v894 = vunpack.c.l.b16 %v559
      %v895 = vunpack.c.h.b16 %v559
      %v896 = vunpack.c.l.b16 %v560
      %v897 = vunpack.c.h.b16 %v560
      %v898 = vunpack.c.l.b16 %v561
      %v899 = vunpack.c.h.b16 %v561
      %v900 = vunpack.c.l.b16 %v562
      %v901 = vunpack.c.h.b16 %v562
      %v902 = vunpack.c.l.b16 %v563
      %v903 = vunpack.c.h.b16 %v563
      %v904 = vunpack.c.l.b16 %v564
      %v905 = vunpack.c.h.b16 %v564
      %v906 = vunpack.c.l.b16 %v565
      %v907 = vunpack.c.h.b16 %v565
      %v908 = vunpack.c.l.b16 %v566
      %v909 = vunpack.c.h.b16 %v566
      %v910 = vunpack.c.l.b16 %v567
      %v911 = vunpack.c.h.b16 %v567
      %v912 = vunpack.c.l.b16 %v568
      %v913 = vunpack.c.h.b16 %v568
      %v914 = vunpack.c.l.b16 %v569
      %v915 = vunpack.c.h.b16 %v569
      %v916 = vunpack.c.l.b16 %v570
      %v917 = vunpack.c.h.b16 %v570
      %v918 = vunpack.c.l.b16 %v571
      %v919 = vunpack.c.h.b16 %v571
      %v920 = vunpack.c.l.b16 %v572
      %v921 = vunpack.c.h.b16 %v572
      %v922 = vunpack.c.l.b16 %v573
      %v923 = vunpack.c.h.b16 %v573
      %v924 = vunpack.c.l.b16 %v574
      %v925 = vunpack.c.h.b16 %v574
      %v926 = vunpack.c.l.b16 %v575
      %v927 = vunpack.c.h.b16 %v575
      %v928 = vunpack.c.l.b16 %v576
      %v929 = vunpack.c.h.b16 %v576
      %v930 = vunpack.c.l.b16 %v577
      %v931 = vunpack.c.h.b16 %v577
      %v932 = vunpack.c.l.b16 %v578
      %v933 = vunpack.c.h.b16 %v578
      %v934 = vunpack.c.l.b16 %v579
      %v935 = vunpack.c.h.b16 %v579
      %v936 = vunpack.c.l.b16 %v580
      %v937 = vunpack.c.h.b16 %v580
      %v938 = vunpack.c.l.b16 %v581
      %v939 = vunpack.c.h.b16 %v581
      %v940 = vunpack.c.l.b16 %v582
      %v941 = vunpack.c.h.b16 %v582
      %v942 = vunpack.c.l.b16 %v583
      %v943 = vunpack.c.h.b16 %v583
      %v944 = vunpack.c.l.b16 %v584
      %v945 = vunpack.c.h.b16 %v584
      %v946 = vunpack.c.l.b16 %v585
      %v947 = vunpack.c.h.b16 %v585
      %v948 = vunpack.c.l.b16 %v586
      %v949 = vunpack.c.h.b16 %v586
      %v950 = vunpack.c.l.b16 %v587
      %v951 = vunpack.c.h.b16 %v587
      %v952 = vunpack.c.l.b16 %v588
      %v953 = vunpack.c.h.b16 %v588
      %v954 = vunpack.c.l.b16 %v589
      %v955 = vunpack.c.h.b16 %v589
      %v956 = vunpack.c.l.b16 %v590
      %v957 = vunpack.c.h.b16 %v590
      %v958 = vunpack.c.l.b16 %v591
      %v959 = vunpack.c.h.b16 %v591
      %v960 = vunpack.c.l.b16 %v592
      %v961 = vunpack.c.h.b16 %v592
      %v962 = vunpack.c.l.b16 %v593
      %v963 = vunpack.c.h.b16 %v593
      %v964 = vunpack.c.l.b16 %v594
      %v965 = vunpack.c.h.b16 %v594
      %v966 = vunpack.c.l.b16 %v595
      %v967 = vunpack.c.h.b16 %v595
      %v968 = vunpack.c.l.b16 %v596
      %v969 = vunpack.c.h.b16 %v596
      %v970 = vunpack.c.l.b16 %v597
      %v971 = vunpack.c.h.b16 %v597
      %v972 = vunpack.c.l.b16 %v598
      %v973 = vunpack.c.h.b16 %v598
      %v974 = vunpack.c.l.b16 %v599
      %v975 = vunpack.c.h.b16 %v599
      %v976 = vunpack.c.l.b16 %v600
      %v977 = vunpack.c.h.b16 %v600
      %v978 = vunpack.c.l.b16 %v601
      %v979 = vunpack.c.h.b16 %v601
      %v980 = vunpack.c.l.b16 %v602
      %v981 = vunpack.c.h.b16 %v602
      %v982 = vunpack.c.l.b16 %v603
      %v983 = vunpack.c.h.b16 %v603
      %v984 = vunpack.c.l.b16 %v604
      %v985 = vunpack.c.h.b16 %v604
      %v986 = vunpack.c.l.b16 %v605
      %v987 = vunpack.c.h.b16 %v605
      %v988 = vunpack.c.l.b16 %v606
      %v989 = vunpack.c.h.b16 %v606
      %v990 = vunpack.c.l.b16 %v607
      %v991 = vunpack.c.h.b16 %v607
      %v992 = vunpack.c.l.b16 %v608
      %v993 = vunpack.c.h.b16 %v608
      %v994 = vunpack.c.l.b16 %v609
      %v995 = vunpack.c.h.b16 %v609
      %v996 = vunpack.c.l.b16 %v610
      %v997 = vunpack.c.h.b16 %v610
      %v998 = vunpack.c.l.b16 %v611
      %v999 = vunpack.c.h.b16 %v611
      %v1000 = vunpack.c.l.b16 %v612
      %v1001 = vunpack.c.h.b16 %v612
      %v1002 = vunpack.c.l.b16 %v613
      %v1003 = vunpack.c.h.b16 %v613
      %v1004 = vunpack.c.l.b16 %v614
      %v1005 = vunpack.c.h.b16 %v614
      %v1006 = vunpack.c.l.b16 %v615
      %v1007 = vunpack.c.h.b16 %v615
      %v1008 = vunpack.c.l.b16 %v616
      %v1009 = vunpack.c.h.b16 %v616
      %v1010 = vunpack.c.l.b16 %v617
      %v1011 = vunpack.c.h.b16 %v617
      %v1012 = vunpack.c.l.b16 %v618
      %v1013 = vunpack.c.h.b16 %v618
      %v1014 = vunpack.c.l.b16 %v619
      %v1015 = vunpack.c.h.b16 %v619
      %v1016 = vunpack.c.l.b16 %v620
      %v1017 = vunpack.c.h.b16 %v620
      %v1018 = vunpack.c.l.b16 %v621
      %v1019 = vunpack.c.h.b16 %v621
      %v1020 = vunpack.c.l.b16 %v622
      %v1021 = vunpack.c.h.b16 %v622
      %v1022 = vunpack.c.l.b16 %v623
      %v1023 = vunpack.c.h.b16 %v623
      %v1024 = vunpack.c.l.b16 %v624
      %v1025 = vunpack.c.h.b16 %v624
      %v1026 = vunpack.c.l.b16 %v625
      %v1027 = vunpack.c.h.b16 %v625
      %v1028 = vunpack.c.l.b16 %v626
      %v1029 = vunpack.c.h.b16 %v626
      %v1030 = vunpack.c.l.b16 %v627
      %v1031 = vunpack.c.h.b16 %v627
      %v1032 = vunpack.c.l.b16 %v628
      %v1033 = vunpack.c.h.b16 %v628
      %v1034 = vunpack.c.l.b16 %v629
      %v1035 = vunpack.c.h.b16 %v629
      %v1036 = vunpack.c.l.b16 %v630
      %v1037 = vunpack.c.h.b16 %v630
      %v1038 = vunpack.c.l.b16 %v631
      %v1039 = vunpack.c.h.b16 %v631
      %v1040 = vunpack.c.l.b16 %v632
      %v1041 = vunpack.c.h.b16 %v632
      %v1042 = vunpack.c.l.b16 %v633
      %v1043 = vunpack.c.h.b16 %v633
      %v1044 = vunpack.c.l.b16 %v634
      %v1045 = vunpack.c.h.b16 %v634
      %v1046 = vunpack.c.l.b16 %v635
      %v1047 = vunpack.c.h.b16 %v635
      %v1048 = vunpack.c.l.b16 %v636
      %v1049 = vunpack.c.h.b16 %v636
      %v1050 = vunpack.c.l.b16 %v637
      %v1051 = vunpack.c.h.b16 %v637
      %v1052 = vunpack.c.l.b16 %v638
      %v1053 = vunpack.c.h.b16 %v638
      %v1054 = vunpack.c.l.b16 %v639
      %v1055 = vunpack.c.h.b16 %v639
      %v1056 = vunpack.c.l.b16 %v640
      %v1057 = vunpack.c.h.b16 %v640
      %v1058 = vunpack.c.l.b16 %v641
      %v1059 = vunpack.c.h.b16 %v641
      %v1060 = vunpack.c.l.b16 %v642
      %v1061 = vunpack.c.h.b16 %v642
      %v1062 = vunpack.c.l.b16 %v643
      %v1063 = vunpack.c.h.b16 %v643
      %v1064 = vunpack.c.l.b16 %v644
      %v1065 = vunpack.c.h.b16 %v644
      %v1066 = vunpack.c.l.b16 %v645
      %v1067 = vunpack.c.h.b16 %v645
      %v1068 = vunpack.c.l.b16 %v646
      %v1069 = vunpack.c.h.b16 %v646
      %v1070 = vunpack.c.l.b16 %v647
      %v1071 = vunpack.c.h.b16 %v647
      %v1072 = vunpack.c.l.b16 %v648
      %v1073 = vunpack.c.h.b16 %v648
      %v1074 = vunpack.c.l.b16 %v649
      %v1075 = vunpack.c.h.b16 %v649
      %v1076 = vunpack.c.l.b16 %v650
      %v1077 = vunpack.c.h.b16 %v650
      %v1078 = vunpack.c.l.b16 %v651
      %v1079 = vunpack.c.h.b16 %v651
      %v1080 = vpack.c.b16 %v832, %v824
      %v1081 = vpack.c.b16 %v833, %v825
      %v1082 = vpack.c.b16 %v834, %v826
      %v1083 = vpack.c.b16 %v835, %v827
      %v1084 = vpack.c.b16 %v836, %v828
      %v1085 = vpack.c.b16 %v837, %v829
      %v1086 = vpack.c.b16 %v838, %v830
      %v1087 = vpack.c.b16 %v839, %v831
      %v1088 = vpack.c.b16 %v848, %v840
      %v1089 = vpack.c.b16 %v849, %v841
      %v1090 = vpack.c.b16 %v850, %v842
      %v1091 = vpack.c.b16 %v851, %v843
      %v1092 = vpack.c.b16 %v852, %v844
      %v1093 = vpack.c.b16 %v853, %v845
      %v1094 = vpack.c.b16 %v854, %v846
      %v1095 = vpack.c.b16 %v855, %v847
      %v1096 = vpack.c.b16 %v864, %v856
      %v1097 = vpack.c.b16 %v865, %v857
      %v1098 = vpack.c.b16 %v866, %v858
      %v1099 = vpack.c.b16 %v867, %v859
      %v1100 = vpack.c.b16 %v868, %v860
      %v1101 = vpack.c.b16 %v869, %v861
      %v1102 = vpack.c.b16 %v870, %v862
      %v1103 = vpack.c.b16 %v871, %v863
      %v1104 = vpack.c.b16 %v880, %v872
      %v1105 = vpack.c.b16 %v881, %v873
      %v1106 = vpack.c.b16 %v882, %v874
      %v1107 = vpack.c.b16 %v883, %v875
      %v1108 = vpack.c.b16 %v884, %v876
      %v1109 = vpack.c.b16 %v885, %v877
      %v1110 = vpack.c.b16 %v886, %v878
      %v1111 = vpack.c.b16 %v887, %v879
      %v1112 = vpack.c.b16 %v896, %v888
      %v1113 = vpack.c.b16 %v897, %v889
      %v1114 = vpack.c.b16 %v898, %v890
      %v1115 = vpack.c.b16 %v899, %v891
      %v1116 = vpack.c.b16 %v900, %v892
      %v1117 = vpack.c.b16 %v901, %v893
      %v1118 = vpack.c.b16 %v902, %v894
      %v1119 = vpack.c.b16 %v903, %v895
      %v1120 = vpack.c.b16 %v912, %v904
      %v1121 = vpack.c.b16 %v913, %v905
      %v1122 = vpack.c.b16 %v914, %v906
      %v1123 = vpack.c.b16 %v915, %v907
      %v1124 = vpack.c.b16 %v916, %v908
      %v1125 = vpack.c.b16 %v917, %v909
      %v1126 = vpack.c.b16 %v918, %v910
      %v1127 = vpack.c.b16 %v919, %v911
      %v1128 = vpack.c.b16 %v928, %v920
      %v1129 = vpack.c.b16 %v929, %v921
      %v1130 = vpack.c.b16 %v930, %v922
      %v1131 = vpack.c.b16 %v931, %v923
      %v1132 = vpack.c.b16 %v932, %v924
      %v1133 = vpack.c.b16 %v933, %v925
      %v1134 = vpack.c.b16 %v934, %v926
      %v1135 = vpack.c.b16 %v935, %v927
      %v1136 = vpack.c.b16 %v944, %v936
      %v1137 = vpack.c.b16 %v945, %v937
      %v1138 = vpack.c.b16 %v946, %v938
      %v1139 = vpack.c.b16 %v947, %v939
      %v1140 = vpack.c.b16 %v948, %v940
      %v1141 = vpack.c.b16 %v949, %v941
      %v1142 = vpack.c.b16 %v950, %v942
      %v1143 = vpack.c.b16 %v951, %v943
      %v1144 = vpack.c.b16 %v960, %v952
      %v1145 = vpack.c.b16 %v961, %v953
      %v1146 = vpack.c.b16 %v962, %v954
      %v1147 = vpack.c.b16 %v963, %v955
      %v1148 = vpack.c.b16 %v964, %v956
      %v1149 = vpack.c.b16 %v965, %v957
      %v1150 = vpack.c.b16 %v966, %v958
      %v1151 = vpack.c.b16 %v967, %v959
      %v1152 = vpack.c.b16 %v976, %v968
      %v1153 = vpack.c.b16 %v977, %v969
      %v1154 = vpack.c.b16 %v978, %v970
      %v1155 = vpack.c.b16 %v979, %v971
      %v1156 = vpack.c.b16 %v980, %v972
      %v1157 = vpack.c.b16 %v981, %v973
      %v1158 = vpack.c.b16 %v982, %v974
      %v1159 = vpack.c.b16 %v983, %v975
      %v1160 = vpack.c.b16 %v992, %v984
      %v1161 = vpack.c.b16 %v993, %v985
      %v1162 = vpack.c.b16 %v994, %v986
      %v1163 = vpack.c.b16 %v995, %v987
      %v1164 = vpack.c.b16 %v996, %v988
      %v1165 = vpack.c.b16 %v997, %v989
      %v1166 = vpack.c.b16 %v998, %v990
      %v1167 = vpack.c.b16 %v999, %v991
      %v1168 = vpack.c.b16 %v1008, %v1000
      %v1169 = vpack.c.b16 %v1009, %v1001
      %v1170 = vpack.c.b16 %v1010, %v1002
      %v1171 = vpack.c.b16 %v1011, %v1003
      %v1172 = vpack.c.b16 %v1012, %v1004
      %v1173 = vpack.c.b16 %v1013, %v1005
      %v1174 = vpack.c.b16 %v1014, %v1006
      %v1175 = vpack.c.b16 %v1015, %v1007
      %v1176 = vpack.c.b16 %v1024, %v1016
      %v1177 = vpack.c.b16 %v1025, %v1017
      %v1178 = vpack.c.b16 %v1026, %v1018
      %v1179 = vpack.c.b16 %v1027, %v1019
      %v1180 = vpack.c.b16 %v1028, %v1020
      %v1181 = vpack.c.b16 %v1029, %v1021
      %v1182 = vpack.c.b16 %v1030, %v1022
      %v1183 = vpack.c.b16 %v1031, %v1023
      %v1184 = vpack.c.b16 %v1040, %v1032
      %v1185 = vpack.c.b16 %v1041, %v1033
      %v1186 = vpack.c.b16 %v1042, %v1034
      %v1187 = vpack.c.b16 %v1043, %v1035
      %v1188 = vpack.c.b16 %v1044, %v1036
      %v1189 = vpack.c.b16 %v1045, %v1037
      %v1190 = vpack.c.b16 %v1046, %v1038
      %v1191 = vpack.c.b16 %v1047, %v1039
      %v1192 = vpack.c.b16 %v1056, %v1048
      %v1193 = vpack.c.b16 %v1057, %v1049
      %v1194 = vpack.c.b16 %v1058, %v1050
      %v1195 = vpack.c.b16 %v1059, %v1051
      %v1196 = vpack.c.b16 %v1060, %v1052
      %v1197 = vpack.c.b16 %v1061, %v1053
      %v1198 = vpack.c.b16 %v1062, %v1054
      %v1199 = vpack.c.b16 %v1063, %v1055
      %v1200 = vpack.c.b16 %v1072, %v1064
      %v1201 = vpack.c.b16 %v1073, %v1065
      %v1202 = vpack.c.b16 %v1074, %v1066
      %v1203 = vpack.c.b16 %v1075, %v1067
      %v1204 = vpack.c.b16 %v1076, %v1068
      %v1205 = vpack.c.b16 %v1077, %v1069
      %v1206 = vpack.c.b16 %v1078, %v1070
      %v1207 = vpack.c.b16 %v1079, %v1071
      %1336 = vmatpush.bf16.msra.mxu0 %v1136
      %1337 = vmatpush.bf16.msra.mxu0 %v1128
      %1338 = vmatpush.bf16.msra.mxu0 %v1120
      %1339 = vmatpush.bf16.msra.mxu0 %v1112
      %1340 = vmatpush.bf16.msra.mxu0 %v1104
      %1341 = vmatpush.bf16.msra.mxu0 %v1096
      %1342 = vmatpush.bf16.msra.mxu0 %v1088
      %1343 = vmatpush.bf16.msra.mxu0 %v1080
      %1344 = vmatmul.bf16.gmra.mxu0 %v694
      %v1345 = vpop.f32.mrf.mxu0
      %v1346 = vadd.f32 0.0, %v1345
      %v1347 = vpop.f32.mrf.mxu0
      %1348 = vdwg.mxu0
      %1349 = vmatpush.bf16.msra.mxu0 %v1200
      %1350 = vmatpush.bf16.msra.mxu0 %v1192
      %1351 = vmatpush.bf16.msra.mxu0 %v1184
      %1352 = vmatpush.bf16.msra.mxu0 %v1176
      %1353 = vmatpush.bf16.msra.mxu0 %v1168
      %1354 = vmatpush.bf16.msra.mxu0 %v1160
      %1355 = vmatpush.bf16.msra.mxu0 %v1152
      %1356 = vmatpush.bf16.msra.mxu0 %v1144
      %1357 = vmatmul.bf16.gmra.mxu0 %v695
      %v1358 = vpop.f32.mrf.mxu0
      %v1359 = vadd.f32 %v1346, %v1358
      %v1360 = vpop.f32.mrf.mxu0
      %1361 = vdwg.mxu0
      %1362 = vmatpush.bf16.msra.mxu0 %v1137
      %1363 = vmatpush.bf16.msra.mxu0 %v1129
      %1364 = vmatpush.bf16.msra.mxu0 %v1121
      %1365 = vmatpush.bf16.msra.mxu0 %v1113
      %1366 = vmatpush.bf16.msra.mxu0 %v1105
      %1367 = vmatpush.bf16.msra.mxu0 %v1097
      %1368 = vmatpush.bf16.msra.mxu0 %v1089
      %1369 = vmatpush.bf16.msra.mxu0 %v1081
      %1370 = vmatmul.bf16.gmra.mxu0 %v694
      %v1371 = vpop.f32.mrf.mxu0
      %v1372 = vadd.f32 0.0, %v1371
      %v1373 = vpop.f32.mrf.mxu0
      %1374 = vdwg.mxu0
      %1375 = vmatpush.bf16.msra.mxu0 %v1201
      %1376 = vmatpush.bf16.msra.mxu0 %v1193
      %1377 = vmatpush.bf16.msra.mxu0 %v1185
      %1378 = vmatpush.bf16.msra.mxu0 %v1177
      %1379 = vmatpush.bf16.msra.mxu0 %v1169
      %1380 = vmatpush.bf16.msra.mxu0 %v1161
      %1381 = vmatpush.bf16.msra.mxu0 %v1153
      %1382 = vmatpush.bf16.msra.mxu0 %v1145
      %1383 = vmatmul.bf16.gmra.mxu0 %v695
      %v1384 = vpop.f32.mrf.mxu0
      %v1385 = vadd.f32 %v1372, %v1384
      %v1386 = vpop.f32.mrf.mxu0
      %1387 = vdwg.mxu0
      %1388 = vmatpush.bf16.msra.mxu0 %v1138
      %1389 = vmatpush.bf16.msra.mxu0 %v1130
      %1390 = vmatpush.bf16.msra.mxu0 %v1122
      %1391 = vmatpush.bf16.msra.mxu0 %v1114
      %1392 = vmatpush.bf16.msra.mxu0 %v1106
      %1393 = vmatpush.bf16.msra.mxu0 %v1098
      %1394 = vmatpush.bf16.msra.mxu0 %v1090
      %1395 = vmatpush.bf16.msra.mxu0 %v1082
      %1396 = vmatmul.bf16.gmra.mxu0 %v694
      %v1397 = vpop.f32.mrf.mxu0
      %v1398 = vadd.f32 0.0, %v1397
      %v1399 = vpop.f32.mrf.mxu0
      %1400 = vdwg.mxu0
      %1401 = vmatpush.bf16.msra.mxu0 %v1202
      %1402 = vmatpush.bf16.msra.mxu0 %v1194
      %1403 = vmatpush.bf16.msra.mxu0 %v1186
      %1404 = vmatpush.bf16.msra.mxu0 %v1178
      %1405 = vmatpush.bf16.msra.mxu0 %v1170
      %1406 = vmatpush.bf16.msra.mxu0 %v1162
      %1407 = vmatpush.bf16.msra.mxu0 %v1154
      %1408 = vmatpush.bf16.msra.mxu0 %v1146
      %1409 = vmatmul.bf16.gmra.mxu0 %v695
      %v1410 = vpop.f32.mrf.mxu0
      %v1411 = vadd.f32 %v1398, %v1410
      %v1412 = vpop.f32.mrf.mxu0
      %1413 = vdwg.mxu0
      %1414 = vmatpush.bf16.msra.mxu0 %v1139
      %1415 = vmatpush.bf16.msra.mxu0 %v1131
      %1416 = vmatpush.bf16.msra.mxu0 %v1123
      %1417 = vmatpush.bf16.msra.mxu0 %v1115
      %1418 = vmatpush.bf16.msra.mxu0 %v1107
      %1419 = vmatpush.bf16.msra.mxu0 %v1099
      %1420 = vmatpush.bf16.msra.mxu0 %v1091
      %1421 = vmatpush.bf16.msra.mxu0 %v1083
      %1422 = vmatmul.bf16.gmra.mxu0 %v694
      %v1423 = vpop.f32.mrf.mxu0
      %v1424 = vadd.f32 0.0, %v1423
      %v1425 = vpop.f32.mrf.mxu0
      %1426 = vdwg.mxu0
      %1427 = vmatpush.bf16.msra.mxu0 %v1203
      %1428 = vmatpush.bf16.msra.mxu0 %v1195
      %1429 = vmatpush.bf16.msra.mxu0 %v1187
      %1430 = vmatpush.bf16.msra.mxu0 %v1179
      %1431 = vmatpush.bf16.msra.mxu0 %v1171
      %1432 = vmatpush.bf16.msra.mxu0 %v1163
      %1433 = vmatpush.bf16.msra.mxu0 %v1155
      %1434 = vmatpush.bf16.msra.mxu0 %v1147
      %1435 = vmatmul.bf16.gmra.mxu0 %v695
      %v1436 = vpop.f32.mrf.mxu0
      %v1437 = vadd.f32 %v1424, %v1436
      %v1438 = vpop.f32.mrf.mxu0
      %1439 = vdwg.mxu0
      %1440 = vmatpush.bf16.msra.mxu0 %v1140
      %1441 = vmatpush.bf16.msra.mxu0 %v1132
      %1442 = vmatpush.bf16.msra.mxu0 %v1124
      %1443 = vmatpush.bf16.msra.mxu0 %v1116
      %1444 = vmatpush.bf16.msra.mxu0 %v1108
      %1445 = vmatpush.bf16.msra.mxu0 %v1100
      %1446 = vmatpush.bf16.msra.mxu0 %v1092
      %1447 = vmatpush.bf16.msra.mxu0 %v1084
      %1448 = vmatmul.bf16.gmra.mxu0 %v694
      %v1449 = vpop.f32.mrf.mxu0
      %v1450 = vadd.f32 0.0, %v1449
      %v1451 = vpop.f32.mrf.mxu0
      %1452 = vdwg.mxu0
      %1453 = vmatpush.bf16.msra.mxu0 %v1204
      %1454 = vmatpush.bf16.msra.mxu0 %v1196
      %1455 = vmatpush.bf16.msra.mxu0 %v1188
      %1456 = vmatpush.bf16.msra.mxu0 %v1180
      %1457 = vmatpush.bf16.msra.mxu0 %v1172
      %1458 = vmatpush.bf16.msra.mxu0 %v1164
      %1459 = vmatpush.bf16.msra.mxu0 %v1156
      %1460 = vmatpush.bf16.msra.mxu0 %v1148
      %1461 = vmatmul.bf16.gmra.mxu0 %v695
      %v1462 = vpop.f32.mrf.mxu0
      %v1463 = vadd.f32 %v1450, %v1462
      %v1464 = vpop.f32.mrf.mxu0
      %1465 = vdwg.mxu0
      %1466 = vmatpush.bf16.msra.mxu0 %v1141
      %1467 = vmatpush.bf16.msra.mxu0 %v1133
      %1468 = vmatpush.bf16.msra.mxu0 %v1125
      %1469 = vmatpush.bf16.msra.mxu0 %v1117
      %1470 = vmatpush.bf16.msra.mxu0 %v1109
      %1471 = vmatpush.bf16.msra.mxu0 %v1101
      %1472 = vmatpush.bf16.msra.mxu0 %v1093
      %1473 = vmatpush.bf16.msra.mxu0 %v1085
      %1474 = vmatmul.bf16.gmra.mxu0 %v694
      %v1475 = vpop.f32.mrf.mxu0
      %v1476 = vadd.f32 0.0, %v1475
      %v1477 = vpop.f32.mrf.mxu0
      %1478 = vdwg.mxu0
      %1479 = vmatpush.bf16.msra.mxu0 %v1205
      %1480 = vmatpush.bf16.msra.mxu0 %v1197
      %1481 = vmatpush.bf16.msra.mxu0 %v1189
      %1482 = vmatpush.bf16.msra.mxu0 %v1181
      %1483 = vmatpush.bf16.msra.mxu0 %v1173
      %1484 = vmatpush.bf16.msra.mxu0 %v1165
      %1485 = vmatpush.bf16.msra.mxu0 %v1157
      %1486 = vmatpush.bf16.msra.mxu0 %v1149
      %1487 = vmatmul.bf16.gmra.mxu0 %v695
      %v1488 = vpop.f32.mrf.mxu0
      %v1489 = vadd.f32 %v1476, %v1488
      %v1490 = vpop.f32.mrf.mxu0
      %1491 = vdwg.mxu0
      %1492 = vmatpush.bf16.msra.mxu0 %v1142
      %1493 = vmatpush.bf16.msra.mxu0 %v1134
      %1494 = vmatpush.bf16.msra.mxu0 %v1126
      %1495 = vmatpush.bf16.msra.mxu0 %v1118
      %1496 = vmatpush.bf16.msra.mxu0 %v1110
      %1497 = vmatpush.bf16.msra.mxu0 %v1102
      %1498 = vmatpush.bf16.msra.mxu0 %v1094
      %1499 = vmatpush.bf16.msra.mxu0 %v1086
      %1500 = vmatmul.bf16.gmra.mxu0 %v694
      %v1501 = vpop.f32.mrf.mxu0
      %v1502 = vadd.f32 0.0, %v1501
      %v1503 = vpop.f32.mrf.mxu0
      %1504 = vdwg.mxu0
      %1505 = vmatpush.bf16.msra.mxu0 %v1206
      %1506 = vmatpush.bf16.msra.mxu0 %v1198
      %1507 = vmatpush.bf16.msra.mxu0 %v1190
      %1508 = vmatpush.bf16.msra.mxu0 %v1182
      %1509 = vmatpush.bf16.msra.mxu0 %v1174
      %1510 = vmatpush.bf16.msra.mxu0 %v1166
      %1511 = vmatpush.bf16.msra.mxu0 %v1158
      %1512 = vmatpush.bf16.msra.mxu0 %v1150
      %1513 = vmatmul.bf16.gmra.mxu0 %v695
      %v1514 = vpop.f32.mrf.mxu0
      %v1515 = vadd.f32 %v1502, %v1514
      %v1516 = vpop.f32.mrf.mxu0
      %1517 = vdwg.mxu0
      %1518 = vmatpush.bf16.msra.mxu0 %v1143
      %1519 = vmatpush.bf16.msra.mxu0 %v1135
      %1520 = vmatpush.bf16.msra.mxu0 %v1127
      %1521 = vmatpush.bf16.msra.mxu0 %v1119
      %1522 = vmatpush.bf16.msra.mxu0 %v1111
      %1523 = vmatpush.bf16.msra.mxu0 %v1103
      %1524 = vmatpush.bf16.msra.mxu0 %v1095
      %1525 = vmatpush.bf16.msra.mxu0 %v1087
      %1526 = vmatmul.bf16.gmra.mxu0 %v694
      %v1527 = vpop.f32.mrf.mxu0
      %v1528 = vadd.f32 0.0, %v1527
      %v1529 = vpop.f32.mrf.mxu0
      %1530 = vdwg.mxu0
      %1531 = vmatpush.bf16.msra.mxu0 %v1207
      %1532 = vmatpush.bf16.msra.mxu0 %v1199
      %1533 = vmatpush.bf16.msra.mxu0 %v1191
      %1534 = vmatpush.bf16.msra.mxu0 %v1183
      %1535 = vmatpush.bf16.msra.mxu0 %v1175
      %1536 = vmatpush.bf16.msra.mxu0 %v1167
      %1537 = vmatpush.bf16.msra.mxu0 %v1159
      %1538 = vmatpush.bf16.msra.mxu0 %v1151
      %1539 = vmatmul.bf16.gmra.mxu0 %v695
      %v1540 = vpop.f32.mrf.mxu0
      %v1541 = vadd.f32 %v1528, %v1540
      %v1542 = vpop.f32.mrf.mxu0
      %1543 = vdwg.mxu0
      %v1544 = vadd.f32 %v681, %v1359
      %v1545 = vadd.f32 %v682, %v1385
      %v1546 = vadd.f32 %v683, %v1411
      %v1547 = vadd.f32 %v684, %v1437
      %v1548 = vadd.f32 %v690, %v1463
      %v1549 = vadd.f32 %v691, %v1489
      %v1550 = vadd.f32 %v692, %v1515
      %v1551 = vadd.f32 %v693, %v1541
      %v1552 = vxor.u32 %v1544, 2147483648
      %v1553 = vxor.u32 %v1545, 2147483648
      %v1554 = vxor.u32 %v1546, 2147483648
      %v1555 = vmul.f32 %v1552, 1.442695
      %v1556 = vpow.pop %v1555
      %v1557 = vmul.f32 %v1553, 1.442695
      %v1558 = vpow.pop %v1557
      %v1559 = vmul.f32 %v1554, 1.442695
      %v1560 = vpow.pop %v1559
      %v1561 = vadd.f32 %v1556, 1.0
      %v1562 = vadd.f32 %v1558, 1.0
      %v1563 = vadd.f32 %v1560, 1.0
      %v1564 = vrcp.pop %v1561
      %v1565 = vmul.f32 %v1561, %v1564
      %v1566 = vsub.f32 1.0, %v1565
      %v1567 = vmul.f32 %v1564, %v1566
      %v1568 = vadd.f32 %v1564, %v1567
      %vm1569 = vweird.f32 %v1561
      %vm1570 = vweird.f32 %v1564
      %vm1571 = vmor %vm1569, %vm1570
      %v1572 = vsel %vm1571, %v1564, %v1568
      %v1573 = vand.u32 2147483647, %v1561
      %vm1574 = vcmp.eq.f32.partialorder %v1573, 8.507059e+37
      %v1575 = vand.u32 %v1561, 2147483648
      %v1576 = vor.u32 1.1754944e-38, %v1575
      %v1577 = vsel %vm1574, %v1576, %v1572
      %v1578 = vmul.f32 1.0, %v1577
      %v1579 = vrcp.pop %v1562
      %v1580 = vmul.f32 %v1562, %v1579
      %v1581 = vsub.f32 1.0, %v1580
      %v1582 = vmul.f32 %v1579, %v1581
      %v1583 = vadd.f32 %v1579, %v1582
      %vm1584 = vweird.f32 %v1562
      %vm1585 = vweird.f32 %v1579
      %vm1586 = vmor %vm1584, %vm1585
      %v1587 = vsel %vm1586, %v1579, %v1583
      %v1588 = vand.u32 2147483647, %v1562
      %vm1589 = vcmp.eq.f32.partialorder %v1588, 8.507059e+37
      %v1590 = vand.u32 %v1562, 2147483648
      %v1591 = vor.u32 1.1754944e-38, %v1590
      %v1592 = vsel %vm1589, %v1591, %v1587
      %v1593 = vmul.f32 1.0, %v1592
      %v1594 = vrcp.pop %v1563
      %v1595 = vmul.f32 %v1563, %v1594
      %v1596 = vsub.f32 1.0, %v1595
      %v1597 = vmul.f32 %v1594, %v1596
      %v1598 = vadd.f32 %v1594, %v1597
      %vm1599 = vweird.f32 %v1563
      %vm1600 = vweird.f32 %v1594
      %vm1601 = vmor %vm1599, %vm1600
      %v1602 = vsel %vm1601, %v1594, %v1598
      %v1603 = vand.u32 2147483647, %v1563
      %vm1604 = vcmp.eq.f32.partialorder %v1603, 8.507059e+37
      %v1605 = vand.u32 %v1563, 2147483648
      %v1606 = vor.u32 1.1754944e-38, %v1605
      %v1607 = vsel %vm1604, %v1606, %v1602
      %v1608 = vmul.f32 1.0, %v1607
      %v1609 = vtanh.pop %v1547
      %v1610 = vmul.f32 %v1593, %v659
      %v1611 = vmul.f32 %v1578, %v1609
      %v1612 = vadd.f32 %v1610, %v1611
      %v1613 = vtanh.pop %v1612
      %v1614 = vmul.f32 %v1608, %v1613
      %v1615 = vxor.u32 %v1548, 2147483648
      %v1616 = vxor.u32 %v1549, 2147483648
      %v1617 = vxor.u32 %v1550, 2147483648
      %v1618 = vmul.f32 %v1615, 1.442695
      %v1619 = vpow.pop %v1618
      %v1620 = vmul.f32 %v1616, 1.442695
      %v1621 = vpow.pop %v1620
      %v1622 = vmul.f32 %v1617, 1.442695
      %v1623 = vpow.pop %v1622
      %v1624 = vadd.f32 %v1619, 1.0
      %v1625 = vadd.f32 %v1621, 1.0
      %v1626 = vadd.f32 %v1623, 1.0
      %v1627 = vrcp.pop %v1624
      %v1628 = vmul.f32 %v1624, %v1627
      %v1629 = vsub.f32 1.0, %v1628
      %v1630 = vmul.f32 %v1627, %v1629
      %v1631 = vadd.f32 %v1627, %v1630
      %vm1632 = vweird.f32 %v1624
      %vm1633 = vweird.f32 %v1627
      %vm1634 = vmor %vm1632, %vm1633
      %v1635 = vsel %vm1634, %v1627, %v1631
      %v1636 = vand.u32 2147483647, %v1624
      %vm1637 = vcmp.eq.f32.partialorder %v1636, 8.507059e+37
      %v1638 = vand.u32 %v1624, 2147483648
      %v1639 = vor.u32 1.1754944e-38, %v1638
      %v1640 = vsel %vm1637, %v1639, %v1635
      %v1641 = vmul.f32 1.0, %v1640
      %v1642 = vrcp.pop %v1625
      %v1643 = vmul.f32 %v1625, %v1642
      %v1644 = vsub.f32 1.0, %v1643
      %v1645 = vmul.f32 %v1642, %v1644
      %v1646 = vadd.f32 %v1642, %v1645
      %vm1647 = vweird.f32 %v1625
      %vm1648 = vweird.f32 %v1642
      %vm1649 = vmor %vm1647, %vm1648
      %v1650 = vsel %vm1649, %v1642, %v1646
      %v1651 = vand.u32 2147483647, %v1625
      %vm1652 = vcmp.eq.f32.partialorder %v1651, 8.507059e+37
      %v1653 = vand.u32 %v1625, 2147483648
      %v1654 = vor.u32 1.1754944e-38, %v1653
      %v1655 = vsel %vm1652, %v1654, %v1650
      %v1656 = vmul.f32 1.0, %v1655
      %v1657 = vrcp.pop %v1626
      %v1658 = vmul.f32 %v1626, %v1657
      %v1659 = vsub.f32 1.0, %v1658
      %v1660 = vmul.f32 %v1657, %v1659
      %v1661 = vadd.f32 %v1657, %v1660
      %vm1662 = vweird.f32 %v1626
      %vm1663 = vweird.f32 %v1657
      %vm1664 = vmor %vm1662, %vm1663
      %v1665 = vsel %vm1664, %v1657, %v1661
      %v1666 = vand.u32 2147483647, %v1626
      %vm1667 = vcmp.eq.f32.partialorder %v1666, 8.507059e+37
      %v1668 = vand.u32 %v1626, 2147483648
      %v1669 = vor.u32 1.1754944e-38, %v1668
      %v1670 = vsel %vm1667, %v1669, %v1665
      %v1671 = vmul.f32 1.0, %v1670
      %v1672 = vtanh.pop %v1551
      %v1673 = vmul.f32 %v1656, %v673
      %v1674 = vmul.f32 %v1641, %v1672
      %v1675 = vadd.f32 %v1673, %v1674
      %v1676 = vtanh.pop %v1675
      %v1677 = vmul.f32 %v1671, %v1676
      %s1678 = smul.u32 %s653, 2
      %s1679 = smul.addr %s1678, 8
      %s1680 = scalar_lea.vmem [#allocation11], %s1679
      %1681 = vst [vmem:[%s1680] sm:$0xff] %v1614
      %s1682 = smul.u32 %s663, 2
      %s1683 = smul.addr %s1682, 8
      %s1684 = scalar_lea.vmem [#allocation11], %s1683
      %1685 = vst [vmem:[%s1684 + $0x8] sm:$0xff] %v1677
    $region38: #{tpu_custom_call.1} parent=1 // loop_footer
      %s655 = sadd.s32 %s653, 1
    $region39: #{tpu_custom_call.1} parent=1 // loop_footer_branch
      %652 = sbr.rel target = $region35
    $region40: #{tpu_custom_call.1} parent=1 // loop_exit
      _
    // Predicated region
    $region41: #{tpu_custom_call.1} parent=1 // pred_check
      _
    $region42: #{tpu_custom_call.1} parent=1 // pred_check_branch
      %1687 = sbr.rel (0) target = $region44
    $region43: #{tpu_custom_call.1} parent=1 // pred_region
      %1689 = vsyncadd [#allocation7], 0
      %s1690 = sshll.u32 [#allocation11], 4
      %s1691 = int_to_ptr.vmem [resolvable:$true] %s1690
      %s1692 = sshll.u32 %s6, 4
      %s1693 = int_to_ptr.hbm [resolvable:$true] %s1692
      %1698 = dma.vmem_to_hbm [thread:$0]  %s1691, 2048, %s1693, [#allocation7], 256, 256, 16
    $region44: #{tpu_custom_call.1} parent=1 // pred_fallthru
      _
    // Predicated region
    $region45: #{tpu_custom_call.1} parent=1 // pred_check
      _
    $region46: #{tpu_custom_call.1} parent=1 // pred_check_branch
      %1700 = sbr.rel (0) target = $region48
    $region47: #{tpu_custom_call.1} parent=1 // pred_region
      %1702 = dma.done [#allocation7], 2048
    $region48: #{tpu_custom_call.1} parent=1 // pred_fallthru
      _
    %1703 = vsyncpa [#allocation6], 1
    %1704 = vsyncpa [#allocation9], 1
    %1705 = vsyncpa [#allocation7], 1

// kernel: tpu_custom_call.1
$region0: #{tpu_custom_call.1}
  #allocation0 [shape = 'u32[]', space=smem, size = 0x4, offset = 0x4, fixed_abs, tag = 'smem constant byte address 0x4 - core index']
  #allocation1 [shape = 'u32[72,128]{1,0:T(1,128)}', space=vmem, size = 0x9000, scoped, tag = 'internal scratch']
  #allocation2 [shape = 'f32[64,1024]{1,0:T(8,128)}', space=vmem, size = 0x40000, scoped, tag = 'scratch operand']
  #allocation3 [shape = 's32[1]{0}', space=sflag, size = 0x4, scoped, tag = 'scoped memory for tpu_custom_call.1']
  #allocation4 [shape = 's32[1]{0:T(128)S(6)}', space=smem, size = 0x200, scoped, tag = 'prefetched SMEM operand 0']
  %s0 = inlined_call_operand.<no memory space> [shape: s32[1], index: 0, kind: input, shape index: {}]
  %s1 = inlined_call_operand.vmem [shape: s32[8,1], index: 1, kind: input, shape index: {}]
  %s2 = inlined_call_operand.hbm [shape: bf16[8,8,32], index: 2, kind: input, shape index: {}]
  %s3 = inlined_call_operand.hbm [shape: bf16[32,1024], index: 3, kind: input, shape index: {}]
  %s4 = inlined_call_operand.vmem [shape: f32[1,1024], index: 4, kind: input, shape index: {}]
  %s5 = inlined_call_operand.hbm [shape: bf16[256,1024], index: 5, kind: input, shape index: {}]
  %s6 = inlined_call_operand.hbm [shape: f32[8,8,256], index: 6, kind: output, shape index: {}]
  %s7 = sld [smem:[#allocation0]]
  $region49: #{tpu_custom_call.1} parent=0
    _
  %s9 = ssub.s32 1, %s7
  %s10 = scalar_select 0, %s9, %s7
  %11 = sst [smem:[#allocation4]] %s0
  $region1: #{tpu_custom_call.1} parent=0
    #allocation5 [shape = 'u8[16384]{0}', space=vmem, size = 0x4000, scoped, tag = 'input window, operand 2, single buffered']
    #allocation6 [shape = 's32[1]{0}', space=sflag, size = 0x4, scoped, tag = 'scoped memory for tpu_custom_call.1']
    #allocation7 [shape = 's32[1]{0}', space=sflag, size = 0x4, scoped, tag = 'scoped memory for tpu_custom_call.1']
    #allocation8 [shape = 'u8[65536]{0}', space=vmem, size = 0x10000, scoped, tag = 'input window, operand 3, single buffered']
    #allocation9 [shape = 's32[1]{0}', space=sflag, size = 0x4, scoped, tag = 'scoped memory for tpu_custom_call.1']
    #allocation10 [shape = 'u8[524288]{0}', space=vmem, size = 0x80000, scoped, tag = 'input window, operand 5, single buffered']
    #allocation11 [shape = 'u8[65536]{0}', space=vmem, size = 0x10000, scoped, tag = 'output window, operand 0, single buffered']
    %12 = vsyncpa [#allocation6], 0
    %13 = vsyncpa [#allocation9], 0
    %14 = vsyncpa [#allocation7], 0
    // Predicated region
    $region2: #{tpu_custom_call.1} parent=1 // pred_check
      _
    $region3: #{tpu_custom_call.1} parent=1 // pred_check_branch
      %16 = sbr.rel (0) target = $region5
    $region4: #{tpu_custom_call.1} parent=1 // pred_region
      _
    $region5: #{tpu_custom_call.1} parent=1 // pred_fallthru
      _
    // Predicated region
    $region6: #{tpu_custom_call.1} parent=1 // pred_check
      _
    $region7: #{tpu_custom_call.1} parent=1 // pred_check_branch
      %18 = sbr.rel (0) target = $region9
    $region8: #{tpu_custom_call.1} parent=1 // pred_region
      %20 = vsyncadd [#allocation6], 0
      %s21 = sshll.u32 %s2, 4
      %s22 = int_to_ptr.hbm [resolvable:$true] %s21
      %s23 = sshll.u32 [#allocation5], 4
      %s24 = int_to_ptr.vmem [resolvable:$true] %s23
      %29 = dma.hbm_to_vmem [thread:$0]  %s22, 512, %s24, [#allocation6], 64, 64, 4
    $region9: #{tpu_custom_call.1} parent=1 // pred_fallthru
      _
    // Predicated region
    $region10: #{tpu_custom_call.1} parent=1 // pred_check
      _
    $region11: #{tpu_custom_call.1} parent=1 // pred_check_branch
      %31 = sbr.rel (0) target = $region13
    $region12: #{tpu_custom_call.1} parent=1 // pred_region
      %33 = vsyncadd [#allocation9], 0
      %s34 = sshll.u32 %s3, 4
      %s35 = int_to_ptr.hbm [resolvable:$true] %s34
      %s36 = sshll.u32 [#allocation8], 4
      %s37 = int_to_ptr.vmem [resolvable:$true] %s36
      %42 = dma.hbm_to_vmem [thread:$0]  %s35, 2048, %s37, [#allocation9], 512, 512, 32
    $region13: #{tpu_custom_call.1} parent=1 // pred_fallthru
      _
    // Predicated region
    $region14: #{tpu_custom_call.1} parent=1 // pred_check
      _
    $region15: #{tpu_custom_call.1} parent=1 // pred_check_branch
      %44 = sbr.rel (0) target = $region17
    $region16: #{tpu_custom_call.1} parent=1 // pred_region
      _
    $region17: #{tpu_custom_call.1} parent=1 // pred_fallthru
      _
    // Predicated region
    $region18: #{tpu_custom_call.1} parent=1 // pred_check
      _
    $region19: #{tpu_custom_call.1} parent=1 // pred_check_branch
      %46 = sbr.rel (0) target = $region21
    $region20: #{tpu_custom_call.1} parent=1 // pred_region
      %48 = vsyncadd [#allocation9], 0
      %s49 = sshll.u32 %s5, 4
      %s50 = int_to_ptr.hbm [resolvable:$true] %s49
      %s51 = sshll.u32 [#allocation10], 4
      %s52 = int_to_ptr.vmem [resolvable:$true] %s51
      %57 = dma.hbm_to_vmem [thread:$0]  %s50, 16384, %s52, [#allocation9], 512, 512, 32
    $region21: #{tpu_custom_call.1} parent=1 // pred_fallthru
      _
    // Predicated region
    $region22: #{tpu_custom_call.1} parent=1 // pred_check
      _
    $region23: #{tpu_custom_call.1} parent=1 // pred_check_branch
      %59 = sbr.rel (0) target = $region25
    $region24: #{tpu_custom_call.1} parent=1 // pred_region
      %61 = dma.done [#allocation6], 512
    $region25: #{tpu_custom_call.1} parent=1 // pred_fallthru
      _
    // Predicated region
    $region26: #{tpu_custom_call.1} parent=1 // pred_check
      _
    $region27: #{tpu_custom_call.1} parent=1 // pred_check_branch
      %63 = sbr.rel (0) target = $region29
    $region28: #{tpu_custom_call.1} parent=1 // pred_region
      %65 = dma.done [#allocation9], 2048
    $region29: #{tpu_custom_call.1} parent=1 // pred_fallthru
      _
    // Predicated region
    $region30: #{tpu_custom_call.1} parent=1 // pred_check
      _
    $region31: #{tpu_custom_call.1} parent=1 // pred_check_branch
      %67 = sbr.rel (0) target = $region33
    $region32: #{tpu_custom_call.1} parent=1 // pred_region
      %69 = dma.done [#allocation9], 16384
    $region33: #{tpu_custom_call.1} parent=1 // pred_fallthru
      _
    %v71 = vld [vmem:[#allocation5] sm:$0xf]
    %v72 = vld [vmem:[#allocation5 + $0x4] sm:$0xf]
    %v73 = vld [vmem:[#allocation5 + $0x8] sm:$0xf]
    %v74 = vld [vmem:[#allocation5 + $0xc] sm:$0xf]
    %v75 = vld [vmem:[#allocation5 + $0x10] sm:$0xf]
    %v76 = vld [vmem:[#allocation5 + $0x14] sm:$0xf]
    %v77 = vld [vmem:[#allocation5 + $0x18] sm:$0xf]
    %v78 = vld [vmem:[#allocation5 + $0x1c] sm:$0xf]
    %v79 = vld [vmem:[#allocation8] sm:$0xff]
    %v80 = vld [vmem:[#allocation8 + $0x8] sm:$0xff]
    %v81 = vld [vmem:[#allocation8 + $0x10] sm:$0xff]
    %v82 = vld [vmem:[#allocation8 + $0x18] sm:$0xff]
    %v83 = vld [vmem:[#allocation8 + $0x20] sm:$0xff]
    %v84 = vld [vmem:[#allocation8 + $0x28] sm:$0xff]
    %v85 = vld [vmem:[#allocation8 + $0x30] sm:$0xff]
    %v86 = vld [vmem:[#allocation8 + $0x38] sm:$0xff]
    %v87 = vld [vmem:[#allocation8 + $0x40] sm:$0xff]
    %v88 = vld [vmem:[#allocation8 + $0x48] sm:$0xff]
    %v89 = vld [vmem:[#allocation8 + $0x50] sm:$0xff]
    %v90 = vld [vmem:[#allocation8 + $0x58] sm:$0xff]
    %v91 = vld [vmem:[#allocation8 + $0x60] sm:$0xff]
    %v92 = vld [vmem:[#allocation8 + $0x68] sm:$0xff]
    %v93 = vld [vmem:[#allocation8 + $0x70] sm:$0xff]
    %v94 = vld [vmem:[#allocation8 + $0x78] sm:$0xff]
    %v95 = vld [vmem:[%s4] sm:$0xff]
    %v97 = vperm.slane %v95, 0
    %v98 = vperm.slane %v95, 1
    %v99 = vperm.slane %v95, 2
    %v100 = vperm.slane %v95, 3
    %v101 = vperm.slane %v95, 4
    %v102 = vperm.slane %v95, 5
    %v103 = vperm.slane %v95, 6
    %v104 = vperm.slane %v95, 7
    %v121 = vunpack.c.l.b16 %v71
    %v122 = vunpack.c.l.b16 %v72
    %v123 = vunpack.c.l.b16 %v73
    %v124 = vunpack.c.l.b16 %v74
    %v125 = vunpack.c.l.b16 %v75
    %v126 = vunpack.c.l.b16 %v76
    %v127 = vunpack.c.l.b16 %v77
    %v128 = vunpack.c.l.b16 %v78
    %v129 = vpack.c.b16 %v122, %v121
    %v130 = vpack.c.b16 %v124, %v123
    %v131 = vpack.c.b16 %v126, %v125
    %v132 = vpack.c.b16 %v128, %v127
    %v149 = vunpack.c.l.b16 %v79
    %v150 = vunpack.c.h.b16 %v79
    %v151 = vunpack.c.l.b16 %v80
    %v152 = vunpack.c.h.b16 %v80
    %v153 = vunpack.c.l.b16 %v81
    %v154 = vunpack.c.h.b16 %v81
    %v155 = vunpack.c.l.b16 %v82
    %v156 = vunpack.c.h.b16 %v82
    %v157 = vunpack.c.l.b16 %v83
    %v158 = vunpack.c.h.b16 %v83
    %v159 = vunpack.c.l.b16 %v84
    %v160 = vunpack.c.h.b16 %v84
    %v161 = vunpack.c.l.b16 %v85
    %v162 = vunpack.c.h.b16 %v85
    %v163 = vunpack.c.l.b16 %v86
    %v164 = vunpack.c.h.b16 %v86
    %v165 = vunpack.c.l.b16 %v87
    %v166 = vunpack.c.h.b16 %v87
    %v167 = vunpack.c.l.b16 %v88
    %v168 = vunpack.c.h.b16 %v88
    %v169 = vunpack.c.l.b16 %v89
    %v170 = vunpack.c.h.b16 %v89
    %v171 = vunpack.c.l.b16 %v90
    %v172 = vunpack.c.h.b16 %v90
    %v173 = vunpack.c.l.b16 %v91
    %v174 = vunpack.c.h.b16 %v91
    %v175 = vunpack.c.l.b16 %v92
    %v176 = vunpack.c.h.b16 %v92
    %v177 = vunpack.c.l.b16 %v93
    %v178 = vunpack.c.h.b16 %v93
    %v179 = vunpack.c.l.b16 %v94
    %v180 = vunpack.c.h.b16 %v94
    %v181 = vpack.c.b16 %v157, %v149
    %v182 = vpack.c.b16 %v158, %v150
    %v183 = vpack.c.b16 %v159, %v151
    %v184 = vpack.c.b16 %v160, %v152
    %v185 = vpack.c.b16 %v161, %v153
    %v186 = vpack.c.b16 %v162, %v154
    %v187 = vpack.c.b16 %v163, %v155
    %v188 = vpack.c.b16 %v164, %v156
    %v189 = vpack.c.b16 %v173, %v165
    %v190 = vpack.c.b16 %v174, %v166
    %v191 = vpack.c.b16 %v175, %v167
    %v192 = vpack.c.b16 %v176, %v168
    %v193 = vpack.c.b16 %v177, %v169
    %v194 = vpack.c.b16 %v178, %v170
    %v195 = vpack.c.b16 %v179, %v171
    %v196 = vpack.c.b16 %v180, %v172
    %vm213 = vcmask 261120
    %v215 = vsel %vm213, %v129, 0
    %v218 = vsel %vm213, %v130, 0
    %v221 = vsel %vm213, %v131, 0
    %v224 = vsel %vm213, %v132, 0
    %226 = vmatpush.bf16.msra.mxu0 0
    %227 = vmatpush.bf16.msra.mxu0 0
    %228 = vmatpush.bf16.msra.mxu0 0
    %229 = vmatpush.bf16.msra.mxu0 0
    %230 = vmatpush.bf16.msra.mxu0 0
    %231 = vmatpush.bf16.msra.mxu0 0
    %232 = vmatpush.bf16.msra.mxu0 %v189
    %233 = vmatpush.bf16.msra.mxu0 %v181
    %234 = vmatmul.bf16.gmra.mxu0 %v215
    %v235 = vpop.f32.mrf.mxu0
    %v236 = vadd.f32 %v97, %v235
    %v237 = vpop.f32.mrf.mxu0
    %v238 = vadd.f32 %v97, %v237
    %239 = vmatmul.bf16.gmra.mxu0 %v218
    %v240 = vpop.f32.mrf.mxu0
    %v241 = vadd.f32 %v97, %v240
    %v242 = vpop.f32.mrf.mxu0
    %v243 = vadd.f32 %v97, %v242
    %244 = vmatmul.bf16.gmra.mxu0 %v221
    %v245 = vpop.f32.mrf.mxu0
    %v246 = vadd.f32 %v97, %v245
    %v247 = vpop.f32.mrf.mxu0
    %v248 = vadd.f32 %v97, %v247
    %249 = vmatmul.bf16.gmra.mxu0 %v224
    %v250 = vpop.f32.mrf.mxu0
    %v251 = vadd.f32 %v97, %v250
    %v252 = vpop.f32.mrf.mxu0
    %v253 = vadd.f32 %v97, %v252
    %254 = vdwg.mxu0
    %255 = vmatpush.bf16.msra.mxu0 0
    %256 = vmatpush.bf16.msra.mxu0 0
    %257 = vmatpush.bf16.msra.mxu0 0
    %258 = vmatpush.bf16.msra.mxu0 0
    %259 = vmatpush.bf16.msra.mxu0 0
    %260 = vmatpush.bf16.msra.mxu0 0
    %261 = vmatpush.bf16.msra.mxu0 %v190
    %262 = vmatpush.bf16.msra.mxu0 %v182
    %263 = vmatmul.bf16.gmra.mxu0 %v215
    %v264 = vpop.f32.mrf.mxu0
    %v265 = vadd.f32 %v98, %v264
    %v266 = vpop.f32.mrf.mxu0
    %v267 = vadd.f32 %v98, %v266
    %268 = vmatmul.bf16.gmra.mxu0 %v218
    %v269 = vpop.f32.mrf.mxu0
    %v270 = vadd.f32 %v98, %v269
    %v271 = vpop.f32.mrf.mxu0
    %v272 = vadd.f32 %v98, %v271
    %273 = vmatmul.bf16.gmra.mxu0 %v221
    %v274 = vpop.f32.mrf.mxu0
    %v275 = vadd.f32 %v98, %v274
    %v276 = vpop.f32.mrf.mxu0
    %v277 = vadd.f32 %v98, %v276
    %278 = vmatmul.bf16.gmra.mxu0 %v224
    %v279 = vpop.f32.mrf.mxu0
    %v280 = vadd.f32 %v98, %v279
    %v281 = vpop.f32.mrf.mxu0
    %v282 = vadd.f32 %v98, %v281
    %283 = vdwg.mxu0
    %284 = vmatpush.bf16.msra.mxu0 0
    %285 = vmatpush.bf16.msra.mxu0 0
    %286 = vmatpush.bf16.msra.mxu0 0
    %287 = vmatpush.bf16.msra.mxu0 0
    %288 = vmatpush.bf16.msra.mxu0 0
    %289 = vmatpush.bf16.msra.mxu0 0
    %290 = vmatpush.bf16.msra.mxu0 %v191
    %291 = vmatpush.bf16.msra.mxu0 %v183
    %292 = vmatmul.bf16.gmra.mxu0 %v215
    %v293 = vpop.f32.mrf.mxu0
    %v294 = vadd.f32 %v99, %v293
    %v295 = vpop.f32.mrf.mxu0
    %v296 = vadd.f32 %v99, %v295
    %297 = vmatmul.bf16.gmra.mxu0 %v218
    %v298 = vpop.f32.mrf.mxu0
    %v299 = vadd.f32 %v99, %v298
    %v300 = vpop.f32.mrf.mxu0
    %v301 = vadd.f32 %v99, %v300
    %302 = vmatmul.bf16.gmra.mxu0 %v221
    %v303 = vpop.f32.mrf.mxu0
    %v304 = vadd.f32 %v99, %v303
    %v305 = vpop.f32.mrf.mxu0
    %v306 = vadd.f32 %v99, %v305
    %307 = vmatmul.bf16.gmra.mxu0 %v224
    %v308 = vpop.f32.mrf.mxu0
    %v309 = vadd.f32 %v99, %v308
    %v310 = vpop.f32.mrf.mxu0
    %v311 = vadd.f32 %v99, %v310
    %312 = vdwg.mxu0
    %313 = vmatpush.bf16.msra.mxu0 0
    %314 = vmatpush.bf16.msra.mxu0 0
    %315 = vmatpush.bf16.msra.mxu0 0
    %316 = vmatpush.bf16.msra.mxu0 0
    %317 = vmatpush.bf16.msra.mxu0 0
    %318 = vmatpush.bf16.msra.mxu0 0
    %319 = vmatpush.bf16.msra.mxu0 %v192
    %320 = vmatpush.bf16.msra.mxu0 %v184
    %321 = vmatmul.bf16.gmra.mxu0 %v215
    %v322 = vpop.f32.mrf.mxu0
    %v323 = vadd.f32 %v100, %v322
    %v324 = vpop.f32.mrf.mxu0
    %v325 = vadd.f32 %v100, %v324
    %326 = vmatmul.bf16.gmra.mxu0 %v218
    %v327 = vpop.f32.mrf.mxu0
    %v328 = vadd.f32 %v100, %v327
    %v329 = vpop.f32.mrf.mxu0
    %v330 = vadd.f32 %v100, %v329
    %331 = vmatmul.bf16.gmra.mxu0 %v221
    %v332 = vpop.f32.mrf.mxu0
    %v333 = vadd.f32 %v100, %v332
    %v334 = vpop.f32.mrf.mxu0
    %v335 = vadd.f32 %v100, %v334
    %336 = vmatmul.bf16.gmra.mxu0 %v224
    %v337 = vpop.f32.mrf.mxu0
    %v338 = vadd.f32 %v100, %v337
    %v339 = vpop.f32.mrf.mxu0
    %v340 = vadd.f32 %v100, %v339
    %341 = vdwg.mxu0
    %342 = vmatpush.bf16.msra.mxu0 0
    %343 = vmatpush.bf16.msra.mxu0 0
    %344 = vmatpush.bf16.msra.mxu0 0
    %345 = vmatpush.bf16.msra.mxu0 0
    %346 = vmatpush.bf16.msra.mxu0 0
    %347 = vmatpush.bf16.msra.mxu0 0
    %348 = vmatpush.bf16.msra.mxu0 %v193
    %349 = vmatpush.bf16.msra.mxu0 %v185
    %350 = vmatmul.bf16.gmra.mxu0 %v215
    %v351 = vpop.f32.mrf.mxu0
    %v352 = vadd.f32 %v101, %v351
    %v353 = vpop.f32.mrf.mxu0
    %v354 = vadd.f32 %v101, %v353
    %355 = vmatmul.bf16.gmra.mxu0 %v218
    %v356 = vpop.f32.mrf.mxu0
    %v357 = vadd.f32 %v101, %v356
    %v358 = vpop.f32.mrf.mxu0
    %v359 = vadd.f32 %v101, %v358
    %360 = vmatmul.bf16.gmra.mxu0 %v221
    %v361 = vpop.f32.mrf.mxu0
    %v362 = vadd.f32 %v101, %v361
    %v363 = vpop.f32.mrf.mxu0
    %v364 = vadd.f32 %v101, %v363
    %365 = vmatmul.bf16.gmra.mxu0 %v224
    %v366 = vpop.f32.mrf.mxu0
    %v367 = vadd.f32 %v101, %v366
    %v368 = vpop.f32.mrf.mxu0
    %v369 = vadd.f32 %v101, %v368
    %370 = vdwg.mxu0
    %371 = vmatpush.bf16.msra.mxu0 0
    %372 = vmatpush.bf16.msra.mxu0 0
    %373 = vmatpush.bf16.msra.mxu0 0
    %374 = vmatpush.bf16.msra.mxu0 0
    %375 = vmatpush.bf16.msra.mxu0 0
    %376 = vmatpush.bf16.msra.mxu0 0
    %377 = vmatpush.bf16.msra.mxu0 %v194
    %378 = vmatpush.bf16.msra.mxu0 %v186
    %379 = vmatmul.bf16.gmra.mxu0 %v215
    %v380 = vpop.f32.mrf.mxu0
    %v381 = vadd.f32 %v102, %v380
    %v382 = vpop.f32.mrf.mxu0
    %v383 = vadd.f32 %v102, %v382
    %384 = vmatmul.bf16.gmra.mxu0 %v218
    %v385 = vpop.f32.mrf.mxu0
    %v386 = vadd.f32 %v102, %v385
    %v387 = vpop.f32.mrf.mxu0
    %v388 = vadd.f32 %v102, %v387
    %389 = vmatmul.bf16.gmra.mxu0 %v221
    %v390 = vpop.f32.mrf.mxu0
    %v391 = vadd.f32 %v102, %v390
    %v392 = vpop.f32.mrf.mxu0
    %v393 = vadd.f32 %v102, %v392
    %394 = vmatmul.bf16.gmra.mxu0 %v224
    %v395 = vpop.f32.mrf.mxu0
    %v396 = vadd.f32 %v102, %v395
    %v397 = vpop.f32.mrf.mxu0
    %v398 = vadd.f32 %v102, %v397
    %399 = vdwg.mxu0
    %400 = vmatpush.bf16.msra.mxu0 0
    %401 = vmatpush.bf16.msra.mxu0 0
    %402 = vmatpush.bf16.msra.mxu0 0
    %403 = vmatpush.bf16.msra.mxu0 0
    %404 = vmatpush.bf16.msra.mxu0 0
    %405 = vmatpush.bf16.msra.mxu0 0
    %406 = vmatpush.bf16.msra.mxu0 %v195
    %407 = vmatpush.bf16.msra.mxu0 %v187
    %408 = vmatmul.bf16.gmra.mxu0 %v215
    %v409 = vpop.f32.mrf.mxu0
    %v410 = vadd.f32 %v103, %v409
    %v411 = vpop.f32.mrf.mxu0
    %v412 = vadd.f32 %v103, %v411
    %413 = vmatmul.bf16.gmra.mxu0 %v218
    %v414 = vpop.f32.mrf.mxu0
    %v415 = vadd.f32 %v103, %v414
    %v416 = vpop.f32.mrf.mxu0
    %v417 = vadd.f32 %v103, %v416
    %418 = vmatmul.bf16.gmra.mxu0 %v221
    %v419 = vpop.f32.mrf.mxu0
    %v420 = vadd.f32 %v103, %v419
    %v421 = vpop.f32.mrf.mxu0
    %v422 = vadd.f32 %v103, %v421
    %423 = vmatmul.bf16.gmra.mxu0 %v224
    %v424 = vpop.f32.mrf.mxu0
    %v425 = vadd.f32 %v103, %v424
    %v426 = vpop.f32.mrf.mxu0
    %v427 = vadd.f32 %v103, %v426
    %428 = vdwg.mxu0
    %429 = vmatpush.bf16.msra.mxu0 0
    %430 = vmatpush.bf16.msra.mxu0 0
    %431 = vmatpush.bf16.msra.mxu0 0
    %432 = vmatpush.bf16.msra.mxu0 0
    %433 = vmatpush.bf16.msra.mxu0 0
    %434 = vmatpush.bf16.msra.mxu0 0
    %435 = vmatpush.bf16.msra.mxu0 %v196
    %436 = vmatpush.bf16.msra.mxu0 %v188
    %437 = vmatmul.bf16.gmra.mxu0 %v215
    %v438 = vpop.f32.mrf.mxu0
    %v439 = vadd.f32 %v104, %v438
    %v440 = vpop.f32.mrf.mxu0
    %v441 = vadd.f32 %v104, %v440
    %442 = vmatmul.bf16.gmra.mxu0 %v218
    %v443 = vpop.f32.mrf.mxu0
    %v444 = vadd.f32 %v104, %v443
    %v445 = vpop.f32.mrf.mxu0
    %v446 = vadd.f32 %v104, %v445
    %447 = vmatmul.bf16.gmra.mxu0 %v221
    %v448 = vpop.f32.mrf.mxu0
    %v449 = vadd.f32 %v104, %v448
    %v450 = vpop.f32.mrf.mxu0
    %v451 = vadd.f32 %v104, %v450
    %452 = vmatmul.bf16.gmra.mxu0 %v224
    %v453 = vpop.f32.mrf.mxu0
    %v454 = vadd.f32 %v104, %v453
    %v455 = vpop.f32.mrf.mxu0
    %v456 = vadd.f32 %v104, %v455
    %457 = vdwg.mxu0
    %458 = vst [vmem:[#allocation2] sm:$0xff] %v236
    %459 = vst [vmem:[#allocation2 + $0x8] sm:$0xff] %v265
    %460 = vst [vmem:[#allocation2 + $0x10] sm:$0xff] %v294
    %461 = vst [vmem:[#allocation2 + $0x18] sm:$0xff] %v323
    %462 = vst [vmem:[#allocation2 + $0x20] sm:$0xff] %v352
    %463 = vst [vmem:[#allocation2 + $0x28] sm:$0xff] %v381
    %464 = vst [vmem:[#allocation2 + $0x30] sm:$0xff] %v410
    %465 = vst [vmem:[#allocation2 + $0x38] sm:$0xff] %v439
    %466 = vst [vmem:[#allocation2 + $0x40] sm:$0xff] %v238
    %467 = vst [vmem:[#allocation2 + $0x48] sm:$0xff] %v267
    %468 = vst [vmem:[#allocation2 + $0x50] sm:$0xff] %v296
    %469 = vst [vmem:[#allocation2 + $0x58] sm:$0xff] %v325
    %470 = vst [vmem:[#allocation2 + $0x60] sm:$0xff] %v354
    %471 = vst [vmem:[#allocation2 + $0x68] sm:$0xff] %v383
    %472 = vst [vmem:[#allocation2 + $0x70] sm:$0xff] %v412
    %473 = vst [vmem:[#allocation2 + $0x78] sm:$0xff] %v441
    %474 = vst [vmem:[#allocation2 + $0x80] sm:$0xff] %v241
    %475 = vst [vmem:[#allocation2 + $0x88] sm:$0xff] %v270
    %476 = vst [vmem:[#allocation2 + $0x90] sm:$0xff] %v299
    %477 = vst [vmem:[#allocation2 + $0x98] sm:$0xff] %v328
    %478 = vst [vmem:[#allocation2 + $0xa0] sm:$0xff] %v357
    %479 = vst [vmem:[#allocation2 + $0xa8] sm:$0xff] %v386
    %480 = vst [vmem:[#allocation2 + $0xb0] sm:$0xff] %v415
    %481 = vst [vmem:[#allocation2 + $0xb8] sm:$0xff] %v444
    %482 = vst [vmem:[#allocation2 + $0xc0] sm:$0xff] %v243
    %483 = vst [vmem:[#allocation2 + $0xc8] sm:$0xff] %v272
    %484 = vst [vmem:[#allocation2 + $0xd0] sm:$0xff] %v301
    %485 = vst [vmem:[#allocation2 + $0xd8] sm:$0xff] %v330
    %486 = vst [vmem:[#allocation2 + $0xe0] sm:$0xff] %v359
    %487 = vst [vmem:[#allocation2 + $0xe8] sm:$0xff] %v388
    %488 = vst [vmem:[#allocation2 + $0xf0] sm:$0xff] %v417
    %489 = vst [vmem:[#allocation2 + $0xf8] sm:$0xff] %v446
    %490 = vst [vmem:[#allocation2 + $0x100] sm:$0xff] %v246
    %491 = vst [vmem:[#allocation2 + $0x108] sm:$0xff] %v275
    %492 = vst [vmem:[#allocation2 + $0x110] sm:$0xff] %v304
    %493 = vst [vmem:[#allocation2 + $0x118] sm:$0xff] %v333
    %494 = vst [vmem:[#allocation2 + $0x120] sm:$0xff] %v362
    %495 = vst [vmem:[#allocation2 + $0x128] sm:$0xff] %v391
    %496 = vst [vmem:[#allocation2 + $0x130] sm:$0xff] %v420
    %497 = vst [vmem:[#allocation2 + $0x138] sm:$0xff] %v449
    %498 = vst [vmem:[#allocation2 + $0x140] sm:$0xff] %v248
    %499 = vst [vmem:[#allocation2 + $0x148] sm:$0xff] %v277
    %500 = vst [vmem:[#allocation2 + $0x150] sm:$0xff] %v306
    %501 = vst [vmem:[#allocation2 + $0x158] sm:$0xff] %v335
    %502 = vst [vmem:[#allocation2 + $0x160] sm:$0xff] %v364
    %503 = vst [vmem:[#allocation2 + $0x168] sm:$0xff] %v393
    %504 = vst [vmem:[#allocation2 + $0x170] sm:$0xff] %v422
    %505 = vst [vmem:[#allocation2 + $0x178] sm:$0xff] %v451
    %506 = vst [vmem:[#allocation2 + $0x180] sm:$0xff] %v251
    %507 = vst [vmem:[#allocation2 + $0x188] sm:$0xff] %v280
    %508 = vst [vmem:[#allocation2 + $0x190] sm:$0xff] %v309
    %509 = vst [vmem:[#allocation2 + $0x198] sm:$0xff] %v338
    %510 = vst [vmem:[#allocation2 + $0x1a0] sm:$0xff] %v367
    %511 = vst [vmem:[#allocation2 + $0x1a8] sm:$0xff] %v396
    %512 = vst [vmem:[#allocation2 + $0x1b0] sm:$0xff] %v425
    %513 = vst [vmem:[#allocation2 + $0x1b8] sm:$0xff] %v454
    %514 = vst [vmem:[#allocation2 + $0x1c0] sm:$0xff] %v253
    %515 = vst [vmem:[#allocation2 + $0x1c8] sm:$0xff] %v282
    %516 = vst [vmem:[#allocation2 + $0x1d0] sm:$0xff] %v311
    %517 = vst [vmem:[#allocation2 + $0x1d8] sm:$0xff] %v340
    %518 = vst [vmem:[#allocation2 + $0x1e0] sm:$0xff] %v369
    %519 = vst [vmem:[#allocation2 + $0x1e8] sm:$0xff] %v398
    %520 = vst [vmem:[#allocation2 + $0x1f0] sm:$0xff] %v427
    %521 = vst [vmem:[#allocation2 + $0x1f8] sm:$0xff] %v456
    %v522 = vld [vmem:[%s1] sm:$0xff]
    %s523 = sld [smem:[#allocation4]]
    %v524 = vld [vmem:[#allocation10] sm:$0xff]
    %v525 = vld [vmem:[#allocation10 + $0x8] sm:$0xff]
    %v526 = vld [vmem:[#allocation10 + $0x10] sm:$0xff]
    %v527 = vld [vmem:[#allocation10 + $0x18] sm:$0xff]
    %v528 = vld [vmem:[#allocation10 + $0x20] sm:$0xff]
    %v529 = vld [vmem:[#allocation10 + $0x28] sm:$0xff]
    %v530 = vld [vmem:[#allocation10 + $0x30] sm:$0xff]
    %v531 = vld [vmem:[#allocation10 + $0x38] sm:$0xff]
    %v532 = vld [vmem:[#allocation10 + $0x40] sm:$0xff]
    %v533 = vld [vmem:[#allocation10 + $0x48] sm:$0xff]
    %v534 = vld [vmem:[#allocation10 + $0x50] sm:$0xff]
    %v535 = vld [vmem:[#allocation10 + $0x58] sm:$0xff]
    %v536 = vld [vmem:[#allocation10 + $0x60] sm:$0xff]
    %v537 = vld [vmem:[#allocation10 + $0x68] sm:$0xff]
    %v538 = vld [vmem:[#allocation10 + $0x70] sm:$0xff]
    %v539 = vld [vmem:[#allocation10 + $0x78] sm:$0xff]
    %v540 = vld [vmem:[#allocation10 + $0x80] sm:$0xff]
    %v541 = vld [vmem:[#allocation10 + $0x88] sm:$0xff]
    %v542 = vld [vmem:[#allocation10 + $0x90] sm:$0xff]
    %v543 = vld [vmem:[#allocation10 + $0x98] sm:$0xff]
    %v544 = vld [vmem:[#allocation10 + $0xa0] sm:$0xff]
    %v545 = vld [vmem:[#allocation10 + $0xa8] sm:$0xff]
    %v546 = vld [vmem:[#allocation10 + $0xb0] sm:$0xff]
    %v547 = vld [vmem:[#allocation10 + $0xb8] sm:$0xff]
    %v548 = vld [vmem:[#allocation10 + $0xc0] sm:$0xff]
    %v549 = vld [vmem:[#allocation10 + $0xc8] sm:$0xff]
    %v550 = vld [vmem:[#allocation10 + $0xd0] sm:$0xff]
    %v551 = vld [vmem:[#allocation10 + $0xd8] sm:$0xff]
    %v552 = vld [vmem:[#allocation10 + $0xe0] sm:$0xff]
    %v553 = vld [vmem:[#allocation10 + $0xe8] sm:$0xff]
    %v554 = vld [vmem:[#allocation10 + $0xf0] sm:$0xff]
    %v555 = vld [vmem:[#allocation10 + $0xf8] sm:$0xff]
    %v556 = vld [vmem:[#allocation10 + $0x100] sm:$0xff]
    %v557 = vld [vmem:[#allocation10 + $0x108] sm:$0xff]
    %v558 = vld [vmem:[#allocation10 + $0x110] sm:$0xff]
    %v559 = vld [vmem:[#allocation10 + $0x118] sm:$0xff]
    %v560 = vld [vmem:[#allocation10 + $0x120] sm:$0xff]
    %v561 = vld [vmem:[#allocation10 + $0x128] sm:$0xff]
    %v562 = vld [vmem:[#allocation10 + $0x130] sm:$0xff]
    %v563 = vld [vmem:[#allocation10 + $0x138] sm:$0xff]
    %v564 = vld [vmem:[#allocation10 + $0x140] sm:$0xff]
    %v565 = vld [vmem:[#allocation10 + $0x148] sm:$0xff]
    %v566 = vld [vmem:[#allocation10 + $0x150] sm:$0xff]
    %v567 = vld [vmem:[#allocation10 + $0x158] sm:$0xff]
    %v568 = vld [vmem:[#allocation10 + $0x160] sm:$0xff]
    %v569 = vld [vmem:[#allocation10 + $0x168] sm:$0xff]
    %v570 = vld [vmem:[#allocation10 + $0x170] sm:$0xff]
    %v571 = vld [vmem:[#allocation10 + $0x178] sm:$0xff]
    %v572 = vld [vmem:[#allocation10 + $0x180] sm:$0xff]
    %v573 = vld [vmem:[#allocation10 + $0x188] sm:$0xff]
    %v574 = vld [vmem:[#allocation10 + $0x190] sm:$0xff]
    %v575 = vld [vmem:[#allocation10 + $0x198] sm:$0xff]
    %v576 = vld [vmem:[#allocation10 + $0x1a0] sm:$0xff]
    %v577 = vld [vmem:[#allocation10 + $0x1a8] sm:$0xff]
    %v578 = vld [vmem:[#allocation10 + $0x1b0] sm:$0xff]
    %v579 = vld [vmem:[#allocation10 + $0x1b8] sm:$0xff]
    %v580 = vld [vmem:[#allocation10 + $0x1c0] sm:$0xff]
    %v581 = vld [vmem:[#allocation10 + $0x1c8] sm:$0xff]
    %v582 = vld [vmem:[#allocation10 + $0x1d0] sm:$0xff]
    %v583 = vld [vmem:[#allocation10 + $0x1d8] sm:$0xff]
    %v584 = vld [vmem:[#allocation10 + $0x1e0] sm:$0xff]
    %v585 = vld [vmem:[#allocation10 + $0x1e8] sm:$0xff]
    %v586 = vld [vmem:[#allocation10 + $0x1f0] sm:$0xff]
    %v587 = vld [vmem:[#allocation10 + $0x1f8] sm:$0xff]
    %v588 = vld [vmem:[#allocation10 + $0x200] sm:$0xff]
    %v589 = vld [vmem:[#allocation10 + $0x208] sm:$0xff]
    %v590 = vld [vmem:[#allocation10 + $0x210] sm:$0xff]
    %v591 = vld [vmem:[#allocation10 + $0x218] sm:$0xff]
    %v592 = vld [vmem:[#allocation10 + $0x220] sm:$0xff]
    %v593 = vld [vmem:[#allocation10 + $0x228] sm:$0xff]
    %v594 = vld [vmem:[#allocation10 + $0x230] sm:$0xff]
    %v595 = vld [vmem:[#allocation10 + $0x238] sm:$0xff]
    %v596 = vld [vmem:[#allocation10 + $0x240] sm:$0xff]
    %v597 = vld [vmem:[#allocation10 + $0x248] sm:$0xff]
    %v598 = vld [vmem:[#allocation10 + $0x250] sm:$0xff]
    %v599 = vld [vmem:[#allocation10 + $0x258] sm:$0xff]
    %v600 = vld [vmem:[#allocation10 + $0x260] sm:$0xff]
    %v601 = vld [vmem:[#allocation10 + $0x268] sm:$0xff]
    %v602 = vld [vmem:[#allocation10 + $0x270] sm:$0xff]
    %v603 = vld [vmem:[#allocation10 + $0x278] sm:$0xff]
    %v604 = vld [vmem:[#allocation10 + $0x280] sm:$0xff]
    %v605 = vld [vmem:[#allocation10 + $0x288] sm:$0xff]
    %v606 = vld [vmem:[#allocation10 + $0x290] sm:$0xff]
    %v607 = vld [vmem:[#allocation10 + $0x298] sm:$0xff]
    %v608 = vld [vmem:[#allocation10 + $0x2a0] sm:$0xff]
    %v609 = vld [vmem:[#allocation10 + $0x2a8] sm:$0xff]
    %v610 = vld [vmem:[#allocation10 + $0x2b0] sm:$0xff]
    %v611 = vld [vmem:[#allocation10 + $0x2b8] sm:$0xff]
    %v612 = vld [vmem:[#allocation10 + $0x2c0] sm:$0xff]
    %v613 = vld [vmem:[#allocation10 + $0x2c8] sm:$0xff]
    %v614 = vld [vmem:[#allocation10 + $0x2d0] sm:$0xff]
    %v615 = vld [vmem:[#allocation10 + $0x2d8] sm:$0xff]
    %v616 = vld [vmem:[#allocation10 + $0x2e0] sm:$0xff]
    %v617 = vld [vmem:[#allocation10 + $0x2e8] sm:$0xff]
    %v618 = vld [vmem:[#allocation10 + $0x2f0] sm:$0xff]
    %v619 = vld [vmem:[#allocation10 + $0x2f8] sm:$0xff]
    %v620 = vld [vmem:[#allocation10 + $0x300] sm:$0xff]
    %v621 = vld [vmem:[#allocation10 + $0x308] sm:$0xff]
    %v622 = vld [vmem:[#allocation10 + $0x310] sm:$0xff]
    %v623 = vld [vmem:[#allocation10 + $0x318] sm:$0xff]
    %v624 = vld [vmem:[#allocation10 + $0x320] sm:$0xff]
    %v625 = vld [vmem:[#allocation10 + $0x328] sm:$0xff]
    %v626 = vld [vmem:[#allocation10 + $0x330] sm:$0xff]
    %v627 = vld [vmem:[#allocation10 + $0x338] sm:$0xff]
    %v628 = vld [vmem:[#allocation10 + $0x340] sm:$0xff]
    %v629 = vld [vmem:[#allocation10 + $0x348] sm:$0xff]
    %v630 = vld [vmem:[#allocation10 + $0x350] sm:$0xff]
    %v631 = vld [vmem:[#allocation10 + $0x358] sm:$0xff]
    %v632 = vld [vmem:[#allocation10 + $0x360] sm:$0xff]
    %v633 = vld [vmem:[#allocation10 + $0x368] sm:$0xff]
    %v634 = vld [vmem:[#allocation10 + $0x370] sm:$0xff]
    %v635 = vld [vmem:[#allocation10 + $0x378] sm:$0xff]
    %v636 = vld [vmem:[#allocation10 + $0x380] sm:$0xff]
    %v637 = vld [vmem:[#allocation10 + $0x388] sm:$0xff]
    %v638 = vld [vmem:[#allocation10 + $0x390] sm:$0xff]
    %v639 = vld [vmem:[#allocation10 + $0x398] sm:$0xff]
    %v640 = vld [vmem:[#allocation10 + $0x3a0] sm:$0xff]
    %v641 = vld [vmem:[#allocation10 + $0x3a8] sm:$0xff]
    %v642 = vld [vmem:[#allocation10 + $0x3b0] sm:$0xff]
    %v643 = vld [vmem:[#allocation10 + $0x3b8] sm:$0xff]
    %v644 = vld [vmem:[#allocation10 + $0x3c0] sm:$0xff]
    %v645 = vld [vmem:[#allocation10 + $0x3c8] sm:$0xff]
    %v646 = vld [vmem:[#allocation10 + $0x3d0] sm:$0xff]
    %v647 = vld [vmem:[#allocation10 + $0x3d8] sm:$0xff]
    %v648 = vld [vmem:[#allocation10 + $0x3e0] sm:$0xff]
    %v649 = vld [vmem:[#allocation10 + $0x3e8] sm:$0xff]
    %v650 = vld [vmem:[#allocation10 + $0x3f0] sm:$0xff]
    %v651 = vld [vmem:[#allocation10 + $0x3f8] sm:$0xff]
    // While loop
    $region34: #{tpu_custom_call.1} parent=1 // loop_pre_header
      _
    $region35: #{tpu_custom_call.1} parent=1 // loop_header
      %s653 = sphi 0, %s655
      %p654 = scmp.ge.s32.totalorder %s653, %s523
      %v658 = vphi 0.0, %v1614
      %v659 = vphi 0.0, %v1612
      %v660 = vphi 0.0, %v1677
      %v661 = vphi 0.0, %v1675
    $region36: #{tpu_custom_call.1} parent=1 // loop_header_branch
      %657 = sbr.rel (%p654) target = $region40
    $region37: #{tpu_custom_call.1} parent=1 // loop_body
      %s662 = ssub.s32 %s523, 1
      %s663 = ssub.s32 %s662, %s653
      %v664 = vsub.s32 %v522, 1
      %v665 = vstv %s663
      %vm666 = vcmp.ge.s32.totalorder %v665, %v664
      %v667 = vsel %vm666, 1, 0
      %668 = vset.pattern.permute.xlu0 0
      %669 = vperm.xlu0 %668, %v667
      %v670 = vpop.permute.xlu0 %669
      %vm671 = vcmp.eq.s32.totalorder %v670, 1
      %v672 = vsel %vm671, 0.0, %v660
      %v673 = vsel %vm671, 0.0, %v661
      %s674 = smul.u32 %s653, 8
      %s675 = smul.u32 %s663, 8
      %s676 = sshra.s32 %s674, 3
      %s677 = sand.u32 %s674, 7
      %s678 = smul.u32 %s676, 8
      %s679 = smul.addr %s678, 8
      %s680 = scalar_lea.vmem [#allocation2], %s679
      %v681 = vld [vmem:[%s680] sm:$0xff]
      %v682 = vld [vmem:[%s680 + $0x8] sm:$0xff]
      %v683 = vld [vmem:[%s680 + $0x10] sm:$0xff]
      %v684 = vld [vmem:[%s680 + $0x18] sm:$0xff]
      %s685 = sshra.s32 %s675, 3
      %s686 = sand.u32 %s675, 7
      %s687 = smul.u32 %s685, 8
      %s688 = smul.addr %s687, 8
      %s689 = scalar_lea.vmem [#allocation2], %s688
      %v690 = vld [vmem:[%s689 + $0x20] sm:$0xff]
      %v691 = vld [vmem:[%s689 + $0x28] sm:$0xff]
      %v692 = vld [vmem:[%s689 + $0x30] sm:$0xff]
      %v693 = vld [vmem:[%s689 + $0x38] sm:$0xff]
      %v694 = vpack.c.bf16 %v658, %v658
      %v695 = vpack.c.bf16 %v672, %v672
      %v824 = vunpack.c.l.b16 %v524
      %v825 = vunpack.c.h.b16 %v524
      %v826 = vunpack.c.l.b16 %v525
      %v827 = vunpack.c.h.b16 %v525
      %v828 = vunpack.c.l.b16 %v526
      %v829 = vunpack.c.h.b16 %v526
      %v830 = vunpack.c.l.b16 %v527
      %v831 = vunpack.c.h.b16 %v527
      %v832 = vunpack.c.l.b16 %v528
      %v833 = vunpack.c.h.b16 %v528
      %v834 = vunpack.c.l.b16 %v529
      %v835 = vunpack.c.h.b16 %v529
      %v836 = vunpack.c.l.b16 %v530
      %v837 = vunpack.c.h.b16 %v530
      %v838 = vunpack.c.l.b16 %v531
      %v839 = vunpack.c.h.b16 %v531
      %v840 = vunpack.c.l.b16 %v532
      %v841 = vunpack.c.h.b16 %v532
      %v842 = vunpack.c.l.b16 %v533
      %v843 = vunpack.c.h.b16 %v533
      %v844 = vunpack.c.l.b16 %v534
      %v845 = vunpack.c.h.b16 %v534
      %v846 = vunpack.c.l.b16 %v535
      %v847 = vunpack.c.h.b16 %v535
      %v848 = vunpack.c.l.b16 %v536
      %v849 = vunpack.c.h.b16 %v536
      %v850 = vunpack.c.l.b16 %v537
      %v851 = vunpack.c.h.b16 %v537
      %v852 = vunpack.c.l.b16 %v538
      %v853 = vunpack.c.h.b16 %v538
      %v854 = vunpack.c.l.b16 %v539
      %v855 = vunpack.c.h.b16 %v539
      %v856 = vunpack.c.l.b16 %v540
      %v857 = vunpack.c.h.b16 %v540
      %v858 = vunpack.c.l.b16 %v541
      %v859 = vunpack.c.h.b16 %v541
      %v860 = vunpack.c.l.b16 %v542
      %v861 = vunpack.c.h.b16 %v542
      %v862 = vunpack.c.l.b16 %v543
      %v863 = vunpack.c.h.b16 %v543
      %v864 = vunpack.c.l.b16 %v544
      %v865 = vunpack.c.h.b16 %v544
      %v866 = vunpack.c.l.b16 %v545
      %v867 = vunpack.c.h.b16 %v545
      %v868 = vunpack.c.l.b16 %v546
      %v869 = vunpack.c.h.b16 %v546
      %v870 = vunpack.c.l.b16 %v547
      %v871 = vunpack.c.h.b16 %v547
      %v872 = vunpack.c.l.b16 %v548
      %v873 = vunpack.c.h.b16 %v548
      %v874 = vunpack.c.l.b16 %v549
      %v875 = vunpack.c.h.b16 %v549
      %v876 = vunpack.c.l.b16 %v550
      %v877 = vunpack.c.h.b16 %v550
      %v878 = vunpack.c.l.b16 %v551
      %v879 = vunpack.c.h.b16 %v551
      %v880 = vunpack.c.l.b16 %v552
      %v881 = vunpack.c.h.b16 %v552
      %v882 = vunpack.c.l.b16 %v553
      %v883 = vunpack.c.h.b16 %v553
      %v884 = vunpack.c.l.b16 %v554
      %v885 = vunpack.c.h.b16 %v554
      %v886 = vunpack.c.l.b16 %v555
      %v887 = vunpack.c.h.b16 %v555
      %v888 = vunpack.c.l.b16 %v556
      %v889 = vunpack.c.h.b16 %v556
      %v890 = vunpack.c.l.b16 %v557
      %v891 = vunpack.c.h.b16 %v557
      %v892 = vunpack.c.l.b16 %v558
      %v893 = vunpack.c.h.b16 %v558
      %v894 = vunpack.c.l.b16 %v559
      %v895 = vunpack.c.h.b16 %v559
      %v896 = vunpack.c.l.b16 %v560
      %v897 = vunpack.c.h.b16 %v560
      %v898 = vunpack.c.l.b16 %v561
      %v899 = vunpack.c.h.b16 %v561
      %v900 = vunpack.c.l.b16 %v562
      %v901 = vunpack.c.h.b16 %v562
      %v902 = vunpack.c.l.b16 %v563
      %v903 = vunpack.c.h.b16 %v563
      %v904 = vunpack.c.l.b16 %v564
      %v905 = vunpack.c.h.b16 %v564
      %v906 = vunpack.c.l.b16 %v565
      %v907 = vunpack.c.h.b16 %v565
      %v908 = vunpack.c.l.b16 %v566
      %v909 = vunpack.c.h.b16 %v566
      %v910 = vunpack.c.l.b16 %v567
      %v911 = vunpack.c.h.b16 %v567
      %v912 = vunpack.c.l.b16 %v568
      %v913 = vunpack.c.h.b16 %v568
      %v914 = vunpack.c.l.b16 %v569
      %v915 = vunpack.c.h.b16 %v569
      %v916 = vunpack.c.l.b16 %v570
      %v917 = vunpack.c.h.b16 %v570
      %v918 = vunpack.c.l.b16 %v571
      %v919 = vunpack.c.h.b16 %v571
      %v920 = vunpack.c.l.b16 %v572
      %v921 = vunpack.c.h.b16 %v572
      %v922 = vunpack.c.l.b16 %v573
      %v923 = vunpack.c.h.b16 %v573
      %v924 = vunpack.c.l.b16 %v574
      %v925 = vunpack.c.h.b16 %v574
      %v926 = vunpack.c.l.b16 %v575
      %v927 = vunpack.c.h.b16 %v575
      %v928 = vunpack.c.l.b16 %v576
      %v929 = vunpack.c.h.b16 %v576
      %v930 = vunpack.c.l.b16 %v577
      %v931 = vunpack.c.h.b16 %v577
      %v932 = vunpack.c.l.b16 %v578
      %v933 = vunpack.c.h.b16 %v578
      %v934 = vunpack.c.l.b16 %v579
      %v935 = vunpack.c.h.b16 %v579
      %v936 = vunpack.c.l.b16 %v580
      %v937 = vunpack.c.h.b16 %v580
      %v938 = vunpack.c.l.b16 %v581
      %v939 = vunpack.c.h.b16 %v581
      %v940 = vunpack.c.l.b16 %v582
      %v941 = vunpack.c.h.b16 %v582
      %v942 = vunpack.c.l.b16 %v583
      %v943 = vunpack.c.h.b16 %v583
      %v944 = vunpack.c.l.b16 %v584
      %v945 = vunpack.c.h.b16 %v584
      %v946 = vunpack.c.l.b16 %v585
      %v947 = vunpack.c.h.b16 %v585
      %v948 = vunpack.c.l.b16 %v586
      %v949 = vunpack.c.h.b16 %v586
      %v950 = vunpack.c.l.b16 %v587
      %v951 = vunpack.c.h.b16 %v587
      %v952 = vunpack.c.l.b16 %v588
      %v953 = vunpack.c.h.b16 %v588
      %v954 = vunpack.c.l.b16 %v589
      %v955 = vunpack.c.h.b16 %v589
      %v956 = vunpack.c.l.b16 %v590
      %v957 = vunpack.c.h.b16 %v590
      %v958 = vunpack.c.l.b16 %v591
      %v959 = vunpack.c.h.b16 %v591
      %v960 = vunpack.c.l.b16 %v592
      %v961 = vunpack.c.h.b16 %v592
      %v962 = vunpack.c.l.b16 %v593
      %v963 = vunpack.c.h.b16 %v593
      %v964 = vunpack.c.l.b16 %v594
      %v965 = vunpack.c.h.b16 %v594
      %v966 = vunpack.c.l.b16 %v595
      %v967 = vunpack.c.h.b16 %v595
      %v968 = vunpack.c.l.b16 %v596
      %v969 = vunpack.c.h.b16 %v596
      %v970 = vunpack.c.l.b16 %v597
      %v971 = vunpack.c.h.b16 %v597
      %v972 = vunpack.c.l.b16 %v598
      %v973 = vunpack.c.h.b16 %v598
      %v974 = vunpack.c.l.b16 %v599
      %v975 = vunpack.c.h.b16 %v599
      %v976 = vunpack.c.l.b16 %v600
      %v977 = vunpack.c.h.b16 %v600
      %v978 = vunpack.c.l.b16 %v601
      %v979 = vunpack.c.h.b16 %v601
      %v980 = vunpack.c.l.b16 %v602
      %v981 = vunpack.c.h.b16 %v602
      %v982 = vunpack.c.l.b16 %v603
      %v983 = vunpack.c.h.b16 %v603
      %v984 = vunpack.c.l.b16 %v604
      %v985 = vunpack.c.h.b16 %v604
      %v986 = vunpack.c.l.b16 %v605
      %v987 = vunpack.c.h.b16 %v605
      %v988 = vunpack.c.l.b16 %v606
      %v989 = vunpack.c.h.b16 %v606
      %v990 = vunpack.c.l.b16 %v607
      %v991 = vunpack.c.h.b16 %v607
      %v992 = vunpack.c.l.b16 %v608
      %v993 = vunpack.c.h.b16 %v608
      %v994 = vunpack.c.l.b16 %v609
      %v995 = vunpack.c.h.b16 %v609
      %v996 = vunpack.c.l.b16 %v610
      %v997 = vunpack.c.h.b16 %v610
      %v998 = vunpack.c.l.b16 %v611
      %v999 = vunpack.c.h.b16 %v611
      %v1000 = vunpack.c.l.b16 %v612
      %v1001 = vunpack.c.h.b16 %v612
      %v1002 = vunpack.c.l.b16 %v613
      %v1003 = vunpack.c.h.b16 %v613
      %v1004 = vunpack.c.l.b16 %v614
      %v1005 = vunpack.c.h.b16 %v614
      %v1006 = vunpack.c.l.b16 %v615
      %v1007 = vunpack.c.h.b16 %v615
      %v1008 = vunpack.c.l.b16 %v616
      %v1009 = vunpack.c.h.b16 %v616
      %v1010 = vunpack.c.l.b16 %v617
      %v1011 = vunpack.c.h.b16 %v617
      %v1012 = vunpack.c.l.b16 %v618
      %v1013 = vunpack.c.h.b16 %v618
      %v1014 = vunpack.c.l.b16 %v619
      %v1015 = vunpack.c.h.b16 %v619
      %v1016 = vunpack.c.l.b16 %v620
      %v1017 = vunpack.c.h.b16 %v620
      %v1018 = vunpack.c.l.b16 %v621
      %v1019 = vunpack.c.h.b16 %v621
      %v1020 = vunpack.c.l.b16 %v622
      %v1021 = vunpack.c.h.b16 %v622
      %v1022 = vunpack.c.l.b16 %v623
      %v1023 = vunpack.c.h.b16 %v623
      %v1024 = vunpack.c.l.b16 %v624
      %v1025 = vunpack.c.h.b16 %v624
      %v1026 = vunpack.c.l.b16 %v625
      %v1027 = vunpack.c.h.b16 %v625
      %v1028 = vunpack.c.l.b16 %v626
      %v1029 = vunpack.c.h.b16 %v626
      %v1030 = vunpack.c.l.b16 %v627
      %v1031 = vunpack.c.h.b16 %v627
      %v1032 = vunpack.c.l.b16 %v628
      %v1033 = vunpack.c.h.b16 %v628
      %v1034 = vunpack.c.l.b16 %v629
      %v1035 = vunpack.c.h.b16 %v629
      %v1036 = vunpack.c.l.b16 %v630
      %v1037 = vunpack.c.h.b16 %v630
      %v1038 = vunpack.c.l.b16 %v631
      %v1039 = vunpack.c.h.b16 %v631
      %v1040 = vunpack.c.l.b16 %v632
      %v1041 = vunpack.c.h.b16 %v632
      %v1042 = vunpack.c.l.b16 %v633
      %v1043 = vunpack.c.h.b16 %v633
      %v1044 = vunpack.c.l.b16 %v634
      %v1045 = vunpack.c.h.b16 %v634
      %v1046 = vunpack.c.l.b16 %v635
      %v1047 = vunpack.c.h.b16 %v635
      %v1048 = vunpack.c.l.b16 %v636
      %v1049 = vunpack.c.h.b16 %v636
      %v1050 = vunpack.c.l.b16 %v637
      %v1051 = vunpack.c.h.b16 %v637
      %v1052 = vunpack.c.l.b16 %v638
      %v1053 = vunpack.c.h.b16 %v638
      %v1054 = vunpack.c.l.b16 %v639
      %v1055 = vunpack.c.h.b16 %v639
      %v1056 = vunpack.c.l.b16 %v640
      %v1057 = vunpack.c.h.b16 %v640
      %v1058 = vunpack.c.l.b16 %v641
      %v1059 = vunpack.c.h.b16 %v641
      %v1060 = vunpack.c.l.b16 %v642
      %v1061 = vunpack.c.h.b16 %v642
      %v1062 = vunpack.c.l.b16 %v643
      %v1063 = vunpack.c.h.b16 %v643
      %v1064 = vunpack.c.l.b16 %v644
      %v1065 = vunpack.c.h.b16 %v644
      %v1066 = vunpack.c.l.b16 %v645
      %v1067 = vunpack.c.h.b16 %v645
      %v1068 = vunpack.c.l.b16 %v646
      %v1069 = vunpack.c.h.b16 %v646
      %v1070 = vunpack.c.l.b16 %v647
      %v1071 = vunpack.c.h.b16 %v647
      %v1072 = vunpack.c.l.b16 %v648
      %v1073 = vunpack.c.h.b16 %v648
      %v1074 = vunpack.c.l.b16 %v649
      %v1075 = vunpack.c.h.b16 %v649
      %v1076 = vunpack.c.l.b16 %v650
      %v1077 = vunpack.c.h.b16 %v650
      %v1078 = vunpack.c.l.b16 %v651
      %v1079 = vunpack.c.h.b16 %v651
      %v1080 = vpack.c.b16 %v832, %v824
      %v1081 = vpack.c.b16 %v833, %v825
      %v1082 = vpack.c.b16 %v834, %v826
      %v1083 = vpack.c.b16 %v835, %v827
      %v1084 = vpack.c.b16 %v836, %v828
      %v1085 = vpack.c.b16 %v837, %v829
      %v1086 = vpack.c.b16 %v838, %v830
      %v1087 = vpack.c.b16 %v839, %v831
      %v1088 = vpack.c.b16 %v848, %v840
      %v1089 = vpack.c.b16 %v849, %v841
      %v1090 = vpack.c.b16 %v850, %v842
      %v1091 = vpack.c.b16 %v851, %v843
      %v1092 = vpack.c.b16 %v852, %v844
      %v1093 = vpack.c.b16 %v853, %v845
      %v1094 = vpack.c.b16 %v854, %v846
      %v1095 = vpack.c.b16 %v855, %v847
      %v1096 = vpack.c.b16 %v864, %v856
      %v1097 = vpack.c.b16 %v865, %v857
      %v1098 = vpack.c.b16 %v866, %v858
      %v1099 = vpack.c.b16 %v867, %v859
      %v1100 = vpack.c.b16 %v868, %v860
      %v1101 = vpack.c.b16 %v869, %v861
      %v1102 = vpack.c.b16 %v870, %v862
      %v1103 = vpack.c.b16 %v871, %v863
      %v1104 = vpack.c.b16 %v880, %v872
      %v1105 = vpack.c.b16 %v881, %v873
      %v1106 = vpack.c.b16 %v882, %v874
      %v1107 = vpack.c.b16 %v883, %v875
      %v1108 = vpack.c.b16 %v884, %v876
      %v1109 = vpack.c.b16 %v885, %v877
      %v1110 = vpack.c.b16 %v886, %v878
      %v1111 = vpack.c.b16 %v887, %v879
      %v1112 = vpack.c.b16 %v896, %v888
      %v1113 = vpack.c.b16 %v897, %v889
      %v1114 = vpack.c.b16 %v898, %v890
      %v1115 = vpack.c.b16 %v899, %v891
      %v1116 = vpack.c.b16 %v900, %v892
      %v1117 = vpack.c.b16 %v901, %v893
      %v1118 = vpack.c.b16 %v902, %v894
      %v1119 = vpack.c.b16 %v903, %v895
      %v1120 = vpack.c.b16 %v912, %v904
      %v1121 = vpack.c.b16 %v913, %v905
      %v1122 = vpack.c.b16 %v914, %v906
      %v1123 = vpack.c.b16 %v915, %v907
      %v1124 = vpack.c.b16 %v916, %v908
      %v1125 = vpack.c.b16 %v917, %v909
      %v1126 = vpack.c.b16 %v918, %v910
      %v1127 = vpack.c.b16 %v919, %v911
      %v1128 = vpack.c.b16 %v928, %v920
      %v1129 = vpack.c.b16 %v929, %v921
      %v1130 = vpack.c.b16 %v930, %v922
      %v1131 = vpack.c.b16 %v931, %v923
      %v1132 = vpack.c.b16 %v932, %v924
      %v1133 = vpack.c.b16 %v933, %v925
      %v1134 = vpack.c.b16 %v934, %v926
      %v1135 = vpack.c.b16 %v935, %v927
      %v1136 = vpack.c.b16 %v944, %v936
      %v1137 = vpack.c.b16 %v945, %v937
      %v1138 = vpack.c.b16 %v946, %v938
      %v1139 = vpack.c.b16 %v947, %v939
      %v1140 = vpack.c.b16 %v948, %v940
      %v1141 = vpack.c.b16 %v949, %v941
      %v1142 = vpack.c.b16 %v950, %v942
      %v1143 = vpack.c.b16 %v951, %v943
      %v1144 = vpack.c.b16 %v960, %v952
      %v1145 = vpack.c.b16 %v961, %v953
      %v1146 = vpack.c.b16 %v962, %v954
      %v1147 = vpack.c.b16 %v963, %v955
      %v1148 = vpack.c.b16 %v964, %v956
      %v1149 = vpack.c.b16 %v965, %v957
      %v1150 = vpack.c.b16 %v966, %v958
      %v1151 = vpack.c.b16 %v967, %v959
      %v1152 = vpack.c.b16 %v976, %v968
      %v1153 = vpack.c.b16 %v977, %v969
      %v1154 = vpack.c.b16 %v978, %v970
      %v1155 = vpack.c.b16 %v979, %v971
      %v1156 = vpack.c.b16 %v980, %v972
      %v1157 = vpack.c.b16 %v981, %v973
      %v1158 = vpack.c.b16 %v982, %v974
      %v1159 = vpack.c.b16 %v983, %v975
      %v1160 = vpack.c.b16 %v992, %v984
      %v1161 = vpack.c.b16 %v993, %v985
      %v1162 = vpack.c.b16 %v994, %v986
      %v1163 = vpack.c.b16 %v995, %v987
      %v1164 = vpack.c.b16 %v996, %v988
      %v1165 = vpack.c.b16 %v997, %v989
      %v1166 = vpack.c.b16 %v998, %v990
      %v1167 = vpack.c.b16 %v999, %v991
      %v1168 = vpack.c.b16 %v1008, %v1000
      %v1169 = vpack.c.b16 %v1009, %v1001
      %v1170 = vpack.c.b16 %v1010, %v1002
      %v1171 = vpack.c.b16 %v1011, %v1003
      %v1172 = vpack.c.b16 %v1012, %v1004
      %v1173 = vpack.c.b16 %v1013, %v1005
      %v1174 = vpack.c.b16 %v1014, %v1006
      %v1175 = vpack.c.b16 %v1015, %v1007
      %v1176 = vpack.c.b16 %v1024, %v1016
      %v1177 = vpack.c.b16 %v1025, %v1017
      %v1178 = vpack.c.b16 %v1026, %v1018
      %v1179 = vpack.c.b16 %v1027, %v1019
      %v1180 = vpack.c.b16 %v1028, %v1020
      %v1181 = vpack.c.b16 %v1029, %v1021
      %v1182 = vpack.c.b16 %v1030, %v1022
      %v1183 = vpack.c.b16 %v1031, %v1023
      %v1184 = vpack.c.b16 %v1040, %v1032
      %v1185 = vpack.c.b16 %v1041, %v1033
      %v1186 = vpack.c.b16 %v1042, %v1034
      %v1187 = vpack.c.b16 %v1043, %v1035
      %v1188 = vpack.c.b16 %v1044, %v1036
      %v1189 = vpack.c.b16 %v1045, %v1037
      %v1190 = vpack.c.b16 %v1046, %v1038
      %v1191 = vpack.c.b16 %v1047, %v1039
      %v1192 = vpack.c.b16 %v1056, %v1048
      %v1193 = vpack.c.b16 %v1057, %v1049
      %v1194 = vpack.c.b16 %v1058, %v1050
      %v1195 = vpack.c.b16 %v1059, %v1051
      %v1196 = vpack.c.b16 %v1060, %v1052
      %v1197 = vpack.c.b16 %v1061, %v1053
      %v1198 = vpack.c.b16 %v1062, %v1054
      %v1199 = vpack.c.b16 %v1063, %v1055
      %v1200 = vpack.c.b16 %v1072, %v1064
      %v1201 = vpack.c.b16 %v1073, %v1065
      %v1202 = vpack.c.b16 %v1074, %v1066
      %v1203 = vpack.c.b16 %v1075, %v1067
      %v1204 = vpack.c.b16 %v1076, %v1068
      %v1205 = vpack.c.b16 %v1077, %v1069
      %v1206 = vpack.c.b16 %v1078, %v1070
      %v1207 = vpack.c.b16 %v1079, %v1071
      %1336 = vmatpush.bf16.msra.mxu0 %v1136
      %1337 = vmatpush.bf16.msra.mxu0 %v1128
      %1338 = vmatpush.bf16.msra.mxu0 %v1120
      %1339 = vmatpush.bf16.msra.mxu0 %v1112
      %1340 = vmatpush.bf16.msra.mxu0 %v1104
      %1341 = vmatpush.bf16.msra.mxu0 %v1096
      %1342 = vmatpush.bf16.msra.mxu0 %v1088
      %1343 = vmatpush.bf16.msra.mxu0 %v1080
      %1344 = vmatmul.bf16.gmra.mxu0 %v694
      %v1345 = vpop.f32.mrf.mxu0
      %v1346 = vadd.f32 0.0, %v1345
      %v1347 = vpop.f32.mrf.mxu0
      %1348 = vdwg.mxu0
      %1349 = vmatpush.bf16.msra.mxu0 %v1200
      %1350 = vmatpush.bf16.msra.mxu0 %v1192
      %1351 = vmatpush.bf16.msra.mxu0 %v1184
      %1352 = vmatpush.bf16.msra.mxu0 %v1176
      %1353 = vmatpush.bf16.msra.mxu0 %v1168
      %1354 = vmatpush.bf16.msra.mxu0 %v1160
      %1355 = vmatpush.bf16.msra.mxu0 %v1152
      %1356 = vmatpush.bf16.msra.mxu0 %v1144
      %1357 = vmatmul.bf16.gmra.mxu0 %v695
      %v1358 = vpop.f32.mrf.mxu0
      %v1359 = vadd.f32 %v1346, %v1358
      %v1360 = vpop.f32.mrf.mxu0
      %1361 = vdwg.mxu0
      %1362 = vmatpush.bf16.msra.mxu0 %v1137
      %1363 = vmatpush.bf16.msra.mxu0 %v1129
      %1364 = vmatpush.bf16.msra.mxu0 %v1121
      %1365 = vmatpush.bf16.msra.mxu0 %v1113
      %1366 = vmatpush.bf16.msra.mxu0 %v1105
      %1367 = vmatpush.bf16.msra.mxu0 %v1097
      %1368 = vmatpush.bf16.msra.mxu0 %v1089
      %1369 = vmatpush.bf16.msra.mxu0 %v1081
      %1370 = vmatmul.bf16.gmra.mxu0 %v694
      %v1371 = vpop.f32.mrf.mxu0
      %v1372 = vadd.f32 0.0, %v1371
      %v1373 = vpop.f32.mrf.mxu0
      %1374 = vdwg.mxu0
      %1375 = vmatpush.bf16.msra.mxu0 %v1201
      %1376 = vmatpush.bf16.msra.mxu0 %v1193
      %1377 = vmatpush.bf16.msra.mxu0 %v1185
      %1378 = vmatpush.bf16.msra.mxu0 %v1177
      %1379 = vmatpush.bf16.msra.mxu0 %v1169
      %1380 = vmatpush.bf16.msra.mxu0 %v1161
      %1381 = vmatpush.bf16.msra.mxu0 %v1153
      %1382 = vmatpush.bf16.msra.mxu0 %v1145
      %1383 = vmatmul.bf16.gmra.mxu0 %v695
      %v1384 = vpop.f32.mrf.mxu0
      %v1385 = vadd.f32 %v1372, %v1384
      %v1386 = vpop.f32.mrf.mxu0
      %1387 = vdwg.mxu0
      %1388 = vmatpush.bf16.msra.mxu0 %v1138
      %1389 = vmatpush.bf16.msra.mxu0 %v1130
      %1390 = vmatpush.bf16.msra.mxu0 %v1122
      %1391 = vmatpush.bf16.msra.mxu0 %v1114
      %1392 = vmatpush.bf16.msra.mxu0 %v1106
      %1393 = vmatpush.bf16.msra.mxu0 %v1098
      %1394 = vmatpush.bf16.msra.mxu0 %v1090
      %1395 = vmatpush.bf16.msra.mxu0 %v1082
      %1396 = vmatmul.bf16.gmra.mxu0 %v694
      %v1397 = vpop.f32.mrf.mxu0
      %v1398 = vadd.f32 0.0, %v1397
      %v1399 = vpop.f32.mrf.mxu0
      %1400 = vdwg.mxu0
      %1401 = vmatpush.bf16.msra.mxu0 %v1202
      %1402 = vmatpush.bf16.msra.mxu0 %v1194
      %1403 = vmatpush.bf16.msra.mxu0 %v1186
      %1404 = vmatpush.bf16.msra.mxu0 %v1178
      %1405 = vmatpush.bf16.msra.mxu0 %v1170
      %1406 = vmatpush.bf16.msra.mxu0 %v1162
      %1407 = vmatpush.bf16.msra.mxu0 %v1154
      %1408 = vmatpush.bf16.msra.mxu0 %v1146
      %1409 = vmatmul.bf16.gmra.mxu0 %v695
      %v1410 = vpop.f32.mrf.mxu0
      %v1411 = vadd.f32 %v1398, %v1410
      %v1412 = vpop.f32.mrf.mxu0
      %1413 = vdwg.mxu0
      %1414 = vmatpush.bf16.msra.mxu0 %v1139
      %1415 = vmatpush.bf16.msra.mxu0 %v1131
      %1416 = vmatpush.bf16.msra.mxu0 %v1123
      %1417 = vmatpush.bf16.msra.mxu0 %v1115
      %1418 = vmatpush.bf16.msra.mxu0 %v1107
      %1419 = vmatpush.bf16.msra.mxu0 %v1099
      %1420 = vmatpush.bf16.msra.mxu0 %v1091
      %1421 = vmatpush.bf16.msra.mxu0 %v1083
      %1422 = vmatmul.bf16.gmra.mxu0 %v694
      %v1423 = vpop.f32.mrf.mxu0
      %v1424 = vadd.f32 0.0, %v1423
      %v1425 = vpop.f32.mrf.mxu0
      %1426 = vdwg.mxu0
      %1427 = vmatpush.bf16.msra.mxu0 %v1203
      %1428 = vmatpush.bf16.msra.mxu0 %v1195
      %1429 = vmatpush.bf16.msra.mxu0 %v1187
      %1430 = vmatpush.bf16.msra.mxu0 %v1179
      %1431 = vmatpush.bf16.msra.mxu0 %v1171
      %1432 = vmatpush.bf16.msra.mxu0 %v1163
      %1433 = vmatpush.bf16.msra.mxu0 %v1155
      %1434 = vmatpush.bf16.msra.mxu0 %v1147
      %1435 = vmatmul.bf16.gmra.mxu0 %v695
      %v1436 = vpop.f32.mrf.mxu0
      %v1437 = vadd.f32 %v1424, %v1436
      %v1438 = vpop.f32.mrf.mxu0
      %1439 = vdwg.mxu0
      %1440 = vmatpush.bf16.msra.mxu0 %v1140
      %1441 = vmatpush.bf16.msra.mxu0 %v1132
      %1442 = vmatpush.bf16.msra.mxu0 %v1124
      %1443 = vmatpush.bf16.msra.mxu0 %v1116
      %1444 = vmatpush.bf16.msra.mxu0 %v1108
      %1445 = vmatpush.bf16.msra.mxu0 %v1100
      %1446 = vmatpush.bf16.msra.mxu0 %v1092
      %1447 = vmatpush.bf16.msra.mxu0 %v1084
      %1448 = vmatmul.bf16.gmra.mxu0 %v694
      %v1449 = vpop.f32.mrf.mxu0
      %v1450 = vadd.f32 0.0, %v1449
      %v1451 = vpop.f32.mrf.mxu0
      %1452 = vdwg.mxu0
      %1453 = vmatpush.bf16.msra.mxu0 %v1204
      %1454 = vmatpush.bf16.msra.mxu0 %v1196
      %1455 = vmatpush.bf16.msra.mxu0 %v1188
      %1456 = vmatpush.bf16.msra.mxu0 %v1180
      %1457 = vmatpush.bf16.msra.mxu0 %v1172
      %1458 = vmatpush.bf16.msra.mxu0 %v1164
      %1459 = vmatpush.bf16.msra.mxu0 %v1156
      %1460 = vmatpush.bf16.msra.mxu0 %v1148
      %1461 = vmatmul.bf16.gmra.mxu0 %v695
      %v1462 = vpop.f32.mrf.mxu0
      %v1463 = vadd.f32 %v1450, %v1462
      %v1464 = vpop.f32.mrf.mxu0
      %1465 = vdwg.mxu0
      %1466 = vmatpush.bf16.msra.mxu0 %v1141
      %1467 = vmatpush.bf16.msra.mxu0 %v1133
      %1468 = vmatpush.bf16.msra.mxu0 %v1125
      %1469 = vmatpush.bf16.msra.mxu0 %v1117
      %1470 = vmatpush.bf16.msra.mxu0 %v1109
      %1471 = vmatpush.bf16.msra.mxu0 %v1101
      %1472 = vmatpush.bf16.msra.mxu0 %v1093
      %1473 = vmatpush.bf16.msra.mxu0 %v1085
      %1474 = vmatmul.bf16.gmra.mxu0 %v694
      %v1475 = vpop.f32.mrf.mxu0
      %v1476 = vadd.f32 0.0, %v1475
      %v1477 = vpop.f32.mrf.mxu0
      %1478 = vdwg.mxu0
      %1479 = vmatpush.bf16.msra.mxu0 %v1205
      %1480 = vmatpush.bf16.msra.mxu0 %v1197
      %1481 = vmatpush.bf16.msra.mxu0 %v1189
      %1482 = vmatpush.bf16.msra.mxu0 %v1181
      %1483 = vmatpush.bf16.msra.mxu0 %v1173
      %1484 = vmatpush.bf16.msra.mxu0 %v1165
      %1485 = vmatpush.bf16.msra.mxu0 %v1157
      %1486 = vmatpush.bf16.msra.mxu0 %v1149
      %1487 = vmatmul.bf16.gmra.mxu0 %v695
      %v1488 = vpop.f32.mrf.mxu0
      %v1489 = vadd.f32 %v1476, %v1488
      %v1490 = vpop.f32.mrf.mxu0
      %1491 = vdwg.mxu0
      %1492 = vmatpush.bf16.msra.mxu0 %v1142
      %1493 = vmatpush.bf16.msra.mxu0 %v1134
      %1494 = vmatpush.bf16.msra.mxu0 %v1126
      %1495 = vmatpush.bf16.msra.mxu0 %v1118
      %1496 = vmatpush.bf16.msra.mxu0 %v1110
      %1497 = vmatpush.bf16.msra.mxu0 %v1102
      %1498 = vmatpush.bf16.msra.mxu0 %v1094
      %1499 = vmatpush.bf16.msra.mxu0 %v1086
      %1500 = vmatmul.bf16.gmra.mxu0 %v694
      %v1501 = vpop.f32.mrf.mxu0
      %v1502 = vadd.f32 0.0, %v1501
      %v1503 = vpop.f32.mrf.mxu0
      %1504 = vdwg.mxu0
      %1505 = vmatpush.bf16.msra.mxu0 %v1206
      %1506 = vmatpush.bf16.msra.mxu0 %v1198
      %1507 = vmatpush.bf16.msra.mxu0 %v1190
      %1508 = vmatpush.bf16.msra.mxu0 %v1182
      %1509 = vmatpush.bf16.msra.mxu0 %v1174
      %1510 = vmatpush.bf16.msra.mxu0 %v1166
      %1511 = vmatpush.bf16.msra.mxu0 %v1158
      %1512 = vmatpush.bf16.msra.mxu0 %v1150
      %1513 = vmatmul.bf16.gmra.mxu0 %v695
      %v1514 = vpop.f32.mrf.mxu0
      %v1515 = vadd.f32 %v1502, %v1514
      %v1516 = vpop.f32.mrf.mxu0
      %1517 = vdwg.mxu0
      %1518 = vmatpush.bf16.msra.mxu0 %v1143
      %1519 = vmatpush.bf16.msra.mxu0 %v1135
      %1520 = vmatpush.bf16.msra.mxu0 %v1127
      %1521 = vmatpush.bf16.msra.mxu0 %v1119
      %1522 = vmatpush.bf16.msra.mxu0 %v1111
      %1523 = vmatpush.bf16.msra.mxu0 %v1103
      %1524 = vmatpush.bf16.msra.mxu0 %v1095
      %1525 = vmatpush.bf16.msra.mxu0 %v1087
      %1526 = vmatmul.bf16.gmra.mxu0 %v694
      %v1527 = vpop.f32.mrf.mxu0
      %v1528 = vadd.f32 0.0, %v1527
      %v1529 = vpop.f32.mrf.mxu0
      %1530 = vdwg.mxu0
      %1531 = vmatpush.bf16.msra.mxu0 %v1207
      %1532 = vmatpush.bf16.msra.mxu0 %v1199
      %1533 = vmatpush.bf16.msra.mxu0 %v1191
      %1534 = vmatpush.bf16.msra.mxu0 %v1183
      %1535 = vmatpush.bf16.msra.mxu0 %v1175
      %1536 = vmatpush.bf16.msra.mxu0 %v1167
      %1537 = vmatpush.bf16.msra.mxu0 %v1159
      %1538 = vmatpush.bf16.msra.mxu0 %v1151
      %1539 = vmatmul.bf16.gmra.mxu0 %v695
      %v1540 = vpop.f32.mrf.mxu0
      %v1541 = vadd.f32 %v1528, %v1540
      %v1542 = vpop.f32.mrf.mxu0
      %1543 = vdwg.mxu0
      %v1544 = vadd.f32 %v681, %v1359
      %v1545 = vadd.f32 %v682, %v1385
      %v1546 = vadd.f32 %v683, %v1411
      %v1547 = vadd.f32 %v684, %v1437
      %v1548 = vadd.f32 %v690, %v1463
      %v1549 = vadd.f32 %v691, %v1489
      %v1550 = vadd.f32 %v692, %v1515
      %v1551 = vadd.f32 %v693, %v1541
      %v1552 = vxor.u32 %v1544, 2147483648
      %v1553 = vxor.u32 %v1545, 2147483648
      %v1554 = vxor.u32 %v1546, 2147483648
      %v1555 = vmul.f32 %v1552, 1.442695
      %v1556 = vpow.pop %v1555
      %v1557 = vmul.f32 %v1553, 1.442695
      %v1558 = vpow.pop %v1557
      %v1559 = vmul.f32 %v1554, 1.442695
      %v1560 = vpow.pop %v1559
      %v1561 = vadd.f32 %v1556, 1.0
      %v1562 = vadd.f32 %v1558, 1.0
      %v1563 = vadd.f32 %v1560, 1.0
      %v1564 = vrcp.pop %v1561
      %v1565 = vmul.f32 %v1561, %v1564
      %v1566 = vsub.f32 1.0, %v1565
      %v1567 = vmul.f32 %v1564, %v1566
      %v1568 = vadd.f32 %v1564, %v1567
      %vm1569 = vweird.f32 %v1561
      %vm1570 = vweird.f32 %v1564
      %vm1571 = vmor %vm1569, %vm1570
      %v1572 = vsel %vm1571, %v1564, %v1568
      %v1573 = vand.u32 2147483647, %v1561
      %vm1574 = vcmp.eq.f32.partialorder %v1573, 8.507059e+37
      %v1575 = vand.u32 %v1561, 2147483648
      %v1576 = vor.u32 1.1754944e-38, %v1575
      %v1577 = vsel %vm1574, %v1576, %v1572
      %v1578 = vmul.f32 1.0, %v1577
      %v1579 = vrcp.pop %v1562
      %v1580 = vmul.f32 %v1562, %v1579
      %v1581 = vsub.f32 1.0, %v1580
      %v1582 = vmul.f32 %v1579, %v1581
      %v1583 = vadd.f32 %v1579, %v1582
      %vm1584 = vweird.f32 %v1562
      %vm1585 = vweird.f32 %v1579
      %vm1586 = vmor %vm1584, %vm1585
      %v1587 = vsel %vm1586, %v1579, %v1583
      %v1588 = vand.u32 2147483647, %v1562
      %vm1589 = vcmp.eq.f32.partialorder %v1588, 8.507059e+37
      %v1590 = vand.u32 %v1562, 2147483648
      %v1591 = vor.u32 1.1754944e-38, %v1590
      %v1592 = vsel %vm1589, %v1591, %v1587
      %v1593 = vmul.f32 1.0, %v1592
      %v1594 = vrcp.pop %v1563
      %v1595 = vmul.f32 %v1563, %v1594
      %v1596 = vsub.f32 1.0, %v1595
      %v1597 = vmul.f32 %v1594, %v1596
      %v1598 = vadd.f32 %v1594, %v1597
      %vm1599 = vweird.f32 %v1563
      %vm1600 = vweird.f32 %v1594
      %vm1601 = vmor %vm1599, %vm1600
      %v1602 = vsel %vm1601, %v1594, %v1598
      %v1603 = vand.u32 2147483647, %v1563
      %vm1604 = vcmp.eq.f32.partialorder %v1603, 8.507059e+37
      %v1605 = vand.u32 %v1563, 2147483648
      %v1606 = vor.u32 1.1754944e-38, %v1605
      %v1607 = vsel %vm1604, %v1606, %v1602
      %v1608 = vmul.f32 1.0, %v1607
      %v1609 = vtanh.pop %v1547
      %v1610 = vmul.f32 %v1593, %v659
      %v1611 = vmul.f32 %v1578, %v1609
      %v1612 = vadd.f32 %v1610, %v1611
      %v1613 = vtanh.pop %v1612
      %v1614 = vmul.f32 %v1608, %v1613
      %v1615 = vxor.u32 %v1548, 2147483648
      %v1616 = vxor.u32 %v1549, 2147483648
      %v1617 = vxor.u32 %v1550, 2147483648
      %v1618 = vmul.f32 %v1615, 1.442695
      %v1619 = vpow.pop %v1618
      %v1620 = vmul.f32 %v1616, 1.442695
      %v1621 = vpow.pop %v1620
      %v1622 = vmul.f32 %v1617, 1.442695
      %v1623 = vpow.pop %v1622
      %v1624 = vadd.f32 %v1619, 1.0
      %v1625 = vadd.f32 %v1621, 1.0
      %v1626 = vadd.f32 %v1623, 1.0
      %v1627 = vrcp.pop %v1624
      %v1628 = vmul.f32 %v1624, %v1627
      %v1629 = vsub.f32 1.0, %v1628
      %v1630 = vmul.f32 %v1627, %v1629
      %v1631 = vadd.f32 %v1627, %v1630
      %vm1632 = vweird.f32 %v1624
      %vm1633 = vweird.f32 %v1627
      %vm1634 = vmor %vm1632, %vm1633
      %v1635 = vsel %vm1634, %v1627, %v1631
      %v1636 = vand.u32 2147483647, %v1624
      %vm1637 = vcmp.eq.f32.partialorder %v1636, 8.507059e+37
      %v1638 = vand.u32 %v1624, 2147483648
      %v1639 = vor.u32 1.1754944e-38, %v1638
      %v1640 = vsel %vm1637, %v1639, %v1635
      %v1641 = vmul.f32 1.0, %v1640
      %v1642 = vrcp.pop %v1625
      %v1643 = vmul.f32 %v1625, %v1642
      %v1644 = vsub.f32 1.0, %v1643
      %v1645 = vmul.f32 %v1642, %v1644
      %v1646 = vadd.f32 %v1642, %v1645
      %vm1647 = vweird.f32 %v1625
      %vm1648 = vweird.f32 %v1642
      %vm1649 = vmor %vm1647, %vm1648
      %v1650 = vsel %vm1649, %v1642, %v1646
      %v1651 = vand.u32 2147483647, %v1625
      %vm1652 = vcmp.eq.f32.partialorder %v1651, 8.507059e+37
      %v1653 = vand.u32 %v1625, 2147483648
      %v1654 = vor.u32 1.1754944e-38, %v1653
      %v1655 = vsel %vm1652, %v1654, %v1650
      %v1656 = vmul.f32 1.0, %v1655
      %v1657 = vrcp.pop %v1626
      %v1658 = vmul.f32 %v1626, %v1657
      %v1659 = vsub.f32 1.0, %v1658
      %v1660 = vmul.f32 %v1657, %v1659
      %v1661 = vadd.f32 %v1657, %v1660
      %vm1662 = vweird.f32 %v1626
      %vm1663 = vweird.f32 %v1657
      %vm1664 = vmor %vm1662, %vm1663
      %v1665 = vsel %vm1664, %v1657, %v1661
      %v1666 = vand.u32 2147483647, %v1626
      %vm1667 = vcmp.eq.f32.partialorder %v1666, 8.507059e+37
      %v1668 = vand.u32 %v1626, 2147483648
      %v1669 = vor.u32 1.1754944e-38, %v1668
      %v1670 = vsel %vm1667, %v1669, %v1665
      %v1671 = vmul.f32 1.0, %v1670
      %v1672 = vtanh.pop %v1551
      %v1673 = vmul.f32 %v1656, %v673
      %v1674 = vmul.f32 %v1641, %v1672
      %v1675 = vadd.f32 %v1673, %v1674
      %v1676 = vtanh.pop %v1675
      %v1677 = vmul.f32 %v1671, %v1676
      %s1678 = smul.u32 %s653, 2
      %s1679 = smul.addr %s1678, 8
      %s1680 = scalar_lea.vmem [#allocation11], %s1679
      %1681 = vst [vmem:[%s1680] sm:$0xff] %v1614
      %s1682 = smul.u32 %s663, 2
      %s1683 = smul.addr %s1682, 8
      %s1684 = scalar_lea.vmem [#allocation11], %s1683
      %1685 = vst [vmem:[%s1684 + $0x8] sm:$0xff] %v1677
    $region38: #{tpu_custom_call.1} parent=1 // loop_footer
      %s655 = sadd.s32 %s653, 1
    $region39: #{tpu_custom_call.1} parent=1 // loop_footer_branch
      %652 = sbr.rel target = $region35
    $region40: #{tpu_custom_call.1} parent=1 // loop_exit
      _
    // Predicated region
    $region41: #{tpu_custom_call.1} parent=1 // pred_check
      _
    $region42: #{tpu_custom_call.1} parent=1 // pred_check_branch
      %1687 = sbr.rel (0) target = $region44
    $region43: #{tpu_custom_call.1} parent=1 // pred_region
      %1689 = vsyncadd [#allocation7], 0
      %s1690 = sshll.u32 [#allocation11], 4
      %s1691 = int_to_ptr.vmem [resolvable:$true] %s1690
      %s1692 = sshll.u32 %s6, 4
      %s1693 = int_to_ptr.hbm [resolvable:$true] %s1692
      %1698 = dma.vmem_to_hbm [thread:$0]  %s1691, 2048, %s1693, [#allocation7], 256, 256, 16
    $region44: #{tpu_custom_call.1} parent=1 // pred_fallthru
      _
    // Predicated region
    $region45: #{tpu_custom_call.1} parent=1 // pred_check
      _
    $region46: #{tpu_custom_call.1} parent=1 // pred_check_branch
      %1700 = sbr.rel (0) target = $region48
    $region47: #{tpu_custom_call.1} parent=1 // pred_region
      %1702 = dma.done [#allocation7], 2048
    $region48: #{tpu_custom_call.1} parent=1 // pred_fallthru
      _
    %1703 = vsyncpa [#allocation6], 1
    %1704 = vsyncpa [#allocation9], 1
    %1705 = vsyncpa [#allocation7], 1

</llo_original>
